<compile_context>
chip_gen: v5e
topology: v5e:2x2
jax: 0.10.0
libtpu: 0.0.40
codegen_flags: <defaults>
</compile_context>

<pallas_src>
import functools

import jax
import jax.numpy as jnp
from jax.experimental import pallas as pl
from jax.experimental.pallas import tpu as pltpu


# ----------------------- generation-aware VMEM budgeting ----------------------
@functools.lru_cache(maxsize=None)
def _tpu_params():
    """Returns (block_budget_bytes, vmem_limit_bytes, split_for_two_cores)."""
    kind = ""
    try:
        kind = jax.devices()[0].device_kind.lower()
    except Exception:
        pass
    phys = 64 << 20                    # conservative default: v7x per-core VMEM
    try:
        phys = int(pltpu.get_tpu_info().vmem_capacity_bytes)
    except Exception:
        if kind and "v7" not in kind:
            phys = 128 << 20           # v5e / v6e have 128 MiB VMEM per core
    budget = min(int(phys * 0.30), 40 << 20)      # per-call block working set
    vmem_limit = min(int(phys * 0.70), 96 << 20)  # raise v5e's 16 MiB default
    split = "v7" in kind               # only v7x has 2 TensorCores per chip
    return budget, vmem_limit, split


# ------------------------- simple fused matmul (layer 1) ----------------------
def _matmul_act_kernel(a_ref, b_ref, o_ref, *, act):
    y = jnp.dot(a_ref[...], b_ref[...], preferred_element_type=jnp.float32)
    if act == "relu":
        y = jnp.maximum(y, 0.0)
    elif act == "tanh":
        y = jnp.tanh(y)
    o_ref[...] = y.astype(o_ref.dtype)


def matmul_lane_dense(a, b, *, act=None, out_dtype=jnp.bfloat16):
    """out (R, M) = act(a (R, K) @ b (K, M)), tiled along the lane-dense M."""
    R, K = a.shape
    K2, M = b.shape
    assert K == K2
    budget, vmem_limit, _ = _tpu_params()
    ob = jnp.dtype(out_dtype).itemsize
    # VMEM accounting: B block (2 bufs, bf16) + O block (2 bufs) + f32 dot result
    per_m = 2 * 2 * K + 2 * ob * R + 4 * R
    fixed = 2 * R * K * 2              # resident small operand, double-buffered
    cap = max(128, (budget - fixed) // per_m)
    tm = M if M <= cap else max(128, (cap // 128) * 128)
    return pl.pallas_call(
        functools.partial(_matmul_act_kernel, act=act),
        out_shape=jax.ShapeDtypeStruct((R, M), out_dtype),
        grid=(pl.cdiv(M, tm),),
        in_specs=[
            pl.BlockSpec((R, K), lambda i: (0, 0)),   # small operand stays resident
            pl.BlockSpec((K, tm), lambda i: (0, i)),  # lane-tiled operand
        ],
        out_specs=pl.BlockSpec((R, tm), lambda i: (0, i)),
        compiler_params=pltpu.CompilerParams(
            dimension_semantics=("parallel",),
            vmem_limit_bytes=vmem_limit),
    )(a, b)


# -------------- ConvTranspose2d (k=4, s=2, p=1) via sub-pixel matmul ----------
# output row o = 2*i - 1 + ky: even rows (a=0) use ky=1 (dy=0), ky=3 (dy=-1);
#                               odd rows (a=1) use ky=2 (dy=0), ky=0 (dy=+1).
_K_OF_TAP = {(0, 0): 1, (0, -1): 3, (1, 0): 2, (1, 1): 0}


def _build_w9(w_t):
    """(Cin, Cout, 4, 4) PyTorch weight -> (4*Cout, 9*Cin); rows ordered
    (a, b, co), columns ordered (dy, dx, ci).  Each parity uses 4 of 9 taps."""
    Cin, Cout = w_t.shape[0], w_t.shape[1]
    zero = jnp.zeros((Cout, Cin), w_t.dtype)
    parity_rows = []
    for a in (0, 1):
        for b in (0, 1):
            taps = []
            for dy in (-1, 0, 1):
                for dx in (-1, 0, 1):
                    ky = _K_OF_TAP.get((a, dy))
                    kx = _K_OF_TAP.get((b, dx))
                    taps.append(zero if ky is None or kx is None
                                else jnp.transpose(w_t[:, :, ky, kx]))
            parity_rows.append(jnp.concatenate(taps, axis=1))   # (Cout, 9*Cin)
    return jnp.concatenate(parity_rows, axis=0)                 # (4*Cout, 9*Cin)


def _shift_flat(x, d):
    """s[:, m] = x[:, m + d] on the flat lane axis, zero-filled at the ends."""
    if d == 0:
        return x
    pad = jnp.zeros((x.shape[0], abs(d)), x.dtype)
    if d > 0:
        return jnp.concatenate([x[:, d:], pad], axis=1)
    return jnp.concatenate([pad, x[:, :d]], axis=1)


def _convt_s2_kernel(x_ref, w_ref, o_ref, *, H, W, act):
    """One (tr, Mt) tile of the sub-pixel ConvTranspose2d matmul.

    x_ref : (Cin, Mt) bf16, Mt covers whole images (block start % (H*W) == 0)
    w_ref : (tr, 9*Cin) bf16      o_ref : (tr, Mt) bf16/f32
    """
    Cin, Mt = x_ref.shape
    x = x_ref[...]
    # flat (n, h, w) position of each lane; H and W are powers of two
    col = jax.lax.broadcasted_iota(jnp.int32, (Cin, Mt), 1)
    w_idx = col & (W - 1)
    h_idx = (col >> (W.bit_length() - 1)) & (H - 1)
    at_h0, at_h1 = h_idx == 0, h_idx == H - 1
    at_w0, at_w1 = w_idx == 0, w_idx == W - 1
    zeros = jnp.zeros_like(x)

    # Build the shared 3x3-shift im2col (9*Cin, Mt) entirely in VMEM.
    taps = []
    for dy in (-1, 0, 1):
        for dx in (-1, 0, 1):
            s = _shift_flat(x, dy * W + dx)
            mask = None
            if dy == -1:
                mask = at_h0
            elif dy == 1:
                mask = at_h1
            if dx == -1:
                mask = at_w0 if mask is None else mask | at_w0
            elif dx == 1:
                mask = at_w1 if mask is None else mask | at_w1
            if mask is not None:                 # zero out cross-row / cross-image reads
                s = jnp.where(mask, zeros, s)
            taps.append(s)
    xim = jnp.concatenate(taps, axis=0)          # (9*Cin, Mt)

    # One deep-K MXU matmul, f32 accumulation; activation fused (no overlap-add
    # exists in the sub-pixel formulation, so per-element activation is exact).
    y = jnp.dot(w_ref[...], xim, preferred_element_type=jnp.float32)
    if act == "relu":
        y = jnp.maximum(y, 0.0)
    elif act == "tanh":
        y = jnp.tanh(y)
    o_ref[...] = y.astype(o_ref.dtype)


def _pick_s2_tiles(Cin, Cout, M, HW, out_bytes):
    budget, vmem_limit, split = _tpu_params()
    R, K = 4 * Cout, 9 * Cin
    tr = R if R <= 512 else 512            # R grid axis bounds VMEM for big Cout
    # lane blocks cover whole images AND are multiples of 128 (HW is a power of 2)
    unit = max(HW, 128)
    per_m = (2 * 2 * Cin                   # x block, double-buffered, bf16
             + 2 * out_bytes * tr          # out block, double-buffered
             + 2 * 9 * Cin                 # in-VMEM im2col value, bf16
             + 2 * 2 * Cin                 # shifted temporaries (headroom)
             + 4 * tr)                     # f32 matmul result
    fixed = 2 * tr * K * 2                 # weight block, double-buffered, bf16
    cap = max(unit, (budget - fixed) // per_m)
    if M <= cap:
        Mt = M
        if split and M >= 2 * unit:        # v7x only: give both TensorCores work
            Mt = unit * pl.cdiv(pl.cdiv(M, 2), unit)
    else:
        Mt = min(M, max(unit, (cap // unit) * unit))
    return tr, Mt, vmem_limit


def conv_transpose_s2(x_flat, w_t, *, N, H, W, act_fn, out_dtype):
    """ConvTranspose2d(kernel=4, stride=2, padding=1, bias=False).

    x_flat : (Cin, N*H*W) bf16 activation, flat (n, h, w) order.
    Returns the parity-major matmul output (4*Cout, N*H*W), rows (a, b, co).
    """
    Cin, M = x_flat.shape
    Cin2, Cout, k, _ = w_t.shape
    assert Cin == Cin2 and k == 4 and M == N * H * W
    assert H & (H - 1) == 0 and W & (W - 1) == 0, "spatial dims must be powers of 2"
    w9 = _build_w9(w_t).astype(jnp.bfloat16)                    # (4*Cout, 9*Cin)
    R, K = w9.shape
    tr, Mt, vmem_limit = _pick_s2_tiles(Cin, Cout, M, H * W,
                                        jnp.dtype(out_dtype).itemsize)
    return pl.pallas_call(
        functools.partial(_convt_s2_kernel, H=H, W=W, act=act_fn),
        out_shape=jax.ShapeDtypeStruct((R, M), out_dtype),
        grid=(pl.cdiv(R, tr), pl.cdiv(M, Mt)),
        in_specs=[
            pl.BlockSpec((Cin, Mt), lambda r, m: (0, m)),       # activation lane tile
            # TODO(synk): pipeline_mode=pl.Buffered(1) when the weight block is
            # grid-invariant, to drop the redundant second weight buffer.
            pl.BlockSpec((tr, K), lambda r, m: (r, 0)),         # weights (resident in m)
        ],
        out_specs=pl.BlockSpec((tr, Mt), lambda r, m: (r, m)),
        compiler_params=pltpu.CompilerParams(
            dimension_semantics=("parallel", "parallel"),
            vmem_limit_bytes=vmem_limit),
    )(x_flat, w9)


# ---------------------------------- Generator ---------------------------------
def make_generator_params(key, z_dim, ngf, nc):
    m2 = int((nc + 1) / 2)
    m4 = int((nc + 1) / 4)
    chans = [z_dim, ngf * 4 * m2, ngf * 2 * m2, ngf * 1 * m2, ngf * m4, nc]
    weights = []
    for i in range(5):
        key, sub = jax.random.split(key)
        # ConvTranspose2d weight layout: (in_channels, out_channels, 4, 4)
        w = 0.05 * jax.random.normal(sub, (chans[i], chans[i + 1], 4, 4),
                                     dtype=jnp.float32)
        weights.append(w)
    return weights


def generator_forward(x_nchw, weights):
    """x: (N, z_dim, 1, 1) -> (N, nc, 64, 64), matching the PyTorch Generator."""
    N = x_nchw.shape[0]
    w0 = weights[0]
    z_dim, c1 = w0.shape[0], w0.shape[1]

    # Layer 1: ConvTranspose2d(k=4, s=1, p=0) on a 1x1 input == plain matmul,
    # ReLU fused in-kernel; output pixel (h, w) IS the kernel tap (ky, kx).
    x_row = x_nchw.reshape(N, z_dim).astype(jnp.bfloat16)
    w_mat = jnp.transpose(w0, (0, 2, 3, 1)).reshape(z_dim, 16 * c1)
    y1 = matmul_lane_dense(x_row, w_mat.astype(jnp.bfloat16), act="relu")
    act = jnp.transpose(y1.reshape(N, 4, 4, c1), (3, 0, 1, 2)).reshape(c1, N * 16)

    H = W = 4
    last_idx = len(weights) - 1
    out = None
    for li, w in enumerate(weights[1:], start=1):
        cout = w.shape[1]
        is_last = li == last_idx
        y = conv_transpose_s2(
            act, w, N=N, H=H, W=W,
            act_fn="tanh" if is_last else "relu",
            out_dtype=jnp.float32 if is_last else jnp.bfloat16)  # (4*cout, N*H*W)
        # cheap sub-pixel interleave: (a, b, co, n, h, w) -> (co, n, 2h+a, 2w+b)
        y6 = y.reshape(2, 2, cout, N, H, W)
        img = jnp.transpose(y6, (2, 3, 4, 0, 5, 1)).reshape(cout, N, 2 * H, 2 * W)
        H, W = 2 * H, 2 * W
        if is_last:
            out = jnp.transpose(img, (1, 0, 2, 3))      # NCHW, float32 (post-Tanh)
        else:
            act = img.reshape(cout, N * H * W)          # bf16 activation for next layer
    return out


# --------------------------- pure-XLA f32 reference ---------------------------
def _conv_transpose_ref(x, w, stride, padding):
    # x: (N, Cin, H, W); w: (Cin, Cout, k, k) PyTorch ConvTranspose2d layout
    k = w.shape[-1]
    w_oihw = jnp.transpose(jnp.flip(w, (2, 3)), (1, 0, 2, 3))
    pad = k - 1 - padding
    return jax.lax.conv_general_dilated(
        x, w_oihw, window_strides=(1, 1), padding=[(pad, pad), (pad, pad)],
        lhs_dilation=(stride, stride),
        dimension_numbers=("NCHW", "OIHW", "NCHW"))


def generator_reference(x, weights):
    cfg = [(1, 0), (2, 1), (2, 1), (2, 1), (2, 1)]
    h = x
    for i, (w, (s, p)) in enumerate(zip(weights, cfg)):
        h = _conv_transpose_ref(h, w, s, p)
        h = jnp.maximum(h, 0.0) if i < 4 else jnp.tanh(h)
    return h


# ------------------------------------ main -------------------------------------
if __name__ == "__main__":
    # Small deterministic config consistent with the module's forward pass.
    ngpu, z_dim, ngf, ndf, nc = 1, 8, 4, 4, 3   # ndf unused by Generator
    batch = 2

    key = jax.random.PRNGKey(0)
    k_in, k_par = jax.random.split(key)
    weights = make_generator_params(k_par, z_dim, ngf, nc)
    x = jax.random.normal(k_in, (batch, z_dim, 1, 1), dtype=jnp.float32)

    out = jax.jit(generator_forward)(x, weights)
    out = jax.block_until_ready(out)

    assert out.shape == (batch, nc, 64, 64), out.shape
    assert bool(jnp.all(jnp.isfinite(out)))
    assert bool(jnp.all(jnp.abs(out) <= 1.0 + 1e-6))      # Tanh output range

    # Numerical check against a pure-XLA float32 reference (bf16 tolerance).
    ref = jax.jit(generator_reference)(x, weights)
    max_err = float(jnp.max(jnp.abs(out - ref)))
    assert bool(jnp.allclose(out, ref, rtol=0.1, atol=1e-3)), max_err

    print("KERNEL_OK")
</pallas_src>

<mosaic_0001>
module attributes {stable_mosaic.version = 11 : i64} {
  func.func @_matmul_act_kernel(%arg0: i32, %arg1: memref<2x8xbf16, #tpu.memory_space<vmem>>, %arg2: memref<8x512xbf16, #tpu.memory_space<vmem>>, %arg3: memref<2x512xbf16, #tpu.memory_space<vmem>>) attributes {dimension_semantics = [#tpu.dimension_semantics<parallel>], iteration_bounds = array<i64: 1>, scalar_prefetch = 0 : i64, scratch_operands = 0 : i64, tpu.core_type = #tpu.core_type<tc>, window_params = [{pipeline_mode = #tpu.pipeline_mode<synchronous>, transform_indices = @transform_0, window_bounds = array<i64: 2, 8>}, {transform_indices = @transform_1, window_bounds = array<i64: 8, 512>}, {transform_indices = @transform_2, window_bounds = array<i64: 2, 512>}]} {
    %c0 = arith.constant 0 : index
    %c0_0 = arith.constant 0 : index
    %0 = vector.load %arg1[%c0, %c0_0] : memref<2x8xbf16, #tpu.memory_space<vmem>>, vector<2x8xbf16>
    %c0_1 = arith.constant 0 : index
    %c0_2 = arith.constant 0 : index
    %1 = vector.load %arg2[%c0_1, %c0_2] : memref<8x512xbf16, #tpu.memory_space<vmem>>, vector<8x512xbf16>
    %cst = arith.constant dense<0.000000e+00> : vector<2x512xf32>
    %2 = tpu.matmul %0, %1, %cst {dimension_numbers = #tpu.dot_dimension_numbers<[1], [0], [0], [1], [0, 0, 1, 1], [], []>} : vector<2x8xbf16>, vector<8x512xbf16>, vector<2x512xf32> -> vector<2x512xf32>
    %cst_3 = arith.constant 0.000000e+00 : f32
    %3 = vector.broadcast %cst_3 : f32 to vector<2x512xf32>
    %4 = arith.maximumf %2, %3 : vector<2x512xf32>
    %5 = arith.truncf %4 : vector<2x512xf32> to vector<2x512xbf16>
    %c0_4 = arith.constant 0 : index
    %c0_5 = arith.constant 0 : index
    %6 = vector.load %arg3[%c0_4, %c0_5] : memref<2x512xbf16, #tpu.memory_space<vmem>>, vector<2x512xbf16>
    tpu.vector_store %arg3[%c0_4, %c0_5], %5 {strides = array<i32>} : memref<2x512xbf16, #tpu.memory_space<vmem>>, vector<2x512xbf16>,
    return
  }
  func.func @transform_0(%arg0: i32) -> (i32, i32) {
    %c0_i32 = arith.constant 0 : i32
    %c0_i32_0 = arith.constant 0 : i32
    %c0_i32_1 = arith.constant 0 : i32
    return %c0_i32, %c0_i32_0 : i32, i32
  }
  func.func @transform_1(%arg0: i32) -> (i32, i32) {
    %c0_i32 = arith.constant 0 : i32
    %c0_i32_0 = arith.constant 0 : i32
    return %c0_i32, %arg0 : i32, i32
  }
  func.func @transform_2(%arg0: i32) -> (i32, i32) {
    %c0_i32 = arith.constant 0 : i32
    %c0_i32_0 = arith.constant 0 : i32
    return %c0_i32, %arg0 : i32, i32
  }
}

module attributes {stable_mosaic.version = 11 : i64} {
  func.func @_convt_s2_kernel(%arg0: i32, %arg1: i32, %arg2: memref<32x32xbf16, #tpu.memory_space<vmem>>, %arg3: memref<64x288xbf16, #tpu.memory_space<vmem>>, %arg4: memref<64x32xbf16, #tpu.memory_space<vmem>>) attributes {dimension_semantics = [#tpu.dimension_semantics<parallel>, #tpu.dimension_semantics<parallel>], iteration_bounds = array<i64: 1, 1>, scalar_prefetch = 0 : i64, scratch_operands = 0 : i64, tpu.core_type = #tpu.core_type<tc>, window_params = [{transform_indices = @transform_0, window_bounds = array<i64: 32, 32>}, {transform_indices = @transform_1, window_bounds = array<i64: 64, 288>}, {transform_indices = @transform_2, window_bounds = array<i64: 64, 32>}]} {
    %c0 = arith.constant 0 : index
    %c0_0 = arith.constant 0 : index
    %0 = vector.load %arg2[%c0, %c0_0] : memref<32x32xbf16, #tpu.memory_space<vmem>>, vector<32x32xbf16>
    %1 = tpu.iota {dimensions = array<i32: 1>} : vector<32x32xi32>
    %c3_i32 = arith.constant 3 : i32
    %2 = vector.broadcast %c3_i32 : i32 to vector<32x32xi32>
    %3 = arith.andi %1, %2 : vector<32x32xi32>
    %c2_i32 = arith.constant 2 : i32
    %4 = vector.broadcast %c2_i32 : i32 to vector<32x32xi32>
    %5 = arith.shrsi %1, %4 : vector<32x32xi32>
    %c3_i32_1 = arith.constant 3 : i32
    %6 = vector.broadcast %c3_i32_1 : i32 to vector<32x32xi32>
    %7 = arith.andi %5, %6 : vector<32x32xi32>
    %c0_i32 = arith.constant 0 : i32
    %8 = vector.broadcast %c0_i32 : i32 to vector<32x32xi32>
    %9 = arith.cmpi eq, %7, %8 : vector<32x32xi32>
    %c3_i32_2 = arith.constant 3 : i32
    %10 = vector.broadcast %c3_i32_2 : i32 to vector<32x32xi32>
    %11 = arith.cmpi eq, %7, %10 : vector<32x32xi32>
    %c0_i32_3 = arith.constant 0 : i32
    %12 = vector.broadcast %c0_i32_3 : i32 to vector<32x32xi32>
    %13 = arith.cmpi eq, %3, %12 : vector<32x32xi32>
    %c3_i32_4 = arith.constant 3 : i32
    %14 = vector.broadcast %c3_i32_4 : i32 to vector<32x32xi32>
    %15 = arith.cmpi eq, %3, %14 : vector<32x32xi32>
    %cst = arith.constant 0.000000e+00 : bf16
    %16 = vector.broadcast %cst : bf16 to vector<32x32xbf16>
    %cst_5 = arith.constant 0.000000e+00 : bf16
    %17 = vector.broadcast %cst_5 : bf16 to vector<32x5xbf16>
    %18 = vector.extract_strided_slice %0 {offsets = [0, 0], sizes = [32, 27], strides = [1, 1]} : vector<32x32xbf16> to vector<32x27xbf16>
    %19 = tpu.concatenate %17, %18 in 1 : vector<32x5xbf16>, vector<32x27xbf16> -> vector<32x32xbf16>
    %20 = arith.ori %9, %13 : vector<32x32xi1>
    %21 = arith.select %20, %16, %19 : vector<32x32xi1>, vector<32x32xbf16>
    %cst_6 = arith.constant 0.000000e+00 : bf16
    %22 = vector.broadcast %cst_6 : bf16 to vector<32x4xbf16>
    %23 = vector.extract_strided_slice %0 {offsets = [0, 0], sizes = [32, 28], strides = [1, 1]} : vector<32x32xbf16> to vector<32x28xbf16>
    %24 = tpu.concatenate %22, %23 in 1 : vector<32x4xbf16>, vector<32x28xbf16> -> vector<32x32xbf16>
    %25 = arith.select %9, %16, %24 : vector<32x32xi1>, vector<32x32xbf16>
    %cst_7 = arith.constant 0.000000e+00 : bf16
    %26 = vector.broadcast %cst_7 : bf16 to vector<32x3xbf16>
    %27 = vector.extract_strided_slice %0 {offsets = [0, 0], sizes = [32, 29], strides = [1, 1]} : vector<32x32xbf16> to vector<32x29xbf16>
    %28 = tpu.concatenate %26, %27 in 1 : vector<32x3xbf16>, vector<32x29xbf16> -> vector<32x32xbf16>
    %29 = arith.ori %9, %15 : vector<32x32xi1>
    %30 = arith.select %29, %16, %28 : vector<32x32xi1>, vector<32x32xbf16>
    %cst_8 = arith.constant 0.000000e+00 : bf16
    %31 = vector.broadcast %cst_8 : bf16 to vector<32x1xbf16>
    %32 = vector.extract_strided_slice %0 {offsets = [0, 0], sizes = [32, 31], strides = [1, 1]} : vector<32x32xbf16> to vector<32x31xbf16>
    %33 = tpu.concatenate %31, %32 in 1 : vector<32x1xbf16>, vector<32x31xbf16> -> vector<32x32xbf16>
    %34 = arith.select %13, %16, %33 : vector<32x32xi1>, vector<32x32xbf16>
    %cst_9 = arith.constant 0.000000e+00 : bf16
    %35 = vector.broadcast %cst_9 : bf16 to vector<32x1xbf16>
    %36 = vector.extract_strided_slice %0 {offsets = [0, 1], sizes = [32, 31], strides = [1, 1]} : vector<32x32xbf16> to vector<32x31xbf16>
    %37 = tpu.concatenate %36, %35 in 1 : vector<32x31xbf16>, vector<32x1xbf16> -> vector<32x32xbf16>
    %38 = arith.select %15, %16, %37 : vector<32x32xi1>, vector<32x32xbf16>
    %cst_10 = arith.constant 0.000000e+00 : bf16
    %39 = vector.broadcast %cst_10 : bf16 to vector<32x3xbf16>
    %40 = vector.extract_strided_slice %0 {offsets = [0, 3], sizes = [32, 29], strides = [1, 1]} : vector<32x32xbf16> to vector<32x29xbf16>
    %41 = tpu.concatenate %40, %39 in 1 : vector<32x29xbf16>, vector<32x3xbf16> -> vector<32x32xbf16>
    %42 = arith.ori %11, %13 : vector<32x32xi1>
    %43 = arith.select %42, %16, %41 : vector<32x32xi1>, vector<32x32xbf16>
    %cst_11 = arith.constant 0.000000e+00 : bf16
    %44 = vector.broadcast %cst_11 : bf16 to vector<32x4xbf16>
    %45 = vector.extract_strided_slice %0 {offsets = [0, 4], sizes = [32, 28], strides = [1, 1]} : vector<32x32xbf16> to vector<32x28xbf16>
    %46 = tpu.concatenate %45, %44 in 1 : vector<32x28xbf16>, vector<32x4xbf16> -> vector<32x32xbf16>
    %47 = arith.select %11, %16, %46 : vector<32x32xi1>, vector<32x32xbf16>
    %cst_12 = arith.constant 0.000000e+00 : bf16
    %48 = vector.broadcast %cst_12 : bf16 to vector<32x5xbf16>
    %49 = vector.extract_strided_slice %0 {offsets = [0, 5], sizes = [32, 27], strides = [1, 1]} : vector<32x32xbf16> to vector<32x27xbf16>
    %50 = tpu.concatenate %49, %48 in 1 : vector<32x27xbf16>, vector<32x5xbf16> -> vector<32x32xbf16>
    %51 = arith.ori %11, %15 : vector<32x32xi1>
    %52 = arith.select %51, %16, %50 : vector<32x32xi1>, vector<32x32xbf16>
    %53 = tpu.concatenate %21, %25, %30, %34, %0, %38, %43, %47, %52 in 0 : vector<32x32xbf16>, vector<32x32xbf16>, vector<32x32xbf16>, vector<32x32xbf16>, vector<32x32xbf16>, vector<32x32xbf16>, vector<32x32xbf16>, vector<32x32xbf16>, vector<32x32xbf16> -> vector<288x32xbf16>
    %c0_13 = arith.constant 0 : index
    %c0_14 = arith.constant 0 : index
    %54 = vector.load %arg3[%c0_13, %c0_14] : memref<64x288xbf16, #tpu.memory_space<vmem>>, vector<64x288xbf16>
    %cst_15 = arith.constant dense<0.000000e+00> : vector<64x32xf32>
    %55 = tpu.matmul %54, %53, %cst_15 {dimension_numbers = #tpu.dot_dimension_numbers<[1], [0], [0], [1], [0, 0, 1, 1], [], []>} : vector<64x288xbf16>, vector<288x32xbf16>, vector<64x32xf32> -> vector<64x32xf32>
    %cst_16 = arith.constant 0.000000e+00 : f32
    %56 = vector.broadcast %cst_16 : f32 to vector<64x32xf32>
    %57 = arith.maximumf %55, %56 : vector<64x32xf32>
    %58 = arith.truncf %57 : vector<64x32xf32> to vector<64x32xbf16>
    %c0_17 = arith.constant 0 : index
    %c0_18 = arith.constant 0 : index
    %59 = vector.load %arg4[%c0_17, %c0_18] : memref<64x32xbf16, #tpu.memory_space<vmem>>, vector<64x32xbf16>
    tpu.vector_store %arg4[%c0_17, %c0_18], %58 {strides = array<i32>} : memref<64x32xbf16, #tpu.memory_space<vmem>>, vector<64x32xbf16>,
    return
  }
  func.func @transform_0(%arg0: i32, %arg1: i32) -> (i32, i32) {
    %c0_i32 = arith.constant 0 : i32
    %c0_i32_0 = arith.constant 0 : i32
    return %c0_i32, %arg1 : i32, i32
  }
  func.func @transform_1(%arg0: i32, %arg1: i32) -> (i32, i32) {
    %c0_i32 = arith.constant 0 : i32
    %c0_i32_0 = arith.constant 0 : i32
    return %arg0, %c0_i32 : i32, i32
  }
  func.func @transform_2(%arg0: i32, %arg1: i32) -> (i32, i32) {
    %c0_i32 = arith.constant 0 : i32
    return %arg0, %arg1 : i32, i32
  }
}

module attributes {stable_mosaic.version = 11 : i64} {
  func.func @_convt_s2_kernel(%arg0: i32, %arg1: i32, %arg2: memref<16x128xbf16, #tpu.memory_space<vmem>>, %arg3: memref<32x144xbf16, #tpu.memory_space<vmem>>, %arg4: memref<32x128xbf16, #tpu.memory_space<vmem>>) attributes {dimension_semantics = [#tpu.dimension_semantics<parallel>, #tpu.dimension_semantics<parallel>], iteration_bounds = array<i64: 1, 1>, scalar_prefetch = 0 : i64, scratch_operands = 0 : i64, tpu.core_type = #tpu.core_type<tc>, window_params = [{transform_indices = @transform_0, window_bounds = array<i64: 16, 128>}, {transform_indices = @transform_1, window_bounds = array<i64: 32, 144>}, {transform_indices = @transform_2, window_bounds = array<i64: 32, 128>}]} {
    %c0 = arith.constant 0 : index
    %c0_0 = arith.constant 0 : index
    %0 = vector.load %arg2[%c0, %c0_0] : memref<16x128xbf16, #tpu.memory_space<vmem>>, vector<16x128xbf16>
    %1 = tpu.iota {dimensions = array<i32: 1>} : vector<16x128xi32>
    %c7_i32 = arith.constant 7 : i32
    %2 = vector.broadcast %c7_i32 : i32 to vector<16x128xi32>
    %3 = arith.andi %1, %2 : vector<16x128xi32>
    %c3_i32 = arith.constant 3 : i32
    %4 = vector.broadcast %c3_i32 : i32 to vector<16x128xi32>
    %5 = arith.shrsi %1, %4 : vector<16x128xi32>
    %c7_i32_1 = arith.constant 7 : i32
    %6 = vector.broadcast %c7_i32_1 : i32 to vector<16x128xi32>
    %7 = arith.andi %5, %6 : vector<16x128xi32>
    %c0_i32 = arith.constant 0 : i32
    %8 = vector.broadcast %c0_i32 : i32 to vector<16x128xi32>
    %9 = arith.cmpi eq, %7, %8 : vector<16x128xi32>
    %c7_i32_2 = arith.constant 7 : i32
    %10 = vector.broadcast %c7_i32_2 : i32 to vector<16x128xi32>
    %11 = arith.cmpi eq, %7, %10 : vector<16x128xi32>
    %c0_i32_3 = arith.constant 0 : i32
    %12 = vector.broadcast %c0_i32_3 : i32 to vector<16x128xi32>
    %13 = arith.cmpi eq, %3, %12 : vector<16x128xi32>
    %c7_i32_4 = arith.constant 7 : i32
    %14 = vector.broadcast %c7_i32_4 : i32 to vector<16x128xi32>
    %15 = arith.cmpi eq, %3, %14 : vector<16x128xi32>
    %cst = arith.constant 0.000000e+00 : bf16
    %16 = vector.broadcast %cst : bf16 to vector<16x128xbf16>
    %cst_5 = arith.constant 0.000000e+00 : bf16
    %17 = vector.broadcast %cst_5 : bf16 to vector<16x9xbf16>
    %18 = vector.extract_strided_slice %0 {offsets = [0, 0], sizes = [16, 119], strides = [1, 1]} : vector<16x128xbf16> to vector<16x119xbf16>
    %19 = tpu.concatenate %17, %18 in 1 : vector<16x9xbf16>, vector<16x119xbf16> -> vector<16x128xbf16>
    %20 = arith.ori %9, %13 : vector<16x128xi1>
    %21 = arith.select %20, %16, %19 : vector<16x128xi1>, vector<16x128xbf16>
    %cst_6 = arith.constant 0.000000e+00 : bf16
    %22 = vector.broadcast %cst_6 : bf16 to vector<16x8xbf16>
    %23 = vector.extract_strided_slice %0 {offsets = [0, 0], sizes = [16, 120], strides = [1, 1]} : vector<16x128xbf16> to vector<16x120xbf16>
    %24 = tpu.concatenate %22, %23 in 1 : vector<16x8xbf16>, vector<16x120xbf16> -> vector<16x128xbf16>
    %25 = arith.select %9, %16, %24 : vector<16x128xi1>, vector<16x128xbf16>
    %cst_7 = arith.constant 0.000000e+00 : bf16
    %26 = vector.broadcast %cst_7 : bf16 to vector<16x7xbf16>
    %27 = vector.extract_strided_slice %0 {offsets = [0, 0], sizes = [16, 121], strides = [1, 1]} : vector<16x128xbf16> to vector<16x121xbf16>
    %28 = tpu.concatenate %26, %27 in 1 : vector<16x7xbf16>, vector<16x121xbf16> -> vector<16x128xbf16>
    %29 = arith.ori %9, %15 : vector<16x128xi1>
    %30 = arith.select %29, %16, %28 : vector<16x128xi1>, vector<16x128xbf16>
    %cst_8 = arith.constant 0.000000e+00 : bf16
    %31 = vector.broadcast %cst_8 : bf16 to vector<16x1xbf16>
    %32 = vector.extract_strided_slice %0 {offsets = [0, 0], sizes = [16, 127], strides = [1, 1]} : vector<16x128xbf16> to vector<16x127xbf16>
    %33 = tpu.concatenate %31, %32 in 1 : vector<16x1xbf16>, vector<16x127xbf16> -> vector<16x128xbf16>
    %34 = arith.select %13, %16, %33 : vector<16x128xi1>, vector<16x128xbf16>
    %cst_9 = arith.constant 0.000000e+00 : bf16
    %35 = vector.broadcast %cst_9 : bf16 to vector<16x1xbf16>
    %36 = vector.extract_strided_slice %0 {offsets = [0, 1], sizes = [16, 127], strides = [1, 1]} : vector<16x128xbf16> to vector<16x127xbf16>
    %37 = tpu.concatenate %36, %35 in 1 : vector<16x127xbf16>, vector<16x1xbf16> -> vector<16x128xbf16>
    %38 = arith.select %15, %16, %37 : vector<16x128xi1>, vector<16x128xbf16>
    %cst_10 = arith.constant 0.000000e+00 : bf16
    %39 = vector.broadcast %cst_10 : bf16 to vector<16x7xbf16>
    %40 = vector.extract_strided_slice %0 {offsets = [0, 7], sizes = [16, 121], strides = [1, 1]} : vector<16x128xbf16> to vector<16x121xbf16>
    %41 = tpu.concatenate %40, %39 in 1 : vector<16x121xbf16>, vector<16x7xbf16> -> vector<16x128xbf16>
    %42 = arith.ori %11, %13 : vector<16x128xi1>
    %43 = arith.select %42, %16, %41 : vector<16x128xi1>, vector<16x128xbf16>
    %cst_11 = arith.constant 0.000000e+00 : bf16
    %44 = vector.broadcast %cst_11 : bf16 to vector<16x8xbf16>
    %45 = vector.extract_strided_slice %0 {offsets = [0, 8], sizes = [16, 120], strides = [1, 1]} : vector<16x128xbf16> to vector<16x120xbf16>
    %46 = tpu.concatenate %45, %44 in 1 : vector<16x120xbf16>, vector<16x8xbf16> -> vector<16x128xbf16>
    %47 = arith.select %11, %16, %46 : vector<16x128xi1>, vector<16x128xbf16>
    %cst_12 = arith.constant 0.000000e+00 : bf16
    %48 = vector.broadcast %cst_12 : bf16 to vector<16x9xbf16>
    %49 = vector.extract_strided_slice %0 {offsets = [0, 9], sizes = [16, 119], strides = [1, 1]} : vector<16x128xbf16> to vector<16x119xbf16>
    %50 = tpu.concatenate %49, %48 in 1 : vector<16x119xbf16>, vector<16x9xbf16> -> vector<16x128xbf16>
    %51 = arith.ori %11, %15 : vector<16x128xi1>
    %52 = arith.select %51, %16, %50 : vector<16x128xi1>, vector<16x128xbf16>
    %53 = tpu.concatenate %21, %25, %30, %34, %0, %38, %43, %47, %52 in 0 : vector<16x128xbf16>, vector<16x128xbf16>, vector<16x128xbf16>, vector<16x128xbf16>, vector<16x128xbf16>, vector<16x128xbf16>, vector<16x128xbf16>, vector<16x128xbf16>, vector<16x128xbf16> -> vector<144x128xbf16>
    %c0_13 = arith.constant 0 : index
    %c0_14 = arith.constant 0 : index
    %54 = vector.load %arg3[%c0_13, %c0_14] : memref<32x144xbf16, #tpu.memory_space<vmem>>, vector<32x144xbf16>
    %cst_15 = arith.constant dense<0.000000e+00> : vector<32x128xf32>
    %55 = tpu.matmul %54, %53, %cst_15 {dimension_numbers = #tpu.dot_dimension_numbers<[1], [0], [0], [1], [0, 0, 1, 1], [], []>} : vector<32x144xbf16>, vector<144x128xbf16>, vector<32x128xf32> -> vector<32x128xf32>
    %cst_16 = arith.constant 0.000000e+00 : f32
    %56 = vector.broadcast %cst_16 : f32 to vector<32x128xf32>
    %57 = arith.maximumf %55, %56 : vector<32x128xf32>
    %58 = arith.truncf %57 : vector<32x128xf32> to vector<32x128xbf16>
    %c0_17 = arith.constant 0 : index
    %c0_18 = arith.constant 0 : index
    %59 = vector.load %arg4[%c0_17, %c0_18] : memref<32x128xbf16, #tpu.memory_space<vmem>>, vector<32x128xbf16>
    tpu.vector_store %arg4[%c0_17, %c0_18], %58 {strides = array<i32>} : memref<32x128xbf16, #tpu.memory_space<vmem>>, vector<32x128xbf16>,
    return
  }
  func.func @transform_0(%arg0: i32, %arg1: i32) -> (i32, i32) {
    %c0_i32 = arith.constant 0 : i32
    %c0_i32_0 = arith.constant 0 : i32
    return %c0_i32, %arg1 : i32, i32
  }
  func.func @transform_1(%arg0: i32, %arg1: i32) -> (i32, i32) {
    %c0_i32 = arith.constant 0 : i32
    %c0_i32_0 = arith.constant 0 : i32
    return %arg0, %c0_i32 : i32, i32
  }
  func.func @transform_2(%arg0: i32, %arg1: i32) -> (i32, i32) {
    %c0_i32 = arith.constant 0 : i32
    return %arg0, %arg1 : i32, i32
  }
}

module attributes {stable_mosaic.version = 11 : i64} {
  func.func @_convt_s2_kernel(%arg0: i32, %arg1: i32, %arg2: memref<8x512xbf16, #tpu.memory_space<vmem>>, %arg3: memref<16x72xbf16, #tpu.memory_space<vmem>>, %arg4: memref<16x512xbf16, #tpu.memory_space<vmem>>) attributes {dimension_semantics = [#tpu.dimension_semantics<parallel>, #tpu.dimension_semantics<parallel>], iteration_bounds = array<i64: 1, 1>, scalar_prefetch = 0 : i64, scratch_operands = 0 : i64, tpu.core_type = #tpu.core_type<tc>, window_params = [{transform_indices = @transform_0, window_bounds = array<i64: 8, 512>}, {transform_indices = @transform_1, window_bounds = array<i64: 16, 72>}, {transform_indices = @transform_2, window_bounds = array<i64: 16, 512>}]} {
    %c0 = arith.constant 0 : index
    %c0_0 = arith.constant 0 : index
    %0 = vector.load %arg2[%c0, %c0_0] : memref<8x512xbf16, #tpu.memory_space<vmem>>, vector<8x512xbf16>
    %1 = tpu.iota {dimensions = array<i32: 1>} : vector<8x512xi32>
    %c15_i32 = arith.constant 15 : i32
    %2 = vector.broadcast %c15_i32 : i32 to vector<8x512xi32>
    %3 = arith.andi %1, %2 : vector<8x512xi32>
    %c4_i32 = arith.constant 4 : i32
    %4 = vector.broadcast %c4_i32 : i32 to vector<8x512xi32>
    %5 = arith.shrsi %1, %4 : vector<8x512xi32>
    %c15_i32_1 = arith.constant 15 : i32
    %6 = vector.broadcast %c15_i32_1 : i32 to vector<8x512xi32>
    %7 = arith.andi %5, %6 : vector<8x512xi32>
    %c0_i32 = arith.constant 0 : i32
    %8 = vector.broadcast %c0_i32 : i32 to vector<8x512xi32>
    %9 = arith.cmpi eq, %7, %8 : vector<8x512xi32>
    %c15_i32_2 = arith.constant 15 : i32
    %10 = vector.broadcast %c15_i32_2 : i32 to vector<8x512xi32>
    %11 = arith.cmpi eq, %7, %10 : vector<8x512xi32>
    %c0_i32_3 = arith.constant 0 : i32
    %12 = vector.broadcast %c0_i32_3 : i32 to vector<8x512xi32>
    %13 = arith.cmpi eq, %3, %12 : vector<8x512xi32>
    %c15_i32_4 = arith.constant 15 : i32
    %14 = vector.broadcast %c15_i32_4 : i32 to vector<8x512xi32>
    %15 = arith.cmpi eq, %3, %14 : vector<8x512xi32>
    %cst = arith.constant 0.000000e+00 : bf16
    %16 = vector.broadcast %cst : bf16 to vector<8x512xbf16>
    %cst_5 = arith.constant 0.000000e+00 : bf16
    %17 = vector.broadcast %cst_5 : bf16 to vector<8x17xbf16>
    %18 = vector.extract_strided_slice %0 {offsets = [0, 0], sizes = [8, 495], strides = [1, 1]} : vector<8x512xbf16> to vector<8x495xbf16>
    %19 = tpu.concatenate %17, %18 in 1 : vector<8x17xbf16>, vector<8x495xbf16> -> vector<8x512xbf16>
    %20 = arith.ori %9, %13 : vector<8x512xi1>
    %21 = arith.select %20, %16, %19 : vector<8x512xi1>, vector<8x512xbf16>
    %cst_6 = arith.constant 0.000000e+00 : bf16
    %22 = vector.broadcast %cst_6 : bf16 to vector<8x16xbf16>
    %23 = vector.extract_strided_slice %0 {offsets = [0, 0], sizes = [8, 496], strides = [1, 1]} : vector<8x512xbf16> to vector<8x496xbf16>
    %24 = tpu.concatenate %22, %23 in 1 : vector<8x16xbf16>, vector<8x496xbf16> -> vector<8x512xbf16>
    %25 = arith.select %9, %16, %24 : vector<8x512xi1>, vector<8x512xbf16>
    %cst_7 = arith.constant 0.000000e+00 : bf16
    %26 = vector.broadcast %cst_7 : bf16 to vector<8x15xbf16>
    %27 = vector.extract_strided_slice %0 {offsets = [0, 0], sizes = [8, 497], strides = [1, 1]} : vector<8x512xbf16> to vector<8x497xbf16>
    %28 = tpu.concatenate %26, %27 in 1 : vector<8x15xbf16>, vector<8x497xbf16> -> vector<8x512xbf16>
    %29 = arith.ori %9, %15 : vector<8x512xi1>
    %30 = arith.select %29, %16, %28 : vector<8x512xi1>, vector<8x512xbf16>
    %cst_8 = arith.constant 0.000000e+00 : bf16
    %31 = vector.broadcast %cst_8 : bf16 to vector<8x1xbf16>
    %32 = vector.extract_strided_slice %0 {offsets = [0, 0], sizes = [8, 511], strides = [1, 1]} : vector<8x512xbf16> to vector<8x511xbf16>
    %33 = tpu.concatenate %31, %32 in 1 : vector<8x1xbf16>, vector<8x511xbf16> -> vector<8x512xbf16>
    %34 = arith.select %13, %16, %33 : vector<8x512xi1>, vector<8x512xbf16>
    %cst_9 = arith.constant 0.000000e+00 : bf16
    %35 = vector.broadcast %cst_9 : bf16 to vector<8x1xbf16>
    %36 = vector.extract_strided_slice %0 {offsets = [0, 1], sizes = [8, 511], strides = [1, 1]} : vector<8x512xbf16> to vector<8x511xbf16>
    %37 = tpu.concatenate %36, %35 in 1 : vector<8x511xbf16>, vector<8x1xbf16> -> vector<8x512xbf16>
    %38 = arith.select %15, %16, %37 : vector<8x512xi1>, vector<8x512xbf16>
    %cst_10 = arith.constant 0.000000e+00 : bf16
    %39 = vector.broadcast %cst_10 : bf16 to vector<8x15xbf16>
    %40 = vector.extract_strided_slice %0 {offsets = [0, 15], sizes = [8, 497], strides = [1, 1]} : vector<8x512xbf16> to vector<8x497xbf16>
    %41 = tpu.concatenate %40, %39 in 1 : vector<8x497xbf16>, vector<8x15xbf16> -> vector<8x512xbf16>
    %42 = arith.ori %11, %13 : vector<8x512xi1>
    %43 = arith.select %42, %16, %41 : vector<8x512xi1>, vector<8x512xbf16>
    %cst_11 = arith.constant 0.000000e+00 : bf16
    %44 = vector.broadcast %cst_11 : bf16 to vector<8x16xbf16>
    %45 = vector.extract_strided_slice %0 {offsets = [0, 16], sizes = [8, 496], strides = [1, 1]} : vector<8x512xbf16> to vector<8x496xbf16>
    %46 = tpu.concatenate %45, %44 in 1 : vector<8x496xbf16>, vector<8x16xbf16> -> vector<8x512xbf16>
    %47 = arith.select %11, %16, %46 : vector<8x512xi1>, vector<8x512xbf16>
    %cst_12 = arith.constant 0.000000e+00 : bf16
    %48 = vector.broadcast %cst_12 : bf16 to vector<8x17xbf16>
    %49 = vector.extract_strided_slice %0 {offsets = [0, 17], sizes = [8, 495], strides = [1, 1]} : vector<8x512xbf16> to vector<8x495xbf16>
    %50 = tpu.concatenate %49, %48 in 1 : vector<8x495xbf16>, vector<8x17xbf16> -> vector<8x512xbf16>
    %51 = arith.ori %11, %15 : vector<8x512xi1>
    %52 = arith.select %51, %16, %50 : vector<8x512xi1>, vector<8x512xbf16>
    %53 = tpu.concatenate %21, %25, %30, %34, %0, %38, %43, %47, %52 in 0 : vector<8x512xbf16>, vector<8x512xbf16>, vector<8x512xbf16>, vector<8x512xbf16>, vector<8x512xbf16>, vector<8x512xbf16>, vector<8x512xbf16>, vector<8x512xbf16>, vector<8x512xbf16> -> vector<72x512xbf16>
    %c0_13 = arith.constant 0 : index
    %c0_14 = arith.constant 0 : index
    %54 = vector.load %arg3[%c0_13, %c0_14] : memref<16x72xbf16, #tpu.memory_space<vmem>>, vector<16x72xbf16>
    %cst_15 = arith.constant dense<0.000000e+00> : vector<16x512xf32>
    %55 = tpu.matmul %54, %53, %cst_15 {dimension_numbers = #tpu.dot_dimension_numbers<[1], [0], [0], [1], [0, 0, 1, 1], [], []>} : vector<16x72xbf16>, vector<72x512xbf16>, vector<16x512xf32> -> vector<16x512xf32>
    %cst_16 = arith.constant 0.000000e+00 : f32
    %56 = vector.broadcast %cst_16 : f32 to vector<16x512xf32>
    %57 = arith.maximumf %55, %56 : vector<16x512xf32>
    %58 = arith.truncf %57 : vector<16x512xf32> to vector<16x512xbf16>
    %c0_17 = arith.constant 0 : index
    %c0_18 = arith.constant 0 : index
    %59 = vector.load %arg4[%c0_17, %c0_18] : memref<16x512xbf16, #tpu.memory_space<vmem>>, vector<16x512xbf16>
    tpu.vector_store %arg4[%c0_17, %c0_18], %58 {strides = array<i32>} : memref<16x512xbf16, #tpu.memory_space<vmem>>, vector<16x512xbf16>,
    return
  }
  func.func @transform_0(%arg0: i32, %arg1: i32) -> (i32, i32) {
    %c0_i32 = arith.constant 0 : i32
    %c0_i32_0 = arith.constant 0 : i32
    return %c0_i32, %arg1 : i32, i32
  }
  func.func @transform_1(%arg0: i32, %arg1: i32) -> (i32, i32) {
    %c0_i32 = arith.constant 0 : i32
    %c0_i32_0 = arith.constant 0 : i32
    return %arg0, %c0_i32 : i32, i32
  }
  func.func @transform_2(%arg0: i32, %arg1: i32) -> (i32, i32) {
    %c0_i32 = arith.constant 0 : i32
    return %arg0, %arg1 : i32, i32
  }
}

module attributes {stable_mosaic.version = 11 : i64} {
  func.func @_convt_s2_kernel(%arg0: i32, %arg1: i32, %arg2: memref<4x2048xbf16, #tpu.memory_space<vmem>>, %arg3: memref<12x36xbf16, #tpu.memory_space<vmem>>, %arg4: memref<12x2048xf32, #tpu.memory_space<vmem>>) attributes {dimension_semantics = [#tpu.dimension_semantics<parallel>, #tpu.dimension_semantics<parallel>], iteration_bounds = array<i64: 1, 1>, scalar_prefetch = 0 : i64, scratch_operands = 0 : i64, tpu.core_type = #tpu.core_type<tc>, window_params = [{transform_indices = @transform_0, window_bounds = array<i64: 4, 2048>}, {transform_indices = @transform_1, window_bounds = array<i64: 12, 36>}, {transform_indices = @transform_2, window_bounds = array<i64: 12, 2048>}]} {
    %c0 = arith.constant 0 : index
    %c0_0 = arith.constant 0 : index
    %0 = vector.load %arg2[%c0, %c0_0] : memref<4x2048xbf16, #tpu.memory_space<vmem>>, vector<4x2048xbf16>
    %1 = tpu.iota {dimensions = array<i32: 1>} : vector<4x2048xi32>
    %c31_i32 = arith.constant 31 : i32
    %2 = vector.broadcast %c31_i32 : i32 to vector<4x2048xi32>
    %3 = arith.andi %1, %2 : vector<4x2048xi32>
    %c5_i32 = arith.constant 5 : i32
    %4 = vector.broadcast %c5_i32 : i32 to vector<4x2048xi32>
    %5 = arith.shrsi %1, %4 : vector<4x2048xi32>
    %c31_i32_1 = arith.constant 31 : i32
    %6 = vector.broadcast %c31_i32_1 : i32 to vector<4x2048xi32>
    %7 = arith.andi %5, %6 : vector<4x2048xi32>
    %c0_i32 = arith.constant 0 : i32
    %8 = vector.broadcast %c0_i32 : i32 to vector<4x2048xi32>
    %9 = arith.cmpi eq, %7, %8 : vector<4x2048xi32>
    %c31_i32_2 = arith.constant 31 : i32
    %10 = vector.broadcast %c31_i32_2 : i32 to vector<4x2048xi32>
    %11 = arith.cmpi eq, %7, %10 : vector<4x2048xi32>
    %c0_i32_3 = arith.constant 0 : i32
    %12 = vector.broadcast %c0_i32_3 : i32 to vector<4x2048xi32>
    %13 = arith.cmpi eq, %3, %12 : vector<4x2048xi32>
    %c31_i32_4 = arith.constant 31 : i32
    %14 = vector.broadcast %c31_i32_4 : i32 to vector<4x2048xi32>
    %15 = arith.cmpi eq, %3, %14 : vector<4x2048xi32>
    %cst = arith.constant 0.000000e+00 : bf16
    %16 = vector.broadcast %cst : bf16 to vector<4x2048xbf16>
    %cst_5 = arith.constant 0.000000e+00 : bf16
    %17 = vector.broadcast %cst_5 : bf16 to vector<4x33xbf16>
    %18 = vector.extract_strided_slice %0 {offsets = [0, 0], sizes = [4, 2015], strides = [1, 1]} : vector<4x2048xbf16> to vector<4x2015xbf16>
    %19 = tpu.concatenate %17, %18 in 1 : vector<4x33xbf16>, vector<4x2015xbf16> -> vector<4x2048xbf16>
    %20 = arith.ori %9, %13 : vector<4x2048xi1>
    %21 = arith.select %20, %16, %19 : vector<4x2048xi1>, vector<4x2048xbf16>
    %cst_6 = arith.constant 0.000000e+00 : bf16
    %22 = vector.broadcast %cst_6 : bf16 to vector<4x32xbf16>
    %23 = vector.extract_strided_slice %0 {offsets = [0, 0], sizes = [4, 2016], strides = [1, 1]} : vector<4x2048xbf16> to vector<4x2016xbf16>
    %24 = tpu.concatenate %22, %23 in 1 : vector<4x32xbf16>, vector<4x2016xbf16> -> vector<4x2048xbf16>
    %25 = arith.select %9, %16, %24 : vector<4x2048xi1>, vector<4x2048xbf16>
    %cst_7 = arith.constant 0.000000e+00 : bf16
    %26 = vector.broadcast %cst_7 : bf16 to vector<4x31xbf16>
    %27 = vector.extract_strided_slice %0 {offsets = [0, 0], sizes = [4, 2017], strides = [1, 1]} : vector<4x2048xbf16> to vector<4x2017xbf16>
    %28 = tpu.concatenate %26, %27 in 1 : vector<4x31xbf16>, vector<4x2017xbf16> -> vector<4x2048xbf16>
    %29 = arith.ori %9, %15 : vector<4x2048xi1>
    %30 = arith.select %29, %16, %28 : vector<4x2048xi1>, vector<4x2048xbf16>
    %cst_8 = arith.constant 0.000000e+00 : bf16
    %31 = vector.broadcast %cst_8 : bf16 to vector<4x1xbf16>
    %32 = vector.extract_strided_slice %0 {offsets = [0, 0], sizes = [4, 2047], strides = [1, 1]} : vector<4x2048xbf16> to vector<4x2047xbf16>
    %33 = tpu.concatenate %31, %32 in 1 : vector<4x1xbf16>, vector<4x2047xbf16> -> vector<4x2048xbf16>
    %34 = arith.select %13, %16, %33 : vector<4x2048xi1>, vector<4x2048xbf16>
    %cst_9 = arith.constant 0.000000e+00 : bf16
    %35 = vector.broadcast %cst_9 : bf16 to vector<4x1xbf16>
    %36 = vector.extract_strided_slice %0 {offsets = [0, 1], sizes = [4, 2047], strides = [1, 1]} : vector<4x2048xbf16> to vector<4x2047xbf16>
    %37 = tpu.concatenate %36, %35 in 1 : vector<4x2047xbf16>, vector<4x1xbf16> -> vector<4x2048xbf16>
    %38 = arith.select %15, %16, %37 : vector<4x2048xi1>, vector<4x2048xbf16>
    %cst_10 = arith.constant 0.000000e+00 : bf16
    %39 = vector.broadcast %cst_10 : bf16 to vector<4x31xbf16>
    %40 = vector.extract_strided_slice %0 {offsets = [0, 31], sizes = [4, 2017], strides = [1, 1]} : vector<4x2048xbf16> to vector<4x2017xbf16>
    %41 = tpu.concatenate %40, %39 in 1 : vector<4x2017xbf16>, vector<4x31xbf16> -> vector<4x2048xbf16>
    %42 = arith.ori %11, %13 : vector<4x2048xi1>
    %43 = arith.select %42, %16, %41 : vector<4x2048xi1>, vector<4x2048xbf16>
    %cst_11 = arith.constant 0.000000e+00 : bf16
    %44 = vector.broadcast %cst_11 : bf16 to vector<4x32xbf16>
    %45 = vector.extract_strided_slice %0 {offsets = [0, 32], sizes = [4, 2016], strides = [1, 1]} : vector<4x2048xbf16> to vector<4x2016xbf16>
    %46 = tpu.concatenate %45, %44 in 1 : vector<4x2016xbf16>, vector<4x32xbf16> -> vector<4x2048xbf16>
    %47 = arith.select %11, %16, %46 : vector<4x2048xi1>, vector<4x2048xbf16>
    %cst_12 = arith.constant 0.000000e+00 : bf16
    %48 = vector.broadcast %cst_12 : bf16 to vector<4x33xbf16>
    %49 = vector.extract_strided_slice %0 {offsets = [0, 33], sizes = [4, 2015], strides = [1, 1]} : vector<4x2048xbf16> to vector<4x2015xbf16>
    %50 = tpu.concatenate %49, %48 in 1 : vector<4x2015xbf16>, vector<4x33xbf16> -> vector<4x2048xbf16>
    %51 = arith.ori %11, %15 : vector<4x2048xi1>
    %52 = arith.select %51, %16, %50 : vector<4x2048xi1>, vector<4x2048xbf16>
    %53 = tpu.concatenate %21, %25, %30, %34, %0, %38, %43, %47, %52 in 0 : vector<4x2048xbf16>, vector<4x2048xbf16>, vector<4x2048xbf16>, vector<4x2048xbf16>, vector<4x2048xbf16>, vector<4x2048xbf16>, vector<4x2048xbf16>, vector<4x2048xbf16>, vector<4x2048xbf16> -> vector<36x2048xbf16>
    %c0_13 = arith.constant 0 : index
    %c0_14 = arith.constant 0 : index
    %54 = vector.load %arg3[%c0_13, %c0_14] : memref<12x36xbf16, #tpu.memory_space<vmem>>, vector<12x36xbf16>
    %cst_15 = arith.constant dense<0.000000e+00> : vector<12x2048xf32>
    %55 = tpu.matmul %54, %53, %cst_15 {dimension_numbers = #tpu.dot_dimension_numbers<[1], [0], [0], [1], [0, 0, 1, 1], [], []>} : vector<12x36xbf16>, vector<36x2048xbf16>, vector<12x2048xf32> -> vector<12x2048xf32>
    %56 = math.tanh %55 : vector<12x2048xf32>
    %c0_16 = arith.constant 0 : index
    %c0_17 = arith.constant 0 : index
    %57 = vector.load %arg4[%c0_16, %c0_17] : memref<12x2048xf32, #tpu.memory_space<vmem>>, vector<12x2048xf32>
    tpu.vector_store %arg4[%c0_16, %c0_17], %56 {strides = array<i32>} : memref<12x2048xf32, #tpu.memory_space<vmem>>, vector<12x2048xf32>,
    return
  }
  func.func @transform_0(%arg0: i32, %arg1: i32) -> (i32, i32) {
    %c0_i32 = arith.constant 0 : i32
    %c0_i32_0 = arith.constant 0 : i32
    return %c0_i32, %arg1 : i32, i32
  }
  func.func @transform_1(%arg0: i32, %arg1: i32) -> (i32, i32) {
    %c0_i32 = arith.constant 0 : i32
    %c0_i32_0 = arith.constant 0 : i32
    return %arg0, %c0_i32 : i32, i32
  }
  func.func @transform_2(%arg0: i32, %arg1: i32) -> (i32, i32) {
    %c0_i32 = arith.constant 0 : i32
    return %arg0, %arg1 : i32, i32
  }
}

</mosaic_0001>

<llo_original>
// kernel: generator_forward.5
$region0: #{generator_forward.5}
  #allocation0 [shape = 'u32[]', space=smem, size = 0x4, offset = 0x4, fixed_abs, tag = 'smem constant byte address 0x4 - core index']
  #allocation1 [shape = 'u32[72,128]{1,0:T(1,128)}', space=vmem, size = 0x9000, scoped, tag = 'internal scratch']
  %s0 = inlined_call_operand.vmem [shape: bf16[2,8], index: 0, kind: input, shape index: {}]
  %s1 = inlined_call_operand.vmem [shape: bf16[8,512], index: 1, kind: input, shape index: {}]
  %s2 = inlined_call_operand.vmem [shape: bf16[2,512], index: 2, kind: output, shape index: {}]
  %s3 = sld [smem:[#allocation0]]
  $region18: #{generator_forward.5} parent=0
    _
  %s5 = ssub.s32 1, %s3
  %s6 = scalar_select 0, %s5, %s3
  // Predicated region
  $region2: #{generator_forward.5} parent=0 // pred_check
    _
  $region3: #{generator_forward.5} parent=0 // pred_check_branch
    %8 = sbr.rel (0) target = $region5
  $region4: #{generator_forward.5} parent=0 // pred_region
    _
  $region5: #{generator_forward.5} parent=0 // pred_fallthru
    _
  // Predicated region
  $region6: #{generator_forward.5} parent=0 // pred_check
    _
  $region7: #{generator_forward.5} parent=0 // pred_check_branch
    %10 = sbr.rel (0) target = $region9
  $region8: #{generator_forward.5} parent=0 // pred_region
    _
  $region9: #{generator_forward.5} parent=0 // pred_fallthru
    _
  %v12 = vld [vmem:[%s0] sm:$0x1]
  %v13 = vld [vmem:[%s1] sm:$0xff]
  %v14 = vld [vmem:[%s1 + $0x8] sm:$0xff]
  %v17 = vunpack.c.l.b16 %v13
  %v18 = vunpack.c.h.b16 %v13
  %v19 = vunpack.c.l.b16 %v14
  %v20 = vunpack.c.h.b16 %v14
  %v21 = vpack.c.b16 %v17, %v17
  %v22 = vpack.c.b16 %v18, %v18
  %v23 = vpack.c.b16 %v19, %v19
  %v24 = vpack.c.b16 %v20, %v20
  %vm25 = vcmask 64512
  %v27 = vsel %vm25, %v12, 0
  %vm29 = vcmask 1043456
  %v31 = vsel %vm29, %v21, 0
  %v34 = vsel %vm29, %v22, 0
  %v37 = vsel %vm29, %v23, 0
  %v40 = vsel %vm29, %v24, 0
  %42 = vmatpush.bf16.msra.mxu0 0
  %43 = vmatpush.bf16.msra.mxu0 0
  %44 = vmatpush.bf16.msra.mxu0 0
  %45 = vmatpush.bf16.msra.mxu0 0
  %46 = vmatpush.bf16.msra.mxu0 0
  %47 = vmatpush.bf16.msra.mxu0 0
  %48 = vmatpush.bf16.msra.mxu0 0
  %49 = vmatpush.bf16.msra.mxu0 %v31
  %50 = vmatmul.bf16.gmra.mxu0 %v27
  %v51 = vpop.f32.mrf.mxu0
  %v52 = vadd.f32 0.0, %v51
  %v53 = vpop.f32.mrf.mxu0
  %54 = vdwg.mxu0
  %55 = vmatpush.bf16.msra.mxu0 0
  %56 = vmatpush.bf16.msra.mxu0 0
  %57 = vmatpush.bf16.msra.mxu0 0
  %58 = vmatpush.bf16.msra.mxu0 0
  %59 = vmatpush.bf16.msra.mxu0 0
  %60 = vmatpush.bf16.msra.mxu0 0
  %61 = vmatpush.bf16.msra.mxu0 0
  %62 = vmatpush.bf16.msra.mxu0 %v34
  %63 = vmatmul.bf16.gmra.mxu0 %v27
  %v64 = vpop.f32.mrf.mxu0
  %v65 = vadd.f32 0.0, %v64
  %v66 = vpop.f32.mrf.mxu0
  %67 = vdwg.mxu0
  %68 = vmatpush.bf16.msra.mxu0 0
  %69 = vmatpush.bf16.msra.mxu0 0
  %70 = vmatpush.bf16.msra.mxu0 0
  %71 = vmatpush.bf16.msra.mxu0 0
  %72 = vmatpush.bf16.msra.mxu0 0
  %73 = vmatpush.bf16.msra.mxu0 0
  %74 = vmatpush.bf16.msra.mxu0 0
  %75 = vmatpush.bf16.msra.mxu0 %v37
  %76 = vmatmul.bf16.gmra.mxu0 %v27
  %v77 = vpop.f32.mrf.mxu0
  %v78 = vadd.f32 0.0, %v77
  %v79 = vpop.f32.mrf.mxu0
  %80 = vdwg.mxu0
  %81 = vmatpush.bf16.msra.mxu0 0
  %82 = vmatpush.bf16.msra.mxu0 0
  %83 = vmatpush.bf16.msra.mxu0 0
  %84 = vmatpush.bf16.msra.mxu0 0
  %85 = vmatpush.bf16.msra.mxu0 0
  %86 = vmatpush.bf16.msra.mxu0 0
  %87 = vmatpush.bf16.msra.mxu0 0
  %88 = vmatpush.bf16.msra.mxu0 %v40
  %89 = vmatmul.bf16.gmra.mxu0 %v27
  %v90 = vpop.f32.mrf.mxu0
  %v91 = vadd.f32 0.0, %v90
  %v92 = vpop.f32.mrf.mxu0
  %93 = vdwg.mxu0
  %v94 = vmax.f32 %v52, 0.0
  %v95 = vmax.f32 %v65, 0.0
  %v96 = vmax.f32 %v78, 0.0
  %v97 = vmax.f32 %v91, 0.0
  %v98 = vpack.c.bf16 %v95, %v94
  %v99 = vpack.c.bf16 %v97, %v96
  %v102 = vrot.slane %v98, 3
  %v103 = vrot.slane %v99, 6
  %v104 = vrot.slane %v99, 1
  %vm105 = vcmask 1040384
  %v108 = vsel %vm105, %v98, %v102
  %vm109 = vcmask 1042434
  %v112 = vsel %vm109, %v103, %v104
  %vm113 = vcmask 1041408
  %v114 = vsel %vm113, %v108, %v112
  %116 = vst [vmem:[%s2] sm:$0xf] %v114
  // Predicated region
  $region10: #{generator_forward.5} parent=0 // pred_check
    _
  $region11: #{generator_forward.5} parent=0 // pred_check_branch
    %118 = sbr.rel (0) target = $region13
  $region12: #{generator_forward.5} parent=0 // pred_region
    _
  $region13: #{generator_forward.5} parent=0 // pred_fallthru
    _
  // Predicated region
  $region14: #{generator_forward.5} parent=0 // pred_check
    _
  $region15: #{generator_forward.5} parent=0 // pred_check_branch
    %120 = sbr.rel (0) target = $region17
  $region16: #{generator_forward.5} parent=0 // pred_region
    _
  $region17: #{generator_forward.5} parent=0 // pred_fallthru
    _

// kernel: generator_forward.6
$region0: #{generator_forward.6}
  #allocation0 [shape = 'u32[]', space=smem, size = 0x4, offset = 0x4, fixed_abs, tag = 'smem constant byte address 0x4 - core index']
  #allocation1 [shape = 'u32[72,128]{1,0:T(1,128)}', space=vmem, size = 0x9000, scoped, tag = 'internal scratch']
  %s0 = inlined_call_operand.vmem [shape: bf16[32,32], index: 0, kind: input, shape index: {}]
  %s1 = inlined_call_operand.vmem [shape: bf16[64,288], index: 1, kind: input, shape index: {}]
  %s2 = inlined_call_operand.vmem [shape: bf16[64,32], index: 2, kind: output, shape index: {}]
  %s3 = sld [smem:[#allocation0]]
  $region18: #{generator_forward.6} parent=0
    _
  %s5 = ssub.s32 1, %s3
  %s6 = scalar_select 0, %s5, %s3
  // Predicated region
  $region2: #{generator_forward.6} parent=0 // pred_check
    _
  $region3: #{generator_forward.6} parent=0 // pred_check_branch
    %8 = sbr.rel (0) target = $region5
  $region4: #{generator_forward.6} parent=0 // pred_region
    _
  $region5: #{generator_forward.6} parent=0 // pred_fallthru
    _
  // Predicated region
  $region6: #{generator_forward.6} parent=0 // pred_check
    _
  $region7: #{generator_forward.6} parent=0 // pred_check_branch
    %10 = sbr.rel (0) target = $region9
  $region8: #{generator_forward.6} parent=0 // pred_region
    _
  $region9: #{generator_forward.6} parent=0 // pred_fallthru
    _
  %v14 = vld [vmem:[%s0] sm:$0xf]
  %v15 = vld [vmem:[%s0 + $0x4] sm:$0xf]
  %v16 = vld [vmem:[%s0 + $0x8] sm:$0xf]
  %v17 = vld [vmem:[%s0 + $0xc] sm:$0xf]
  %v18 = vlaneseq
  %v19 = vand.u32 %v18, 127
  %v20 = vand.u32 %v19, 3
  %v21 = vshra.s32 %v19, 2
  %v22 = vand.u32 %v21, 3
  %vm23 = vcmp.eq.s32.totalorder %v22, 0
  %vm24 = vcmp.eq.s32.totalorder %v22, 3
  %vm25 = vcmp.eq.s32.totalorder %v20, 0
  %vm26 = vcmp.eq.s32.totalorder %v20, 3
  %v31 = vunpack.c.l.b16 %v14
  %v32 = vunpack.c.l.b16 %v15
  %v33 = vunpack.c.l.b16 %v16
  %v34 = vunpack.c.l.b16 %v17
  %v35 = vpack.c.b16 %v32, %v31
  %v36 = vpack.c.b16 %v34, %v33
  %37 = vrot.lane.b32.xlu0 %v35, 5
  %v38 = vpop.permute.xlu0 %37
  %39 = vrot.lane.b32.xlu0 %v36, 5
  %v40 = vpop.permute.xlu0 %39
  %vm41 = vcmask 39936
  %v44 = vsel %vm41, 0, %v38
  %v47 = vsel %vm41, 0, %v40
  %vm49 = vmor %vm23, %vm25
  %vm50 = vmpackc.low %vm49, %vm49
  %v51 = vsel %vm50, 65537, 0
  %v52 = vperm.slane %v51, 0
  %v53 = vunpack.c.l.b16 %v52
  %v54 = vunpack.c.h.b16 %v52
  %v55 = vunpack.c.l.b16 0
  %v56 = vunpack.c.h.b16 0
  %vm57 = vcmp.ne.s32.totalorder %v53, %v55
  %vm58 = vcmp.ne.s32.totalorder %v54, %v56
  %vm59 = vmpackc.low %vm58, %vm57
  %v60 = vsel %vm59, 0, %v44
  %v61 = vsel %vm59, 0, %v47
  %62 = vrot.lane.b32.xlu0 %v35, 4
  %v63 = vpop.permute.xlu0 %62
  %64 = vrot.lane.b32.xlu0 %v36, 4
  %v65 = vpop.permute.xlu0 %64
  %vm66 = vcmask 31744
  %v68 = vsel %vm66, 0, %v63
  %v71 = vsel %vm66, 0, %v65
  %vm73 = vmpackc.low %vm23, %vm23
  %v74 = vsel %vm73, 65537, 0
  %v75 = vperm.slane %v74, 0
  %v76 = vunpack.c.l.b16 %v75
  %v77 = vunpack.c.h.b16 %v75
  %v78 = vunpack.c.l.b16 0
  %v79 = vunpack.c.h.b16 0
  %vm80 = vcmp.ne.s32.totalorder %v76, %v78
  %vm81 = vcmp.ne.s32.totalorder %v77, %v79
  %vm82 = vmpackc.low %vm81, %vm80
  %v83 = vsel %vm82, 0, %v68
  %v84 = vsel %vm82, 0, %v71
  %85 = vrot.lane.b32.xlu0 %v35, 3
  %v86 = vpop.permute.xlu0 %85
  %87 = vrot.lane.b32.xlu0 %v36, 3
  %v88 = vpop.permute.xlu0 %87
  %vm89 = vcmask 23552
  %v91 = vsel %vm89, 0, %v86
  %v94 = vsel %vm89, 0, %v88
  %vm96 = vmor %vm23, %vm26
  %vm97 = vmpackc.low %vm96, %vm96
  %v98 = vsel %vm97, 65537, 0
  %v99 = vperm.slane %v98, 0
  %v100 = vunpack.c.l.b16 %v99
  %v101 = vunpack.c.h.b16 %v99
  %v102 = vunpack.c.l.b16 0
  %v103 = vunpack.c.h.b16 0
  %vm104 = vcmp.ne.s32.totalorder %v100, %v102
  %vm105 = vcmp.ne.s32.totalorder %v101, %v103
  %vm106 = vmpackc.low %vm105, %vm104
  %v107 = vsel %vm106, 0, %v91
  %v108 = vsel %vm106, 0, %v94
  %109 = vrot.lane.b32.xlu0 %v35, 1
  %v110 = vpop.permute.xlu0 %109
  %111 = vrot.lane.b32.xlu0 %v36, 1
  %v112 = vpop.permute.xlu0 %111
  %vm113 = vcmask 7168
  %v115 = vsel %vm113, 0, %v110
  %v118 = vsel %vm113, 0, %v112
  %vm120 = vmpackc.low %vm25, %vm25
  %v121 = vsel %vm120, 65537, 0
  %v122 = vperm.slane %v121, 0
  %v123 = vunpack.c.l.b16 %v122
  %v124 = vunpack.c.h.b16 %v122
  %v125 = vunpack.c.l.b16 0
  %v126 = vunpack.c.h.b16 0
  %vm127 = vcmp.ne.s32.totalorder %v123, %v125
  %vm128 = vcmp.ne.s32.totalorder %v124, %v126
  %vm129 = vmpackc.low %vm128, %vm127
  %v130 = vsel %vm129, 0, %v115
  %v131 = vsel %vm129, 0, %v118
  %132 = vrot.lane.b32.xlu0 %v35, 127
  %v133 = vpop.permute.xlu0 %132
  %134 = vrot.lane.b32.xlu0 %v36, 127
  %v135 = vpop.permute.xlu0 %134
  %vm136 = vcmask 252928
  %v138 = vsel %vm136, %v133, 0
  %v141 = vsel %vm136, %v135, 0
  %vm143 = vmpackc.low %vm26, %vm26
  %v144 = vsel %vm143, 65537, 0
  %v145 = vperm.slane %v144, 0
  %v146 = vunpack.c.l.b16 %v145
  %v147 = vunpack.c.h.b16 %v145
  %v148 = vunpack.c.l.b16 0
  %v149 = vunpack.c.h.b16 0
  %vm150 = vcmp.ne.s32.totalorder %v146, %v148
  %vm151 = vcmp.ne.s32.totalorder %v147, %v149
  %vm152 = vmpackc.low %vm151, %vm150
  %v153 = vsel %vm152, 0, %v138
  %v154 = vsel %vm152, 0, %v141
  %155 = vrot.lane.b32.xlu0 %v35, 125
  %v156 = vpop.permute.xlu0 %155
  %157 = vrot.lane.b32.xlu0 %v36, 125
  %v158 = vpop.permute.xlu0 %157
  %vm159 = vcmask 236544
  %v161 = vsel %vm159, %v156, 0
  %v164 = vsel %vm159, %v158, 0
  %vm166 = vmor %vm24, %vm25
  %vm167 = vmpackc.low %vm166, %vm166
  %v168 = vsel %vm167, 65537, 0
  %v169 = vperm.slane %v168, 0
  %v170 = vunpack.c.l.b16 %v169
  %v171 = vunpack.c.h.b16 %v169
  %v172 = vunpack.c.l.b16 0
  %v173 = vunpack.c.h.b16 0
  %vm174 = vcmp.ne.s32.totalorder %v170, %v172
  %vm175 = vcmp.ne.s32.totalorder %v171, %v173
  %vm176 = vmpackc.low %vm175, %vm174
  %v177 = vsel %vm176, 0, %v161
  %v178 = vsel %vm176, 0, %v164
  %179 = vrot.lane.b32.xlu0 %v35, 124
  %v180 = vpop.permute.xlu0 %179
  %181 = vrot.lane.b32.xlu0 %v36, 124
  %v182 = vpop.permute.xlu0 %181
  %vm183 = vcmask 228352
  %v185 = vsel %vm183, %v180, 0
  %v188 = vsel %vm183, %v182, 0
  %vm190 = vmpackc.low %vm24, %vm24
  %v191 = vsel %vm190, 65537, 0
  %v192 = vperm.slane %v191, 0
  %v193 = vunpack.c.l.b16 %v192
  %v194 = vunpack.c.h.b16 %v192
  %v195 = vunpack.c.l.b16 0
  %v196 = vunpack.c.h.b16 0
  %vm197 = vcmp.ne.s32.totalorder %v193, %v195
  %vm198 = vcmp.ne.s32.totalorder %v194, %v196
  %vm199 = vmpackc.low %vm198, %vm197
  %v200 = vsel %vm199, 0, %v185
  %v201 = vsel %vm199, 0, %v188
  %202 = vrot.lane.b32.xlu0 %v35, 123
  %v203 = vpop.permute.xlu0 %202
  %204 = vrot.lane.b32.xlu0 %v36, 123
  %v205 = vpop.permute.xlu0 %204
  %vm206 = vcmask 220160
  %v208 = vsel %vm206, %v203, 0
  %v211 = vsel %vm206, %v205, 0
  %vm213 = vmor %vm24, %vm26
  %vm214 = vmpackc.low %vm213, %vm213
  %v215 = vsel %vm214, 65537, 0
  %v216 = vperm.slane %v215, 0
  %v217 = vunpack.c.l.b16 %v216
  %v218 = vunpack.c.h.b16 %v216
  %v219 = vunpack.c.l.b16 0
  %v220 = vunpack.c.h.b16 0
  %vm221 = vcmp.ne.s32.totalorder %v217, %v219
  %vm222 = vcmp.ne.s32.totalorder %v218, %v220
  %vm223 = vmpackc.low %vm222, %vm221
  %v224 = vsel %vm223, 0, %v208
  %v225 = vsel %vm223, 0, %v211
  %v228 = vld [vmem:[%s1] sm:$0xff]
  %v229 = vld [vmem:[%s1 + $0x8] sm:$0xf]
  %v230 = vld [vmem:[%s1 + $0xc] sm:$0xff]
  %v231 = vld [vmem:[%s1 + $0x14] sm:$0xf]
  %v232 = vld [vmem:[%s1 + $0x18] sm:$0xff]
  %v233 = vld [vmem:[%s1 + $0x20] sm:$0xf]
  %v234 = vld [vmem:[%s1 + $0x24] sm:$0xff]
  %v235 = vld [vmem:[%s1 + $0x2c] sm:$0xf]
  %v236 = vld [vmem:[%s1 + $0x30] sm:$0xff]
  %v237 = vld [vmem:[%s1 + $0x38] sm:$0xf]
  %v238 = vld [vmem:[%s1 + $0x3c] sm:$0xff]
  %v239 = vld [vmem:[%s1 + $0x44] sm:$0xf]
  %v240 = vld [vmem:[%s1 + $0x48] sm:$0xff]
  %v241 = vld [vmem:[%s1 + $0x50] sm:$0xf]
  %v242 = vld [vmem:[%s1 + $0x54] sm:$0xff]
  %v243 = vld [vmem:[%s1 + $0x5c] sm:$0xf]
  %v260 = vunpack.c.l.b16 %v228
  %v261 = vunpack.c.h.b16 %v228
  %v262 = vunpack.c.l.b16 %v229
  %v263 = vunpack.c.l.b16 %v230
  %v264 = vunpack.c.h.b16 %v230
  %v265 = vunpack.c.l.b16 %v231
  %v266 = vunpack.c.l.b16 %v232
  %v267 = vunpack.c.h.b16 %v232
  %v268 = vunpack.c.l.b16 %v233
  %v269 = vunpack.c.l.b16 %v234
  %v270 = vunpack.c.h.b16 %v234
  %v271 = vunpack.c.l.b16 %v235
  %v272 = vunpack.c.l.b16 %v236
  %v273 = vunpack.c.h.b16 %v236
  %v274 = vunpack.c.l.b16 %v237
  %v275 = vunpack.c.l.b16 %v238
  %v276 = vunpack.c.h.b16 %v238
  %v277 = vunpack.c.l.b16 %v239
  %v278 = vunpack.c.l.b16 %v240
  %v279 = vunpack.c.h.b16 %v240
  %v280 = vunpack.c.l.b16 %v241
  %v281 = vunpack.c.l.b16 %v242
  %v282 = vunpack.c.h.b16 %v242
  %v283 = vunpack.c.l.b16 %v243
  %v284 = vpack.c.b16 %v263, %v260
  %v285 = vpack.c.b16 %v264, %v261
  %v286 = vpack.c.b16 %v265, %v262
  %v287 = vpack.c.b16 %v269, %v266
  %v288 = vpack.c.b16 %v270, %v267
  %v289 = vpack.c.b16 %v271, %v268
  %v290 = vpack.c.b16 %v275, %v272
  %v291 = vpack.c.b16 %v276, %v273
  %v292 = vpack.c.b16 %v277, %v274
  %v293 = vpack.c.b16 %v281, %v278
  %v294 = vpack.c.b16 %v282, %v279
  %v295 = vpack.c.b16 %v283, %v280
  %vm304 = vcmask 261120
  %v306 = vsel %vm304, %v286, 0
  %v309 = vsel %vm304, %v289, 0
  %v312 = vsel %vm304, %v292, 0
  %v315 = vsel %vm304, %v295, 0
  %317 = vmatpush.bf16.msra.mxu0 %v131
  %318 = vmatpush.bf16.msra.mxu0 %v130
  %319 = vmatpush.bf16.msra.mxu0 %v108
  %320 = vmatpush.bf16.msra.mxu0 %v107
  %321 = vmatpush.bf16.msra.mxu0 %v84
  %322 = vmatpush.bf16.msra.mxu0 %v83
  %323 = vmatpush.bf16.msra.mxu0 %v61
  %324 = vmatpush.bf16.msra.mxu0 %v60
  %325 = vmatmul.bf16.gmra.mxu0 %v284
  %v326 = vpop.f32.mrf.mxu0
  %v327 = vadd.f32 0.0, %v326
  %v328 = vpop.f32.mrf.mxu0
  %v329 = vadd.f32 0.0, %v328
  %330 = vmatmul.bf16.gmra.mxu0 %v287
  %v331 = vpop.f32.mrf.mxu0
  %v332 = vadd.f32 0.0, %v331
  %v333 = vpop.f32.mrf.mxu0
  %v334 = vadd.f32 0.0, %v333
  %335 = vmatmul.bf16.gmra.mxu0 %v290
  %v336 = vpop.f32.mrf.mxu0
  %v337 = vadd.f32 0.0, %v336
  %v338 = vpop.f32.mrf.mxu0
  %v339 = vadd.f32 0.0, %v338
  %340 = vmatmul.bf16.gmra.mxu0 %v293
  %v341 = vpop.f32.mrf.mxu0
  %v342 = vadd.f32 0.0, %v341
  %v343 = vpop.f32.mrf.mxu0
  %v344 = vadd.f32 0.0, %v343
  %345 = vdwg.mxu0
  %346 = vmatpush.bf16.msra.mxu0 %v201
  %347 = vmatpush.bf16.msra.mxu0 %v200
  %348 = vmatpush.bf16.msra.mxu0 %v178
  %349 = vmatpush.bf16.msra.mxu0 %v177
  %350 = vmatpush.bf16.msra.mxu0 %v154
  %351 = vmatpush.bf16.msra.mxu0 %v153
  %352 = vmatpush.bf16.msra.mxu0 %v36
  %353 = vmatpush.bf16.msra.mxu0 %v35
  %354 = vmatmul.bf16.gmra.mxu0 %v285
  %v355 = vpop.f32.mrf.mxu0
  %v356 = vadd.f32 %v327, %v355
  %v357 = vpop.f32.mrf.mxu0
  %v358 = vadd.f32 %v329, %v357
  %359 = vmatmul.bf16.gmra.mxu0 %v288
  %v360 = vpop.f32.mrf.mxu0
  %v361 = vadd.f32 %v332, %v360
  %v362 = vpop.f32.mrf.mxu0
  %v363 = vadd.f32 %v334, %v362
  %364 = vmatmul.bf16.gmra.mxu0 %v291
  %v365 = vpop.f32.mrf.mxu0
  %v366 = vadd.f32 %v337, %v365
  %v367 = vpop.f32.mrf.mxu0
  %v368 = vadd.f32 %v339, %v367
  %369 = vmatmul.bf16.gmra.mxu0 %v294
  %v370 = vpop.f32.mrf.mxu0
  %v371 = vadd.f32 %v342, %v370
  %v372 = vpop.f32.mrf.mxu0
  %v373 = vadd.f32 %v344, %v372
  %374 = vdwg.mxu0
  %375 = vmatpush.bf16.msra.mxu0 0
  %376 = vmatpush.bf16.msra.mxu0 0
  %377 = vmatpush.bf16.msra.mxu0 0
  %378 = vmatpush.bf16.msra.mxu0 0
  %379 = vmatpush.bf16.msra.mxu0 0
  %380 = vmatpush.bf16.msra.mxu0 0
  %381 = vmatpush.bf16.msra.mxu0 %v225
  %382 = vmatpush.bf16.msra.mxu0 %v224
  %383 = vmatmul.bf16.gmra.mxu0 %v306
  %v384 = vpop.f32.mrf.mxu0
  %v385 = vadd.f32 %v356, %v384
  %v386 = vpop.f32.mrf.mxu0
  %v387 = vadd.f32 %v358, %v386
  %388 = vmatmul.bf16.gmra.mxu0 %v309
  %v389 = vpop.f32.mrf.mxu0
  %v390 = vadd.f32 %v361, %v389
  %v391 = vpop.f32.mrf.mxu0
  %v392 = vadd.f32 %v363, %v391
  %393 = vmatmul.bf16.gmra.mxu0 %v312
  %v394 = vpop.f32.mrf.mxu0
  %v395 = vadd.f32 %v366, %v394
  %v396 = vpop.f32.mrf.mxu0
  %v397 = vadd.f32 %v368, %v396
  %398 = vmatmul.bf16.gmra.mxu0 %v315
  %v399 = vpop.f32.mrf.mxu0
  %v400 = vadd.f32 %v371, %v399
  %v401 = vpop.f32.mrf.mxu0
  %v402 = vadd.f32 %v373, %v401
  %403 = vdwg.mxu0
  %v404 = vmax.f32 %v385, 0.0
  %v405 = vmax.f32 %v387, 0.0
  %v406 = vmax.f32 %v390, 0.0
  %v407 = vmax.f32 %v392, 0.0
  %v408 = vmax.f32 %v395, 0.0
  %v409 = vmax.f32 %v397, 0.0
  %v410 = vmax.f32 %v400, 0.0
  %v411 = vmax.f32 %v402, 0.0
  %v412 = vpack.c.bf16 %v404, %v404
  %v413 = vpack.c.bf16 %v405, %v405
  %v414 = vpack.c.bf16 %v406, %v406
  %v415 = vpack.c.bf16 %v407, %v407
  %v416 = vpack.c.bf16 %v408, %v408
  %v417 = vpack.c.bf16 %v409, %v409
  %v418 = vpack.c.bf16 %v410, %v410
  %v419 = vpack.c.bf16 %v411, %v411
  %vm420 = vcmask 257024
  %421 = vst.msk [vmem:[%s2] sm:$0xf] %vm420, %v412
  %422 = vst.msk [vmem:[%s2 + $0x4] sm:$0xf] %vm420, %v413
  %423 = vst.msk [vmem:[%s2 + $0x8] sm:$0xf] %vm420, %v414
  %424 = vst.msk [vmem:[%s2 + $0xc] sm:$0xf] %vm420, %v415
  %425 = vst.msk [vmem:[%s2 + $0x10] sm:$0xf] %vm420, %v416
  %426 = vst.msk [vmem:[%s2 + $0x14] sm:$0xf] %vm420, %v417
  %427 = vst.msk [vmem:[%s2 + $0x18] sm:$0xf] %vm420, %v418
  %428 = vst.msk [vmem:[%s2 + $0x1c] sm:$0xf] %vm420, %v419
  // Predicated region
  $region10: #{generator_forward.6} parent=0 // pred_check
    _
  $region11: #{generator_forward.6} parent=0 // pred_check_branch
    %430 = sbr.rel (0) target = $region13
  $region12: #{generator_forward.6} parent=0 // pred_region
    _
  $region13: #{generator_forward.6} parent=0 // pred_fallthru
    _
  // Predicated region
  $region14: #{generator_forward.6} parent=0 // pred_check
    _
  $region15: #{generator_forward.6} parent=0 // pred_check_branch
    %432 = sbr.rel (0) target = $region17
  $region16: #{generator_forward.6} parent=0 // pred_region
    _
  $region17: #{generator_forward.6} parent=0 // pred_fallthru
    _

// kernel: generator_forward.7
$region0: #{generator_forward.7}
  #allocation0 [shape = 'u32[]', space=smem, size = 0x4, offset = 0x4, fixed_abs, tag = 'smem constant byte address 0x4 - core index']
  #allocation1 [shape = 'u32[72,128]{1,0:T(1,128)}', space=vmem, size = 0x9000, scoped, tag = 'internal scratch']
  %s0 = inlined_call_operand.vmem [shape: bf16[16,128], index: 0, kind: input, shape index: {}]
  %s1 = inlined_call_operand.vmem [shape: bf16[32,144], index: 1, kind: input, shape index: {}]
  %s2 = inlined_call_operand.vmem [shape: bf16[32,128], index: 2, kind: output, shape index: {}]
  %s3 = sld [smem:[#allocation0]]
  $region18: #{generator_forward.7} parent=0
    _
  %s5 = ssub.s32 1, %s3
  %s6 = scalar_select 0, %s5, %s3
  // Predicated region
  $region2: #{generator_forward.7} parent=0 // pred_check
    _
  $region3: #{generator_forward.7} parent=0 // pred_check_branch
    %8 = sbr.rel (0) target = $region5
  $region4: #{generator_forward.7} parent=0 // pred_region
    _
  $region5: #{generator_forward.7} parent=0 // pred_fallthru
    _
  // Predicated region
  $region6: #{generator_forward.7} parent=0 // pred_check
    _
  $region7: #{generator_forward.7} parent=0 // pred_check_branch
    %10 = sbr.rel (0) target = $region9
  $region8: #{generator_forward.7} parent=0 // pred_region
    _
  $region9: #{generator_forward.7} parent=0 // pred_fallthru
    _
  %v14 = vld [vmem:[%s0] sm:$0xf]
  %v15 = vld [vmem:[%s0 + $0x4] sm:$0xf]
  %v16 = vlaneseq
  %v17 = vand.u32 %v16, 127
  %v18 = vand.u32 %v17, 7
  %v19 = vshra.s32 %v17, 3
  %v20 = vand.u32 %v19, 7
  %vm21 = vcmp.eq.s32.totalorder %v20, 0
  %vm22 = vcmp.eq.s32.totalorder %v20, 7
  %vm23 = vcmp.eq.s32.totalorder %v18, 0
  %vm24 = vcmp.eq.s32.totalorder %v18, 7
  %v27 = vunpack.c.l.b16 %v14
  %v28 = vunpack.c.l.b16 %v15
  %v29 = vpack.c.b16 %v28, %v27
  %30 = vrot.lane.b32.xlu0 %v29, 9
  %v31 = vpop.permute.xlu0 %30
  %vm32 = vcmask 72704
  %v35 = vsel %vm32, 0, %v31
  %vm37 = vmor %vm21, %vm23
  %vm38 = vmpackc.low %vm37, %vm37
  %v39 = vsel %vm38, 65537, 0
  %v40 = vperm.slane %v39, 0
  %v41 = vunpack.c.l.b16 %v40
  %v42 = vunpack.c.h.b16 %v40
  %v43 = vunpack.c.l.b16 0
  %v44 = vunpack.c.h.b16 0
  %vm45 = vcmp.ne.s32.totalorder %v41, %v43
  %vm46 = vcmp.ne.s32.totalorder %v42, %v44
  %vm47 = vmpackc.low %vm46, %vm45
  %v48 = vsel %vm47, 0, %v35
  %49 = vrot.lane.b32.xlu0 %v29, 8
  %v50 = vpop.permute.xlu0 %49
  %vm51 = vcmask 64512
  %v53 = vsel %vm51, 0, %v50
  %vm55 = vmpackc.low %vm21, %vm21
  %v56 = vsel %vm55, 65537, 0
  %v57 = vperm.slane %v56, 0
  %v58 = vunpack.c.l.b16 %v57
  %v59 = vunpack.c.h.b16 %v57
  %v60 = vunpack.c.l.b16 0
  %v61 = vunpack.c.h.b16 0
  %vm62 = vcmp.ne.s32.totalorder %v58, %v60
  %vm63 = vcmp.ne.s32.totalorder %v59, %v61
  %vm64 = vmpackc.low %vm63, %vm62
  %v65 = vsel %vm64, 0, %v53
  %66 = vrot.lane.b32.xlu0 %v29, 7
  %v67 = vpop.permute.xlu0 %66
  %vm68 = vcmask 56320
  %v70 = vsel %vm68, 0, %v67
  %vm72 = vmor %vm21, %vm24
  %vm73 = vmpackc.low %vm72, %vm72
  %v74 = vsel %vm73, 65537, 0
  %v75 = vperm.slane %v74, 0
  %v76 = vunpack.c.l.b16 %v75
  %v77 = vunpack.c.h.b16 %v75
  %v78 = vunpack.c.l.b16 0
  %v79 = vunpack.c.h.b16 0
  %vm80 = vcmp.ne.s32.totalorder %v76, %v78
  %vm81 = vcmp.ne.s32.totalorder %v77, %v79
  %vm82 = vmpackc.low %vm81, %vm80
  %v83 = vsel %vm82, 0, %v70
  %84 = vrot.lane.b32.xlu0 %v29, 1
  %v85 = vpop.permute.xlu0 %84
  %vm86 = vcmask 7168
  %v88 = vsel %vm86, 0, %v85
  %vm90 = vmpackc.low %vm23, %vm23
  %v91 = vsel %vm90, 65537, 0
  %v92 = vperm.slane %v91, 0
  %v93 = vunpack.c.l.b16 %v92
  %v94 = vunpack.c.h.b16 %v92
  %v95 = vunpack.c.l.b16 0
  %v96 = vunpack.c.h.b16 0
  %vm97 = vcmp.ne.s32.totalorder %v93, %v95
  %vm98 = vcmp.ne.s32.totalorder %v94, %v96
  %vm99 = vmpackc.low %vm98, %vm97
  %v100 = vsel %vm99, 0, %v88
  %101 = vrot.lane.b32.xlu0 %v29, 127
  %v102 = vpop.permute.xlu0 %101
  %vm103 = vcmask 1039360
  %v105 = vsel %vm103, %v102, 0
  %vm107 = vmpackc.low %vm24, %vm24
  %v108 = vsel %vm107, 65537, 0
  %v109 = vperm.slane %v108, 0
  %v110 = vunpack.c.l.b16 %v109
  %v111 = vunpack.c.h.b16 %v109
  %v112 = vunpack.c.l.b16 0
  %v113 = vunpack.c.h.b16 0
  %vm114 = vcmp.ne.s32.totalorder %v110, %v112
  %vm115 = vcmp.ne.s32.totalorder %v111, %v113
  %vm116 = vmpackc.low %vm115, %vm114
  %v117 = vsel %vm116, 0, %v105
  %118 = vrot.lane.b32.xlu0 %v29, 121
  %v119 = vpop.permute.xlu0 %118
  %vm120 = vcmask 990208
  %v122 = vsel %vm120, %v119, 0
  %vm124 = vmor %vm22, %vm23
  %vm125 = vmpackc.low %vm124, %vm124
  %v126 = vsel %vm125, 65537, 0
  %v127 = vperm.slane %v126, 0
  %v128 = vunpack.c.l.b16 %v127
  %v129 = vunpack.c.h.b16 %v127
  %v130 = vunpack.c.l.b16 0
  %v131 = vunpack.c.h.b16 0
  %vm132 = vcmp.ne.s32.totalorder %v128, %v130
  %vm133 = vcmp.ne.s32.totalorder %v129, %v131
  %vm134 = vmpackc.low %vm133, %vm132
  %v135 = vsel %vm134, 0, %v122
  %136 = vrot.lane.b32.xlu0 %v29, 120
  %v137 = vpop.permute.xlu0 %136
  %vm138 = vcmask 982016
  %v140 = vsel %vm138, %v137, 0
  %vm142 = vmpackc.low %vm22, %vm22
  %v143 = vsel %vm142, 65537, 0
  %v144 = vperm.slane %v143, 0
  %v145 = vunpack.c.l.b16 %v144
  %v146 = vunpack.c.h.b16 %v144
  %v147 = vunpack.c.l.b16 0
  %v148 = vunpack.c.h.b16 0
  %vm149 = vcmp.ne.s32.totalorder %v145, %v147
  %vm150 = vcmp.ne.s32.totalorder %v146, %v148
  %vm151 = vmpackc.low %vm150, %vm149
  %v152 = vsel %vm151, 0, %v140
  %153 = vrot.lane.b32.xlu0 %v29, 119
  %v154 = vpop.permute.xlu0 %153
  %vm155 = vcmask 973824
  %v157 = vsel %vm155, %v154, 0
  %vm159 = vmor %vm22, %vm24
  %vm160 = vmpackc.low %vm159, %vm159
  %v161 = vsel %vm160, 65537, 0
  %v162 = vperm.slane %v161, 0
  %v163 = vunpack.c.l.b16 %v162
  %v164 = vunpack.c.h.b16 %v162
  %v165 = vunpack.c.l.b16 0
  %v166 = vunpack.c.h.b16 0
  %vm167 = vcmp.ne.s32.totalorder %v163, %v165
  %vm168 = vcmp.ne.s32.totalorder %v164, %v166
  %vm169 = vmpackc.low %vm168, %vm167
  %v170 = vsel %vm169, 0, %v157
  %v172 = vld [vmem:[%s1] sm:$0xff]
  %v173 = vld [vmem:[%s1 + $0x8] sm:$0xff]
  %v174 = vld [vmem:[%s1 + $0x10] sm:$0xff]
  %v175 = vld [vmem:[%s1 + $0x18] sm:$0xff]
  %v180 = vunpack.c.l.b16 %v172
  %v181 = vunpack.c.h.b16 %v172
  %v182 = vunpack.c.l.b16 %v173
  %v183 = vunpack.c.h.b16 %v173
  %v184 = vunpack.c.l.b16 %v174
  %v185 = vunpack.c.h.b16 %v174
  %v186 = vunpack.c.l.b16 %v175
  %v187 = vunpack.c.h.b16 %v175
  %v188 = vpack.c.b16 %v182, %v180
  %v189 = vpack.c.b16 %v183, %v181
  %v190 = vpack.c.b16 %v186, %v184
  %v191 = vpack.c.b16 %v187, %v185
  %vm194 = vcmask 130048
  %v196 = vsel %vm194, %v189, 0
  %v199 = vsel %vm194, %v191, 0
  %201 = vmatpush.bf16.msra.mxu0 %v152
  %202 = vmatpush.bf16.msra.mxu0 %v135
  %203 = vmatpush.bf16.msra.mxu0 %v117
  %204 = vmatpush.bf16.msra.mxu0 %v29
  %205 = vmatpush.bf16.msra.mxu0 %v100
  %206 = vmatpush.bf16.msra.mxu0 %v83
  %207 = vmatpush.bf16.msra.mxu0 %v65
  %208 = vmatpush.bf16.msra.mxu0 %v48
  %209 = vmatmul.bf16.gmra.mxu0 %v188
  %v210 = vpop.f32.mrf.mxu0
  %v211 = vadd.f32 0.0, %v210
  %v212 = vpop.f32.mrf.mxu0
  %v213 = vadd.f32 0.0, %v212
  %214 = vmatmul.bf16.gmra.mxu0 %v190
  %v215 = vpop.f32.mrf.mxu0
  %v216 = vadd.f32 0.0, %v215
  %v217 = vpop.f32.mrf.mxu0
  %v218 = vadd.f32 0.0, %v217
  %219 = vdwg.mxu0
  %220 = vmatpush.bf16.msra.mxu0 0
  %221 = vmatpush.bf16.msra.mxu0 0
  %222 = vmatpush.bf16.msra.mxu0 0
  %223 = vmatpush.bf16.msra.mxu0 0
  %224 = vmatpush.bf16.msra.mxu0 0
  %225 = vmatpush.bf16.msra.mxu0 0
  %226 = vmatpush.bf16.msra.mxu0 0
  %227 = vmatpush.bf16.msra.mxu0 %v170
  %228 = vmatmul.bf16.gmra.mxu0 %v196
  %v229 = vpop.f32.mrf.mxu0
  %v230 = vadd.f32 %v211, %v229
  %v231 = vpop.f32.mrf.mxu0
  %v232 = vadd.f32 %v213, %v231
  %233 = vmatmul.bf16.gmra.mxu0 %v199
  %v234 = vpop.f32.mrf.mxu0
  %v235 = vadd.f32 %v216, %v234
  %v236 = vpop.f32.mrf.mxu0
  %v237 = vadd.f32 %v218, %v236
  %238 = vdwg.mxu0
  %v239 = vmax.f32 %v230, 0.0
  %v240 = vmax.f32 %v232, 0.0
  %v241 = vmax.f32 %v235, 0.0
  %v242 = vmax.f32 %v237, 0.0
  %v243 = vpack.c.bf16 %v239, %v239
  %v244 = vpack.c.bf16 %v240, %v240
  %v245 = vpack.c.bf16 %v241, %v241
  %v246 = vpack.c.bf16 %v242, %v242
  %247 = vst [vmem:[%s2] sm:$0xf] %v243
  %248 = vst [vmem:[%s2 + $0x4] sm:$0xf] %v244
  %249 = vst [vmem:[%s2 + $0x8] sm:$0xf] %v245
  %250 = vst [vmem:[%s2 + $0xc] sm:$0xf] %v246
  // Predicated region
  $region10: #{generator_forward.7} parent=0 // pred_check
    _
  $region11: #{generator_forward.7} parent=0 // pred_check_branch
    %252 = sbr.rel (0) target = $region13
  $region12: #{generator_forward.7} parent=0 // pred_region
    _
  $region13: #{generator_forward.7} parent=0 // pred_fallthru
    _
  // Predicated region
  $region14: #{generator_forward.7} parent=0 // pred_check
    _
  $region15: #{generator_forward.7} parent=0 // pred_check_branch
    %254 = sbr.rel (0) target = $region17
  $region16: #{generator_forward.7} parent=0 // pred_region
    _
  $region17: #{generator_forward.7} parent=0 // pred_fallthru
    _

// kernel: generator_forward.8
$region0: #{generator_forward.8}
  #allocation0 [shape = 'u32[]', space=smem, size = 0x4, offset = 0x4, fixed_abs, tag = 'smem constant byte address 0x4 - core index']
  #allocation1 [shape = 'u32[72,128]{1,0:T(1,128)}', space=vmem, size = 0x9000, scoped, tag = 'internal scratch']
  %s0 = inlined_call_operand.vmem [shape: bf16[8,512], index: 0, kind: input, shape index: {}]
  %s1 = inlined_call_operand.vmem [shape: bf16[16,72], index: 1, kind: input, shape index: {}]
  %s2 = inlined_call_operand.vmem [shape: bf16[16,512], index: 2, kind: output, shape index: {}]
  %s3 = sld [smem:[#allocation0]]
  $region18: #{generator_forward.8} parent=0
    _
  %s5 = ssub.s32 1, %s3
  %s6 = scalar_select 0, %s5, %s3
  // Predicated region
  $region2: #{generator_forward.8} parent=0 // pred_check
    _
  $region3: #{generator_forward.8} parent=0 // pred_check_branch
    %8 = sbr.rel (0) target = $region5
  $region4: #{generator_forward.8} parent=0 // pred_region
    _
  $region5: #{generator_forward.8} parent=0 // pred_fallthru
    _
  // Predicated region
  $region6: #{generator_forward.8} parent=0 // pred_check
    _
  $region7: #{generator_forward.8} parent=0 // pred_check_branch
    %10 = sbr.rel (0) target = $region9
  $region8: #{generator_forward.8} parent=0 // pred_region
    _
  $region9: #{generator_forward.8} parent=0 // pred_fallthru
    _
  %v14 = vld [vmem:[%s0] sm:$0xff]
  %v15 = vld [vmem:[%s0 + $0x8] sm:$0xff]
  %v16 = vlaneseq
  %v17 = vand.u32 %v16, 127
  %v18 = vadd.s32 %v17, 128
  %v19 = vadd.s32 %v17, 256
  %v20 = vadd.s32 %v17, 384
  %v21 = vand.u32 %v17, 15
  %v22 = vand.u32 %v18, 15
  %v23 = vand.u32 %v19, 15
  %v24 = vand.u32 %v20, 15
  %v25 = vshra.s32 %v17, 4
  %v26 = vshra.s32 %v18, 4
  %v27 = vshra.s32 %v19, 4
  %v28 = vshra.s32 %v20, 4
  %v29 = vand.u32 %v25, 15
  %v30 = vand.u32 %v26, 15
  %v31 = vand.u32 %v27, 15
  %v32 = vand.u32 %v28, 15
  %vm33 = vcmp.eq.s32.totalorder %v29, 0
  %vm34 = vcmp.eq.s32.totalorder %v30, 0
  %vm35 = vcmp.eq.s32.totalorder %v31, 0
  %vm36 = vcmp.eq.s32.totalorder %v32, 0
  %vm37 = vcmp.eq.s32.totalorder %v29, 15
  %vm38 = vcmp.eq.s32.totalorder %v30, 15
  %vm39 = vcmp.eq.s32.totalorder %v31, 15
  %vm40 = vcmp.eq.s32.totalorder %v32, 15
  %vm41 = vcmp.eq.s32.totalorder %v21, 0
  %vm42 = vcmp.eq.s32.totalorder %v22, 0
  %vm43 = vcmp.eq.s32.totalorder %v23, 0
  %vm44 = vcmp.eq.s32.totalorder %v24, 0
  %vm45 = vcmp.eq.s32.totalorder %v21, 15
  %vm46 = vcmp.eq.s32.totalorder %v22, 15
  %vm47 = vcmp.eq.s32.totalorder %v23, 15
  %vm48 = vcmp.eq.s32.totalorder %v24, 15
  %v51 = vunpack.c.l.b16 %v14
  %v52 = vunpack.c.h.b16 %v14
  %v53 = vunpack.c.l.b16 %v15
  %v54 = vunpack.c.h.b16 %v15
  %v55 = vpack.c.b16 %v51, %v51
  %v56 = vpack.c.b16 %v52, %v52
  %v57 = vpack.c.b16 %v53, %v53
  %v58 = vpack.c.b16 %v54, %v54
  %59 = vrot.lane.b32.xlu0 %v55, 17
  %v60 = vpop.permute.xlu0 %59
  %61 = vrot.lane.b32.xlu0 %v56, 17
  %v62 = vpop.permute.xlu0 %61
  %63 = vrot.lane.b32.xlu0 %v57, 17
  %v64 = vpop.permute.xlu0 %63
  %65 = vrot.lane.b32.xlu0 %v58, 17
  %v66 = vpop.permute.xlu0 %65
  %vm67 = vcmask 138240
  %v68 = vsel %vm67, %v60, %v62
  %v69 = vsel %vm67, %v62, %v64
  %v70 = vsel %vm67, %v64, %v66
  %vm74 = vcmask 138240
  %v77 = vsel %vm74, 0, %v60
  %vm79 = vmor %vm33, %vm41
  %vm80 = vmor %vm34, %vm42
  %vm81 = vmor %vm35, %vm43
  %vm82 = vmor %vm36, %vm44
  %vm83 = vmpackc.low %vm80, %vm79
  %vm84 = vmpackc.low %vm82, %vm81
  %v85 = vsel %vm83, 65537, 0
  %v86 = vsel %vm84, 65537, 0
  %v87 = vperm.slane %v85, 0
  %v88 = vperm.slane %v85, 4
  %v89 = vperm.slane %v86, 0
  %v90 = vperm.slane %v86, 4
  %v91 = vunpack.c.l.b16 %v87
  %v92 = vunpack.c.h.b16 %v87
  %v93 = vunpack.c.l.b16 0
  %v94 = vunpack.c.h.b16 0
  %vm95 = vcmp.ne.s32.totalorder %v91, %v93
  %vm96 = vcmp.ne.s32.totalorder %v92, %v94
  %vm97 = vmpackc.low %vm96, %vm95
  %v98 = vunpack.c.l.b16 %v88
  %v99 = vunpack.c.h.b16 %v88
  %v100 = vunpack.c.l.b16 0
  %v101 = vunpack.c.h.b16 0
  %vm102 = vcmp.ne.s32.totalorder %v98, %v100
  %vm103 = vcmp.ne.s32.totalorder %v99, %v101
  %vm104 = vmpackc.low %vm103, %vm102
  %v105 = vunpack.c.l.b16 %v89
  %v106 = vunpack.c.h.b16 %v89
  %v107 = vunpack.c.l.b16 0
  %v108 = vunpack.c.h.b16 0
  %vm109 = vcmp.ne.s32.totalorder %v105, %v107
  %vm110 = vcmp.ne.s32.totalorder %v106, %v108
  %vm111 = vmpackc.low %vm110, %vm109
  %v112 = vunpack.c.l.b16 %v90
  %v113 = vunpack.c.h.b16 %v90
  %v114 = vunpack.c.l.b16 0
  %v115 = vunpack.c.h.b16 0
  %vm116 = vcmp.ne.s32.totalorder %v112, %v114
  %vm117 = vcmp.ne.s32.totalorder %v113, %v115
  %vm118 = vmpackc.low %vm117, %vm116
  %v119 = vsel %vm97, 0, %v77
  %v120 = vsel %vm104, 0, %v68
  %v121 = vsel %vm111, 0, %v69
  %v122 = vsel %vm118, 0, %v70
  %123 = vrot.lane.b32.xlu0 %v55, 16
  %v124 = vpop.permute.xlu0 %123
  %125 = vrot.lane.b32.xlu0 %v56, 16
  %v126 = vpop.permute.xlu0 %125
  %127 = vrot.lane.b32.xlu0 %v57, 16
  %v128 = vpop.permute.xlu0 %127
  %129 = vrot.lane.b32.xlu0 %v58, 16
  %v130 = vpop.permute.xlu0 %129
  %vm131 = vcmask 130048
  %v132 = vsel %vm131, %v124, %v126
  %v133 = vsel %vm131, %v126, %v128
  %v134 = vsel %vm131, %v128, %v130
  %vm138 = vcmask 130048
  %v140 = vsel %vm138, 0, %v124
  %vm142 = vmpackc.low %vm34, %vm33
  %vm143 = vmpackc.low %vm36, %vm35
  %v144 = vsel %vm142, 65537, 0
  %v145 = vsel %vm143, 65537, 0
  %v146 = vperm.slane %v144, 0
  %v147 = vperm.slane %v144, 4
  %v148 = vperm.slane %v145, 0
  %v149 = vperm.slane %v145, 4
  %v150 = vunpack.c.l.b16 %v146
  %v151 = vunpack.c.h.b16 %v146
  %v152 = vunpack.c.l.b16 0
  %v153 = vunpack.c.h.b16 0
  %vm154 = vcmp.ne.s32.totalorder %v150, %v152
  %vm155 = vcmp.ne.s32.totalorder %v151, %v153
  %vm156 = vmpackc.low %vm155, %vm154
  %v157 = vunpack.c.l.b16 %v147
  %v158 = vunpack.c.h.b16 %v147
  %v159 = vunpack.c.l.b16 0
  %v160 = vunpack.c.h.b16 0
  %vm161 = vcmp.ne.s32.totalorder %v157, %v159
  %vm162 = vcmp.ne.s32.totalorder %v158, %v160
  %vm163 = vmpackc.low %vm162, %vm161
  %v164 = vunpack.c.l.b16 %v148
  %v165 = vunpack.c.h.b16 %v148
  %v166 = vunpack.c.l.b16 0
  %v167 = vunpack.c.h.b16 0
  %vm168 = vcmp.ne.s32.totalorder %v164, %v166
  %vm169 = vcmp.ne.s32.totalorder %v165, %v167
  %vm170 = vmpackc.low %vm169, %vm168
  %v171 = vunpack.c.l.b16 %v149
  %v172 = vunpack.c.h.b16 %v149
  %v173 = vunpack.c.l.b16 0
  %v174 = vunpack.c.h.b16 0
  %vm175 = vcmp.ne.s32.totalorder %v171, %v173
  %vm176 = vcmp.ne.s32.totalorder %v172, %v174
  %vm177 = vmpackc.low %vm176, %vm175
  %v178 = vsel %vm156, 0, %v140
  %v179 = vsel %vm163, 0, %v132
  %v180 = vsel %vm170, 0, %v133
  %v181 = vsel %vm177, 0, %v134
  %182 = vrot.lane.b32.xlu0 %v55, 15
  %v183 = vpop.permute.xlu0 %182
  %184 = vrot.lane.b32.xlu0 %v56, 15
  %v185 = vpop.permute.xlu0 %184
  %186 = vrot.lane.b32.xlu0 %v57, 15
  %v187 = vpop.permute.xlu0 %186
  %188 = vrot.lane.b32.xlu0 %v58, 15
  %v189 = vpop.permute.xlu0 %188
  %vm190 = vcmask 121856
  %v191 = vsel %vm190, %v183, %v185
  %v192 = vsel %vm190, %v185, %v187
  %v193 = vsel %vm190, %v187, %v189
  %vm197 = vcmask 121856
  %v199 = vsel %vm197, 0, %v183
  %vm201 = vmor %vm33, %vm45
  %vm202 = vmor %vm34, %vm46
  %vm203 = vmor %vm35, %vm47
  %vm204 = vmor %vm36, %vm48
  %vm205 = vmpackc.low %vm202, %vm201
  %vm206 = vmpackc.low %vm204, %vm203
  %v207 = vsel %vm205, 65537, 0
  %v208 = vsel %vm206, 65537, 0
  %v209 = vperm.slane %v207, 0
  %v210 = vperm.slane %v207, 4
  %v211 = vperm.slane %v208, 0
  %v212 = vperm.slane %v208, 4
  %v213 = vunpack.c.l.b16 %v209
  %v214 = vunpack.c.h.b16 %v209
  %v215 = vunpack.c.l.b16 0
  %v216 = vunpack.c.h.b16 0
  %vm217 = vcmp.ne.s32.totalorder %v213, %v215
  %vm218 = vcmp.ne.s32.totalorder %v214, %v216
  %vm219 = vmpackc.low %vm218, %vm217
  %v220 = vunpack.c.l.b16 %v210
  %v221 = vunpack.c.h.b16 %v210
  %v222 = vunpack.c.l.b16 0
  %v223 = vunpack.c.h.b16 0
  %vm224 = vcmp.ne.s32.totalorder %v220, %v222
  %vm225 = vcmp.ne.s32.totalorder %v221, %v223
  %vm226 = vmpackc.low %vm225, %vm224
  %v227 = vunpack.c.l.b16 %v211
  %v228 = vunpack.c.h.b16 %v211
  %v229 = vunpack.c.l.b16 0
  %v230 = vunpack.c.h.b16 0
  %vm231 = vcmp.ne.s32.totalorder %v227, %v229
  %vm232 = vcmp.ne.s32.totalorder %v228, %v230
  %vm233 = vmpackc.low %vm232, %vm231
  %v234 = vunpack.c.l.b16 %v212
  %v235 = vunpack.c.h.b16 %v212
  %v236 = vunpack.c.l.b16 0
  %v237 = vunpack.c.h.b16 0
  %vm238 = vcmp.ne.s32.totalorder %v234, %v236
  %vm239 = vcmp.ne.s32.totalorder %v235, %v237
  %vm240 = vmpackc.low %vm239, %vm238
  %v241 = vsel %vm219, 0, %v199
  %v242 = vsel %vm226, 0, %v191
  %v243 = vsel %vm233, 0, %v192
  %v244 = vsel %vm240, 0, %v193
  %245 = vrot.lane.b32.xlu0 %v55, 1
  %v246 = vpop.permute.xlu0 %245
  %247 = vrot.lane.b32.xlu0 %v56, 1
  %v248 = vpop.permute.xlu0 %247
  %249 = vrot.lane.b32.xlu0 %v57, 1
  %v250 = vpop.permute.xlu0 %249
  %251 = vrot.lane.b32.xlu0 %v58, 1
  %v252 = vpop.permute.xlu0 %251
  %vm253 = vcmask 7168
  %v254 = vsel %vm253, %v246, %v248
  %v255 = vsel %vm253, %v248, %v250
  %v256 = vsel %vm253, %v250, %v252
  %vm260 = vcmask 7168
  %v262 = vsel %vm260, 0, %v246
  %vm264 = vmpackc.low %vm42, %vm41
  %vm265 = vmpackc.low %vm44, %vm43
  %v266 = vsel %vm264, 65537, 0
  %v267 = vsel %vm265, 65537, 0
  %v268 = vperm.slane %v266, 0
  %v269 = vperm.slane %v266, 4
  %v270 = vperm.slane %v267, 0
  %v271 = vperm.slane %v267, 4
  %v272 = vunpack.c.l.b16 %v268
  %v273 = vunpack.c.h.b16 %v268
  %v274 = vunpack.c.l.b16 0
  %v275 = vunpack.c.h.b16 0
  %vm276 = vcmp.ne.s32.totalorder %v272, %v274
  %vm277 = vcmp.ne.s32.totalorder %v273, %v275
  %vm278 = vmpackc.low %vm277, %vm276
  %v279 = vunpack.c.l.b16 %v269
  %v280 = vunpack.c.h.b16 %v269
  %v281 = vunpack.c.l.b16 0
  %v282 = vunpack.c.h.b16 0
  %vm283 = vcmp.ne.s32.totalorder %v279, %v281
  %vm284 = vcmp.ne.s32.totalorder %v280, %v282
  %vm285 = vmpackc.low %vm284, %vm283
  %v286 = vunpack.c.l.b16 %v270
  %v287 = vunpack.c.h.b16 %v270
  %v288 = vunpack.c.l.b16 0
  %v289 = vunpack.c.h.b16 0
  %vm290 = vcmp.ne.s32.totalorder %v286, %v288
  %vm291 = vcmp.ne.s32.totalorder %v287, %v289
  %vm292 = vmpackc.low %vm291, %vm290
  %v293 = vunpack.c.l.b16 %v271
  %v294 = vunpack.c.h.b16 %v271
  %v295 = vunpack.c.l.b16 0
  %v296 = vunpack.c.h.b16 0
  %vm297 = vcmp.ne.s32.totalorder %v293, %v295
  %vm298 = vcmp.ne.s32.totalorder %v294, %v296
  %vm299 = vmpackc.low %vm298, %vm297
  %v300 = vsel %vm278, 0, %v262
  %v301 = vsel %vm285, 0, %v254
  %v302 = vsel %vm292, 0, %v255
  %v303 = vsel %vm299, 0, %v256
  %304 = vrot.lane.b32.xlu0 %v55, 127
  %v305 = vpop.permute.xlu0 %304
  %306 = vrot.lane.b32.xlu0 %v56, 127
  %v307 = vpop.permute.xlu0 %306
  %308 = vrot.lane.b32.xlu0 %v57, 127
  %v309 = vpop.permute.xlu0 %308
  %310 = vrot.lane.b32.xlu0 %v58, 127
  %v311 = vpop.permute.xlu0 %310
  %vm312 = vcmask 1039360
  %v313 = vsel %vm312, %v305, %v307
  %v314 = vsel %vm312, %v307, %v309
  %v315 = vsel %vm312, %v309, %v311
  %vm319 = vcmask 1039360
  %v321 = vsel %vm319, %v311, 0
  %vm323 = vmpackc.low %vm46, %vm45
  %vm324 = vmpackc.low %vm48, %vm47
  %v325 = vsel %vm323, 65537, 0
  %v326 = vsel %vm324, 65537, 0
  %v327 = vperm.slane %v325, 0
  %v328 = vperm.slane %v325, 4
  %v329 = vperm.slane %v326, 0
  %v330 = vperm.slane %v326, 4
  %v331 = vunpack.c.l.b16 %v327
  %v332 = vunpack.c.h.b16 %v327
  %v333 = vunpack.c.l.b16 0
  %v334 = vunpack.c.h.b16 0
  %vm335 = vcmp.ne.s32.totalorder %v331, %v333
  %vm336 = vcmp.ne.s32.totalorder %v332, %v334
  %vm337 = vmpackc.low %vm336, %vm335
  %v338 = vunpack.c.l.b16 %v328
  %v339 = vunpack.c.h.b16 %v328
  %v340 = vunpack.c.l.b16 0
  %v341 = vunpack.c.h.b16 0
  %vm342 = vcmp.ne.s32.totalorder %v338, %v340
  %vm343 = vcmp.ne.s32.totalorder %v339, %v341
  %vm344 = vmpackc.low %vm343, %vm342
  %v345 = vunpack.c.l.b16 %v329
  %v346 = vunpack.c.h.b16 %v329
  %v347 = vunpack.c.l.b16 0
  %v348 = vunpack.c.h.b16 0
  %vm349 = vcmp.ne.s32.totalorder %v345, %v347
  %vm350 = vcmp.ne.s32.totalorder %v346, %v348
  %vm351 = vmpackc.low %vm350, %vm349
  %v352 = vunpack.c.l.b16 %v330
  %v353 = vunpack.c.h.b16 %v330
  %v354 = vunpack.c.l.b16 0
  %v355 = vunpack.c.h.b16 0
  %vm356 = vcmp.ne.s32.totalorder %v352, %v354
  %vm357 = vcmp.ne.s32.totalorder %v353, %v355
  %vm358 = vmpackc.low %vm357, %vm356
  %v359 = vsel %vm337, 0, %v313
  %v360 = vsel %vm344, 0, %v314
  %v361 = vsel %vm351, 0, %v315
  %v362 = vsel %vm358, 0, %v321
  %363 = vrot.lane.b32.xlu0 %v55, 113
  %v364 = vpop.permute.xlu0 %363
  %365 = vrot.lane.b32.xlu0 %v56, 113
  %v366 = vpop.permute.xlu0 %365
  %367 = vrot.lane.b32.xlu0 %v57, 113
  %v368 = vpop.permute.xlu0 %367
  %369 = vrot.lane.b32.xlu0 %v58, 113
  %v370 = vpop.permute.xlu0 %369
  %vm371 = vcmask 924672
  %v372 = vsel %vm371, %v364, %v366
  %v373 = vsel %vm371, %v366, %v368
  %v374 = vsel %vm371, %v368, %v370
  %vm378 = vcmask 924672
  %v380 = vsel %vm378, %v370, 0
  %vm382 = vmor %vm37, %vm41
  %vm383 = vmor %vm38, %vm42
  %vm384 = vmor %vm39, %vm43
  %vm385 = vmor %vm40, %vm44
  %vm386 = vmpackc.low %vm383, %vm382
  %vm387 = vmpackc.low %vm385, %vm384
  %v388 = vsel %vm386, 65537, 0
  %v389 = vsel %vm387, 65537, 0
  %v390 = vperm.slane %v388, 0
  %v391 = vperm.slane %v388, 4
  %v392 = vperm.slane %v389, 0
  %v393 = vperm.slane %v389, 4
  %v394 = vunpack.c.l.b16 %v390
  %v395 = vunpack.c.h.b16 %v390
  %v396 = vunpack.c.l.b16 0
  %v397 = vunpack.c.h.b16 0
  %vm398 = vcmp.ne.s32.totalorder %v394, %v396
  %vm399 = vcmp.ne.s32.totalorder %v395, %v397
  %vm400 = vmpackc.low %vm399, %vm398
  %v401 = vunpack.c.l.b16 %v391
  %v402 = vunpack.c.h.b16 %v391
  %v403 = vunpack.c.l.b16 0
  %v404 = vunpack.c.h.b16 0
  %vm405 = vcmp.ne.s32.totalorder %v401, %v403
  %vm406 = vcmp.ne.s32.totalorder %v402, %v404
  %vm407 = vmpackc.low %vm406, %vm405
  %v408 = vunpack.c.l.b16 %v392
  %v409 = vunpack.c.h.b16 %v392
  %v410 = vunpack.c.l.b16 0
  %v411 = vunpack.c.h.b16 0
  %vm412 = vcmp.ne.s32.totalorder %v408, %v410
  %vm413 = vcmp.ne.s32.totalorder %v409, %v411
  %vm414 = vmpackc.low %vm413, %vm412
  %v415 = vunpack.c.l.b16 %v393
  %v416 = vunpack.c.h.b16 %v393
  %v417 = vunpack.c.l.b16 0
  %v418 = vunpack.c.h.b16 0
  %vm419 = vcmp.ne.s32.totalorder %v415, %v417
  %vm420 = vcmp.ne.s32.totalorder %v416, %v418
  %vm421 = vmpackc.low %vm420, %vm419
  %v422 = vsel %vm400, 0, %v372
  %v423 = vsel %vm407, 0, %v373
  %v424 = vsel %vm414, 0, %v374
  %v425 = vsel %vm421, 0, %v380
  %426 = vrot.lane.b32.xlu0 %v55, 112
  %v427 = vpop.permute.xlu0 %426
  %428 = vrot.lane.b32.xlu0 %v56, 112
  %v429 = vpop.permute.xlu0 %428
  %430 = vrot.lane.b32.xlu0 %v57, 112
  %v431 = vpop.permute.xlu0 %430
  %432 = vrot.lane.b32.xlu0 %v58, 112
  %v433 = vpop.permute.xlu0 %432
  %vm434 = vcmask 916480
  %v435 = vsel %vm434, %v427, %v429
  %v436 = vsel %vm434, %v429, %v431
  %v437 = vsel %vm434, %v431, %v433
  %vm441 = vcmask 916480
  %v443 = vsel %vm441, %v433, 0
  %vm445 = vmpackc.low %vm38, %vm37
  %vm446 = vmpackc.low %vm40, %vm39
  %v447 = vsel %vm445, 65537, 0
  %v448 = vsel %vm446, 65537, 0
  %v449 = vperm.slane %v447, 0
  %v450 = vperm.slane %v447, 4
  %v451 = vperm.slane %v448, 0
  %v452 = vperm.slane %v448, 4
  %v453 = vunpack.c.l.b16 %v449
  %v454 = vunpack.c.h.b16 %v449
  %v455 = vunpack.c.l.b16 0
  %v456 = vunpack.c.h.b16 0
  %vm457 = vcmp.ne.s32.totalorder %v453, %v455
  %vm458 = vcmp.ne.s32.totalorder %v454, %v456
  %vm459 = vmpackc.low %vm458, %vm457
  %v460 = vunpack.c.l.b16 %v450
  %v461 = vunpack.c.h.b16 %v450
  %v462 = vunpack.c.l.b16 0
  %v463 = vunpack.c.h.b16 0
  %vm464 = vcmp.ne.s32.totalorder %v460, %v462
  %vm465 = vcmp.ne.s32.totalorder %v461, %v463
  %vm466 = vmpackc.low %vm465, %vm464
  %v467 = vunpack.c.l.b16 %v451
  %v468 = vunpack.c.h.b16 %v451
  %v469 = vunpack.c.l.b16 0
  %v470 = vunpack.c.h.b16 0
  %vm471 = vcmp.ne.s32.totalorder %v467, %v469
  %vm472 = vcmp.ne.s32.totalorder %v468, %v470
  %vm473 = vmpackc.low %vm472, %vm471
  %v474 = vunpack.c.l.b16 %v452
  %v475 = vunpack.c.h.b16 %v452
  %v476 = vunpack.c.l.b16 0
  %v477 = vunpack.c.h.b16 0
  %vm478 = vcmp.ne.s32.totalorder %v474, %v476
  %vm479 = vcmp.ne.s32.totalorder %v475, %v477
  %vm480 = vmpackc.low %vm479, %vm478
  %v481 = vsel %vm459, 0, %v435
  %v482 = vsel %vm466, 0, %v436
  %v483 = vsel %vm473, 0, %v437
  %v484 = vsel %vm480, 0, %v443
  %485 = vrot.lane.b32.xlu0 %v55, 111
  %v486 = vpop.permute.xlu0 %485
  %487 = vrot.lane.b32.xlu0 %v56, 111
  %v488 = vpop.permute.xlu0 %487
  %489 = vrot.lane.b32.xlu0 %v57, 111
  %v490 = vpop.permute.xlu0 %489
  %491 = vrot.lane.b32.xlu0 %v58, 111
  %v492 = vpop.permute.xlu0 %491
  %vm493 = vcmask 908288
  %v494 = vsel %vm493, %v486, %v488
  %v495 = vsel %vm493, %v488, %v490
  %v496 = vsel %vm493, %v490, %v492
  %vm500 = vcmask 908288
  %v502 = vsel %vm500, %v492, 0
  %vm504 = vmor %vm37, %vm45
  %vm505 = vmor %vm38, %vm46
  %vm506 = vmor %vm39, %vm47
  %vm507 = vmor %vm40, %vm48
  %vm508 = vmpackc.low %vm505, %vm504
  %vm509 = vmpackc.low %vm507, %vm506
  %v510 = vsel %vm508, 65537, 0
  %v511 = vsel %vm509, 65537, 0
  %v512 = vperm.slane %v510, 0
  %v513 = vperm.slane %v510, 4
  %v514 = vperm.slane %v511, 0
  %v515 = vperm.slane %v511, 4
  %v516 = vunpack.c.l.b16 %v512
  %v517 = vunpack.c.h.b16 %v512
  %v518 = vunpack.c.l.b16 0
  %v519 = vunpack.c.h.b16 0
  %vm520 = vcmp.ne.s32.totalorder %v516, %v518
  %vm521 = vcmp.ne.s32.totalorder %v517, %v519
  %vm522 = vmpackc.low %vm521, %vm520
  %v523 = vunpack.c.l.b16 %v513
  %v524 = vunpack.c.h.b16 %v513
  %v525 = vunpack.c.l.b16 0
  %v526 = vunpack.c.h.b16 0
  %vm527 = vcmp.ne.s32.totalorder %v523, %v525
  %vm528 = vcmp.ne.s32.totalorder %v524, %v526
  %vm529 = vmpackc.low %vm528, %vm527
  %v530 = vunpack.c.l.b16 %v514
  %v531 = vunpack.c.h.b16 %v514
  %v532 = vunpack.c.l.b16 0
  %v533 = vunpack.c.h.b16 0
  %vm534 = vcmp.ne.s32.totalorder %v530, %v532
  %vm535 = vcmp.ne.s32.totalorder %v531, %v533
  %vm536 = vmpackc.low %vm535, %vm534
  %v537 = vunpack.c.l.b16 %v515
  %v538 = vunpack.c.h.b16 %v515
  %v539 = vunpack.c.l.b16 0
  %v540 = vunpack.c.h.b16 0
  %vm541 = vcmp.ne.s32.totalorder %v537, %v539
  %vm542 = vcmp.ne.s32.totalorder %v538, %v540
  %vm543 = vmpackc.low %vm542, %vm541
  %v544 = vsel %vm522, 0, %v494
  %v545 = vsel %vm529, 0, %v495
  %v546 = vsel %vm536, 0, %v496
  %v547 = vsel %vm543, 0, %v502
  %v552 = vrot.slane %v178, 4
  %v553 = vrot.slane %v179, 4
  %v554 = vrot.slane %v180, 4
  %v555 = vrot.slane %v181, 4
  %v560 = vrot.slane %v300, 4
  %v561 = vrot.slane %v301, 4
  %v562 = vrot.slane %v302, 4
  %v563 = vrot.slane %v303, 4
  %v568 = vrot.slane %v359, 4
  %v569 = vrot.slane %v360, 4
  %v570 = vrot.slane %v361, 4
  %v571 = vrot.slane %v362, 4
  %v576 = vrot.slane %v481, 4
  %v577 = vrot.slane %v482, 4
  %v578 = vrot.slane %v483, 4
  %v579 = vrot.slane %v484, 4
  %vm580 = vcmask 1043456
  %v583 = vsel %vm580, %v119, %v552
  %v587 = vsel %vm580, %v120, %v553
  %v591 = vsel %vm580, %v121, %v554
  %v595 = vsel %vm580, %v122, %v555
  %v599 = vsel %vm580, %v241, %v560
  %v603 = vsel %vm580, %v242, %v561
  %v607 = vsel %vm580, %v243, %v562
  %v611 = vsel %vm580, %v244, %v563
  %v615 = vsel %vm580, %v55, %v568
  %v619 = vsel %vm580, %v56, %v569
  %v623 = vsel %vm580, %v57, %v570
  %v627 = vsel %vm580, %v58, %v571
  %v631 = vsel %vm580, %v422, %v576
  %v635 = vsel %vm580, %v423, %v577
  %v639 = vsel %vm580, %v424, %v578
  %v643 = vsel %vm580, %v425, %v579
  %v645 = vld [vmem:[%s1] sm:$0xf]
  %v646 = vld [vmem:[%s1 + $0x4] sm:$0xf]
  %v649 = vunpack.c.l.b16 %v645
  %v650 = vunpack.c.l.b16 %v646
  %v651 = vpack.c.b16 %v650, %v649
  %vm652 = vcmask 588800
  %v654 = vsel %vm652, %v651, 0
  %v657 = vsel %vm580, %v544, 0
  %v660 = vsel %vm580, %v545, 0
  %v663 = vsel %vm580, %v546, 0
  %v666 = vsel %vm580, %v547, 0
  %668 = vmatpush.bf16.msra.mxu0 0
  %669 = vmatpush.bf16.msra.mxu0 0
  %670 = vmatpush.bf16.msra.mxu0 0
  %671 = vmatpush.bf16.msra.mxu0 %v657
  %672 = vmatpush.bf16.msra.mxu0 %v631
  %673 = vmatpush.bf16.msra.mxu0 %v615
  %674 = vmatpush.bf16.msra.mxu0 %v599
  %675 = vmatpush.bf16.msra.mxu0 %v583
  %676 = vmatmul.bf16.gmra.mxu0 %v654
  %v677 = vpop.f32.mrf.mxu0
  %v678 = vadd.f32 0.0, %v677
  %v679 = vpop.f32.mrf.mxu0
  %v680 = vadd.f32 0.0, %v679
  %681 = vdwg.mxu0
  %682 = vmatpush.bf16.msra.mxu0 0
  %683 = vmatpush.bf16.msra.mxu0 0
  %684 = vmatpush.bf16.msra.mxu0 0
  %685 = vmatpush.bf16.msra.mxu0 %v660
  %686 = vmatpush.bf16.msra.mxu0 %v635
  %687 = vmatpush.bf16.msra.mxu0 %v619
  %688 = vmatpush.bf16.msra.mxu0 %v603
  %689 = vmatpush.bf16.msra.mxu0 %v587
  %690 = vmatmul.bf16.gmra.mxu0 %v654
  %v691 = vpop.f32.mrf.mxu0
  %v692 = vadd.f32 0.0, %v691
  %v693 = vpop.f32.mrf.mxu0
  %v694 = vadd.f32 0.0, %v693
  %695 = vdwg.mxu0
  %696 = vmatpush.bf16.msra.mxu0 0
  %697 = vmatpush.bf16.msra.mxu0 0
  %698 = vmatpush.bf16.msra.mxu0 0
  %699 = vmatpush.bf16.msra.mxu0 %v663
  %700 = vmatpush.bf16.msra.mxu0 %v639
  %701 = vmatpush.bf16.msra.mxu0 %v623
  %702 = vmatpush.bf16.msra.mxu0 %v607
  %703 = vmatpush.bf16.msra.mxu0 %v591
  %704 = vmatmul.bf16.gmra.mxu0 %v654
  %v705 = vpop.f32.mrf.mxu0
  %v706 = vadd.f32 0.0, %v705
  %v707 = vpop.f32.mrf.mxu0
  %v708 = vadd.f32 0.0, %v707
  %709 = vdwg.mxu0
  %710 = vmatpush.bf16.msra.mxu0 0
  %711 = vmatpush.bf16.msra.mxu0 0
  %712 = vmatpush.bf16.msra.mxu0 0
  %713 = vmatpush.bf16.msra.mxu0 %v666
  %714 = vmatpush.bf16.msra.mxu0 %v643
  %715 = vmatpush.bf16.msra.mxu0 %v627
  %716 = vmatpush.bf16.msra.mxu0 %v611
  %717 = vmatpush.bf16.msra.mxu0 %v595
  %718 = vmatmul.bf16.gmra.mxu0 %v654
  %v719 = vpop.f32.mrf.mxu0
  %v720 = vadd.f32 0.0, %v719
  %v721 = vpop.f32.mrf.mxu0
  %v722 = vadd.f32 0.0, %v721
  %723 = vdwg.mxu0
  %v724 = vmax.f32 %v678, 0.0
  %v725 = vmax.f32 %v692, 0.0
  %v726 = vmax.f32 %v706, 0.0
  %v727 = vmax.f32 %v720, 0.0
  %v728 = vmax.f32 %v680, 0.0
  %v729 = vmax.f32 %v694, 0.0
  %v730 = vmax.f32 %v708, 0.0
  %v731 = vmax.f32 %v722, 0.0
  %v732 = vpack.c.bf16 %v725, %v724
  %v733 = vpack.c.bf16 %v727, %v726
  %v734 = vpack.c.bf16 %v729, %v728
  %v735 = vpack.c.bf16 %v731, %v730
  %736 = vst [vmem:[%s2] sm:$0xff] %v732
  %737 = vst [vmem:[%s2 + $0x8] sm:$0xff] %v733
  %738 = vst [vmem:[%s2 + $0x10] sm:$0xff] %v734
  %739 = vst [vmem:[%s2 + $0x18] sm:$0xff] %v735
  // Predicated region
  $region10: #{generator_forward.8} parent=0 // pred_check
    _
  $region11: #{generator_forward.8} parent=0 // pred_check_branch
    %741 = sbr.rel (0) target = $region13
  $region12: #{generator_forward.8} parent=0 // pred_region
    _
  $region13: #{generator_forward.8} parent=0 // pred_fallthru
    _
  // Predicated region
  $region14: #{generator_forward.8} parent=0 // pred_check
    _
  $region15: #{generator_forward.8} parent=0 // pred_check_branch
    %743 = sbr.rel (0) target = $region17
  $region16: #{generator_forward.8} parent=0 // pred_region
    _
  $region17: #{generator_forward.8} parent=0 // pred_fallthru
    _

// kernel: generator_forward.9
$region0: #{generator_forward.9}
  #allocation0 [shape = 'u32[]', space=smem, size = 0x4, offset = 0x4, fixed_abs, tag = 'smem constant byte address 0x4 - core index']
  #allocation1 [shape = 'u32[72,128]{1,0:T(1,128)}', space=vmem, size = 0x9000, scoped, tag = 'internal scratch']
  %s0 = inlined_call_operand.vmem [shape: bf16[4,2048], index: 0, kind: input, shape index: {}]
  %s1 = inlined_call_operand.vmem [shape: bf16[12,36], index: 1, kind: input, shape index: {}]
  %s2 = inlined_call_operand.vmem [shape: f32[12,2048], index: 2, kind: output, shape index: {}]
  %s3 = sld [smem:[#allocation0]]
  $region18: #{generator_forward.9} parent=0
    _
  %s5 = ssub.s32 1, %s3
  %s6 = scalar_select 0, %s5, %s3
  // Predicated region
  $region2: #{generator_forward.9} parent=0 // pred_check
    _
  $region3: #{generator_forward.9} parent=0 // pred_check_branch
    %8 = sbr.rel (0) target = $region5
  $region4: #{generator_forward.9} parent=0 // pred_region
    _
  $region5: #{generator_forward.9} parent=0 // pred_fallthru
    _
  // Predicated region
  $region6: #{generator_forward.9} parent=0 // pred_check
    _
  $region7: #{generator_forward.9} parent=0 // pred_check_branch
    %10 = sbr.rel (0) target = $region9
  $region8: #{generator_forward.9} parent=0 // pred_region
    _
  $region9: #{generator_forward.9} parent=0 // pred_fallthru
    _
  %v14 = vld [vmem:[%s0] sm:$0xff]
  %v15 = vld [vmem:[%s0 + $0x8] sm:$0xff]
  %v16 = vld [vmem:[%s0 + $0x10] sm:$0xff]
  %v17 = vld [vmem:[%s0 + $0x18] sm:$0xff]
  %v18 = vlaneseq
  %v19 = vand.u32 %v18, 127
  %v20 = vadd.s32 %v19, 128
  %v21 = vadd.s32 %v19, 256
  %v22 = vadd.s32 %v19, 384
  %v23 = vadd.s32 %v19, 512
  %v24 = vadd.s32 %v19, 640
  %v25 = vadd.s32 %v19, 768
  %v26 = vadd.s32 %v19, 896
  %v27 = vadd.s32 %v19, 1024
  %v28 = vadd.s32 %v19, 1152
  %v29 = vadd.s32 %v19, 1280
  %v30 = vadd.s32 %v19, 1408
  %v31 = vadd.s32 %v19, 1536
  %v32 = vadd.s32 %v19, 1664
  %v33 = vadd.s32 %v19, 1792
  %v34 = vadd.s32 %v19, 1920
  %v35 = vand.u32 %v19, 31
  %v36 = vand.u32 %v20, 31
  %v37 = vand.u32 %v21, 31
  %v38 = vand.u32 %v22, 31
  %v39 = vand.u32 %v23, 31
  %v40 = vand.u32 %v24, 31
  %v41 = vand.u32 %v25, 31
  %v42 = vand.u32 %v26, 31
  %v43 = vand.u32 %v27, 31
  %v44 = vand.u32 %v28, 31
  %v45 = vand.u32 %v29, 31
  %v46 = vand.u32 %v30, 31
  %v47 = vand.u32 %v31, 31
  %v48 = vand.u32 %v32, 31
  %v49 = vand.u32 %v33, 31
  %v50 = vand.u32 %v34, 31
  %v51 = vshra.s32 %v19, 5
  %v52 = vshra.s32 %v20, 5
  %v53 = vshra.s32 %v21, 5
  %v54 = vshra.s32 %v22, 5
  %v55 = vshra.s32 %v23, 5
  %v56 = vshra.s32 %v24, 5
  %v57 = vshra.s32 %v25, 5
  %v58 = vshra.s32 %v26, 5
  %v59 = vshra.s32 %v27, 5
  %v60 = vshra.s32 %v28, 5
  %v61 = vshra.s32 %v29, 5
  %v62 = vshra.s32 %v30, 5
  %v63 = vshra.s32 %v31, 5
  %v64 = vshra.s32 %v32, 5
  %v65 = vshra.s32 %v33, 5
  %v66 = vshra.s32 %v34, 5
  %v67 = vand.u32 %v51, 31
  %v68 = vand.u32 %v52, 31
  %v69 = vand.u32 %v53, 31
  %v70 = vand.u32 %v54, 31
  %v71 = vand.u32 %v55, 31
  %v72 = vand.u32 %v56, 31
  %v73 = vand.u32 %v57, 31
  %v74 = vand.u32 %v58, 31
  %v75 = vand.u32 %v59, 31
  %v76 = vand.u32 %v60, 31
  %v77 = vand.u32 %v61, 31
  %v78 = vand.u32 %v62, 31
  %v79 = vand.u32 %v63, 31
  %v80 = vand.u32 %v64, 31
  %v81 = vand.u32 %v65, 31
  %v82 = vand.u32 %v66, 31
  %vm83 = vcmp.eq.s32.totalorder %v67, 0
  %vm84 = vcmp.eq.s32.totalorder %v68, 0
  %vm85 = vcmp.eq.s32.totalorder %v69, 0
  %vm86 = vcmp.eq.s32.totalorder %v70, 0
  %vm87 = vcmp.eq.s32.totalorder %v71, 0
  %vm88 = vcmp.eq.s32.totalorder %v72, 0
  %vm89 = vcmp.eq.s32.totalorder %v73, 0
  %vm90 = vcmp.eq.s32.totalorder %v74, 0
  %vm91 = vcmp.eq.s32.totalorder %v75, 0
  %vm92 = vcmp.eq.s32.totalorder %v76, 0
  %vm93 = vcmp.eq.s32.totalorder %v77, 0
  %vm94 = vcmp.eq.s32.totalorder %v78, 0
  %vm95 = vcmp.eq.s32.totalorder %v79, 0
  %vm96 = vcmp.eq.s32.totalorder %v80, 0
  %vm97 = vcmp.eq.s32.totalorder %v81, 0
  %vm98 = vcmp.eq.s32.totalorder %v82, 0
  %vm99 = vcmp.eq.s32.totalorder %v67, 31
  %vm100 = vcmp.eq.s32.totalorder %v68, 31
  %vm101 = vcmp.eq.s32.totalorder %v69, 31
  %vm102 = vcmp.eq.s32.totalorder %v70, 31
  %vm103 = vcmp.eq.s32.totalorder %v71, 31
  %vm104 = vcmp.eq.s32.totalorder %v72, 31
  %vm105 = vcmp.eq.s32.totalorder %v73, 31
  %vm106 = vcmp.eq.s32.totalorder %v74, 31
  %vm107 = vcmp.eq.s32.totalorder %v75, 31
  %vm108 = vcmp.eq.s32.totalorder %v76, 31
  %vm109 = vcmp.eq.s32.totalorder %v77, 31
  %vm110 = vcmp.eq.s32.totalorder %v78, 31
  %vm111 = vcmp.eq.s32.totalorder %v79, 31
  %vm112 = vcmp.eq.s32.totalorder %v80, 31
  %vm113 = vcmp.eq.s32.totalorder %v81, 31
  %vm114 = vcmp.eq.s32.totalorder %v82, 31
  %vm115 = vcmp.eq.s32.totalorder %v35, 0
  %vm116 = vcmp.eq.s32.totalorder %v36, 0
  %vm117 = vcmp.eq.s32.totalorder %v37, 0
  %vm118 = vcmp.eq.s32.totalorder %v38, 0
  %vm119 = vcmp.eq.s32.totalorder %v39, 0
  %vm120 = vcmp.eq.s32.totalorder %v40, 0
  %vm121 = vcmp.eq.s32.totalorder %v41, 0
  %vm122 = vcmp.eq.s32.totalorder %v42, 0
  %vm123 = vcmp.eq.s32.totalorder %v43, 0
  %vm124 = vcmp.eq.s32.totalorder %v44, 0
  %vm125 = vcmp.eq.s32.totalorder %v45, 0
  %vm126 = vcmp.eq.s32.totalorder %v46, 0
  %vm127 = vcmp.eq.s32.totalorder %v47, 0
  %vm128 = vcmp.eq.s32.totalorder %v48, 0
  %vm129 = vcmp.eq.s32.totalorder %v49, 0
  %vm130 = vcmp.eq.s32.totalorder %v50, 0
  %vm131 = vcmp.eq.s32.totalorder %v35, 31
  %vm132 = vcmp.eq.s32.totalorder %v36, 31
  %vm133 = vcmp.eq.s32.totalorder %v37, 31
  %vm134 = vcmp.eq.s32.totalorder %v38, 31
  %vm135 = vcmp.eq.s32.totalorder %v39, 31
  %vm136 = vcmp.eq.s32.totalorder %v40, 31
  %vm137 = vcmp.eq.s32.totalorder %v41, 31
  %vm138 = vcmp.eq.s32.totalorder %v42, 31
  %vm139 = vcmp.eq.s32.totalorder %v43, 31
  %vm140 = vcmp.eq.s32.totalorder %v44, 31
  %vm141 = vcmp.eq.s32.totalorder %v45, 31
  %vm142 = vcmp.eq.s32.totalorder %v46, 31
  %vm143 = vcmp.eq.s32.totalorder %v47, 31
  %vm144 = vcmp.eq.s32.totalorder %v48, 31
  %vm145 = vcmp.eq.s32.totalorder %v49, 31
  %vm146 = vcmp.eq.s32.totalorder %v50, 31
  %148 = vst [vmem:[#allocation1] ss:$4 sm:$0xff] %v14
  %s150 = scalar_lea.vmem [#allocation1], 32
  %151 = vst [vmem:[%s150] ss:$4 sm:$0xff] %v15
  %v152 = vld.sshfl [vmem:[#allocation1] sm:$0xff pattern:$0x73625140]
  %v154 = vld.sshfl [vmem:[#allocation1 + $0x8] sm:$0xff pattern:$0x73625140]
  %v156 = vld.sshfl [vmem:[#allocation1 + $0x10] sm:$0xff pattern:$0x73625140]
  %v158 = vld.sshfl [vmem:[#allocation1 + $0x18] sm:$0xff pattern:$0x73625140]
  %v160 = vld.sshfl [vmem:[#allocation1 + $0x20] sm:$0xff pattern:$0x73625140]
  %v162 = vld.sshfl [vmem:[#allocation1 + $0x28] sm:$0xff pattern:$0x73625140]
  %v164 = vld.sshfl [vmem:[#allocation1 + $0x30] sm:$0xff pattern:$0x73625140]
  %v166 = vld.sshfl [vmem:[#allocation1 + $0x38] sm:$0xff pattern:$0x73625140]
  %169 = vst [vmem:[#allocation1] ss:$4 sm:$0xff] %v16
  %171 = vst [vmem:[%s150] ss:$4 sm:$0xff] %v17
  %v172 = vld.sshfl [vmem:[#allocation1] sm:$0xff pattern:$0x73625140]
  %v174 = vld.sshfl [vmem:[#allocation1 + $0x8] sm:$0xff pattern:$0x73625140]
  %v176 = vld.sshfl [vmem:[#allocation1 + $0x10] sm:$0xff pattern:$0x73625140]
  %v178 = vld.sshfl [vmem:[#allocation1 + $0x18] sm:$0xff pattern:$0x73625140]
  %v180 = vld.sshfl [vmem:[#allocation1 + $0x20] sm:$0xff pattern:$0x73625140]
  %v182 = vld.sshfl [vmem:[#allocation1 + $0x28] sm:$0xff pattern:$0x73625140]
  %v184 = vld.sshfl [vmem:[#allocation1 + $0x30] sm:$0xff pattern:$0x73625140]
  %v186 = vld.sshfl [vmem:[#allocation1 + $0x38] sm:$0xff pattern:$0x73625140]
  %188 = vrot.lane.b32.xlu0 %v152, 33
  %v189 = vpop.permute.xlu0 %188
  %190 = vrot.lane.b32.xlu0 %v154, 33
  %v191 = vpop.permute.xlu0 %190
  %192 = vrot.lane.b32.xlu0 %v156, 33
  %v193 = vpop.permute.xlu0 %192
  %194 = vrot.lane.b32.xlu0 %v158, 33
  %v195 = vpop.permute.xlu0 %194
  %196 = vrot.lane.b32.xlu0 %v160, 33
  %v197 = vpop.permute.xlu0 %196
  %198 = vrot.lane.b32.xlu0 %v162, 33
  %v199 = vpop.permute.xlu0 %198
  %200 = vrot.lane.b32.xlu0 %v164, 33
  %v201 = vpop.permute.xlu0 %200
  %202 = vrot.lane.b32.xlu0 %v166, 33
  %v203 = vpop.permute.xlu0 %202
  %204 = vrot.lane.b32.xlu0 %v172, 33
  %v205 = vpop.permute.xlu0 %204
  %206 = vrot.lane.b32.xlu0 %v174, 33
  %v207 = vpop.permute.xlu0 %206
  %208 = vrot.lane.b32.xlu0 %v176, 33
  %v209 = vpop.permute.xlu0 %208
  %210 = vrot.lane.b32.xlu0 %v178, 33
  %v211 = vpop.permute.xlu0 %210
  %212 = vrot.lane.b32.xlu0 %v180, 33
  %v213 = vpop.permute.xlu0 %212
  %214 = vrot.lane.b32.xlu0 %v182, 33
  %v215 = vpop.permute.xlu0 %214
  %216 = vrot.lane.b32.xlu0 %v184, 33
  %v217 = vpop.permute.xlu0 %216
  %218 = vrot.lane.b32.xlu0 %v186, 33
  %v219 = vpop.permute.xlu0 %218
  %vm220 = vcmask 269312
  %v221 = vsel %vm220, %v189, %v191
  %v222 = vsel %vm220, %v191, %v193
  %v223 = vsel %vm220, %v193, %v195
  %v224 = vsel %vm220, %v195, %v197
  %v225 = vsel %vm220, %v197, %v199
  %v226 = vsel %vm220, %v199, %v201
  %v227 = vsel %vm220, %v201, %v203
  %v228 = vsel %vm220, %v203, %v205
  %v229 = vsel %vm220, %v205, %v207
  %v230 = vsel %vm220, %v207, %v209
  %v231 = vsel %vm220, %v209, %v211
  %v232 = vsel %vm220, %v211, %v213
  %v233 = vsel %vm220, %v213, %v215
  %v234 = vsel %vm220, %v215, %v217
  %v235 = vsel %vm220, %v217, %v219
  %vm251 = vcmask 269312
  %v254 = vsel %vm251, 0, %v189
  %vm256 = vmor %vm83, %vm115
  %vm257 = vmor %vm84, %vm116
  %vm258 = vmor %vm85, %vm117
  %vm259 = vmor %vm86, %vm118
  %vm260 = vmor %vm87, %vm119
  %vm261 = vmor %vm88, %vm120
  %vm262 = vmor %vm89, %vm121
  %vm263 = vmor %vm90, %vm122
  %vm264 = vmor %vm91, %vm123
  %vm265 = vmor %vm92, %vm124
  %vm266 = vmor %vm93, %vm125
  %vm267 = vmor %vm94, %vm126
  %vm268 = vmor %vm95, %vm127
  %vm269 = vmor %vm96, %vm128
  %vm270 = vmor %vm97, %vm129
  %vm271 = vmor %vm98, %vm130
  %vm272 = vmpackc.low %vm257, %vm256
  %vm273 = vmpackc.low %vm259, %vm258
  %vm274 = vmpackc.low %vm261, %vm260
  %vm275 = vmpackc.low %vm263, %vm262
  %vm276 = vmpackc.low %vm265, %vm264
  %vm277 = vmpackc.low %vm267, %vm266
  %vm278 = vmpackc.low %vm269, %vm268
  %vm279 = vmpackc.low %vm271, %vm270
  %v280 = vsel %vm272, 65537, 0
  %v281 = vsel %vm273, 65537, 0
  %v282 = vsel %vm274, 65537, 0
  %v283 = vsel %vm275, 65537, 0
  %v284 = vsel %vm276, 65537, 0
  %v285 = vsel %vm277, 65537, 0
  %v286 = vsel %vm278, 65537, 0
  %v287 = vsel %vm279, 65537, 0
  %v288 = vperm.slane %v280, 0
  %v289 = vperm.slane %v280, 4
  %v290 = vperm.slane %v281, 0
  %v291 = vperm.slane %v281, 4
  %v292 = vperm.slane %v282, 0
  %v293 = vperm.slane %v282, 4
  %v294 = vperm.slane %v283, 0
  %v295 = vperm.slane %v283, 4
  %v296 = vperm.slane %v284, 0
  %v297 = vperm.slane %v284, 4
  %v298 = vperm.slane %v285, 0
  %v299 = vperm.slane %v285, 4
  %v300 = vperm.slane %v286, 0
  %v301 = vperm.slane %v286, 4
  %v302 = vperm.slane %v287, 0
  %v303 = vperm.slane %v287, 4
  %v304 = vunpack.c.l.b16 %v288
  %v305 = vunpack.c.h.b16 %v288
  %v306 = vunpack.c.l.b16 0
  %v307 = vunpack.c.h.b16 0
  %vm308 = vcmp.ne.s32.totalorder %v304, %v306
  %vm309 = vcmp.ne.s32.totalorder %v305, %v307
  %vm310 = vmpackc.low %vm309, %vm308
  %v311 = vunpack.c.l.b16 %v289
  %v312 = vunpack.c.h.b16 %v289
  %v313 = vunpack.c.l.b16 0
  %v314 = vunpack.c.h.b16 0
  %vm315 = vcmp.ne.s32.totalorder %v311, %v313
  %vm316 = vcmp.ne.s32.totalorder %v312, %v314
  %vm317 = vmpackc.low %vm316, %vm315
  %v318 = vunpack.c.l.b16 %v290
  %v319 = vunpack.c.h.b16 %v290
  %v320 = vunpack.c.l.b16 0
  %v321 = vunpack.c.h.b16 0
  %vm322 = vcmp.ne.s32.totalorder %v318, %v320
  %vm323 = vcmp.ne.s32.totalorder %v319, %v321
  %vm324 = vmpackc.low %vm323, %vm322
  %v325 = vunpack.c.l.b16 %v291
  %v326 = vunpack.c.h.b16 %v291
  %v327 = vunpack.c.l.b16 0
  %v328 = vunpack.c.h.b16 0
  %vm329 = vcmp.ne.s32.totalorder %v325, %v327
  %vm330 = vcmp.ne.s32.totalorder %v326, %v328
  %vm331 = vmpackc.low %vm330, %vm329
  %v332 = vunpack.c.l.b16 %v292
  %v333 = vunpack.c.h.b16 %v292
  %v334 = vunpack.c.l.b16 0
  %v335 = vunpack.c.h.b16 0
  %vm336 = vcmp.ne.s32.totalorder %v332, %v334
  %vm337 = vcmp.ne.s32.totalorder %v333, %v335
  %vm338 = vmpackc.low %vm337, %vm336
  %v339 = vunpack.c.l.b16 %v293
  %v340 = vunpack.c.h.b16 %v293
  %v341 = vunpack.c.l.b16 0
  %v342 = vunpack.c.h.b16 0
  %vm343 = vcmp.ne.s32.totalorder %v339, %v341
  %vm344 = vcmp.ne.s32.totalorder %v340, %v342
  %vm345 = vmpackc.low %vm344, %vm343
  %v346 = vunpack.c.l.b16 %v294
  %v347 = vunpack.c.h.b16 %v294
  %v348 = vunpack.c.l.b16 0
  %v349 = vunpack.c.h.b16 0
  %vm350 = vcmp.ne.s32.totalorder %v346, %v348
  %vm351 = vcmp.ne.s32.totalorder %v347, %v349
  %vm352 = vmpackc.low %vm351, %vm350
  %v353 = vunpack.c.l.b16 %v295
  %v354 = vunpack.c.h.b16 %v295
  %v355 = vunpack.c.l.b16 0
  %v356 = vunpack.c.h.b16 0
  %vm357 = vcmp.ne.s32.totalorder %v353, %v355
  %vm358 = vcmp.ne.s32.totalorder %v354, %v356
  %vm359 = vmpackc.low %vm358, %vm357
  %v360 = vunpack.c.l.b16 %v296
  %v361 = vunpack.c.h.b16 %v296
  %v362 = vunpack.c.l.b16 0
  %v363 = vunpack.c.h.b16 0
  %vm364 = vcmp.ne.s32.totalorder %v360, %v362
  %vm365 = vcmp.ne.s32.totalorder %v361, %v363
  %vm366 = vmpackc.low %vm365, %vm364
  %v367 = vunpack.c.l.b16 %v297
  %v368 = vunpack.c.h.b16 %v297
  %v369 = vunpack.c.l.b16 0
  %v370 = vunpack.c.h.b16 0
  %vm371 = vcmp.ne.s32.totalorder %v367, %v369
  %vm372 = vcmp.ne.s32.totalorder %v368, %v370
  %vm373 = vmpackc.low %vm372, %vm371
  %v374 = vunpack.c.l.b16 %v298
  %v375 = vunpack.c.h.b16 %v298
  %v376 = vunpack.c.l.b16 0
  %v377 = vunpack.c.h.b16 0
  %vm378 = vcmp.ne.s32.totalorder %v374, %v376
  %vm379 = vcmp.ne.s32.totalorder %v375, %v377
  %vm380 = vmpackc.low %vm379, %vm378
  %v381 = vunpack.c.l.b16 %v299
  %v382 = vunpack.c.h.b16 %v299
  %v383 = vunpack.c.l.b16 0
  %v384 = vunpack.c.h.b16 0
  %vm385 = vcmp.ne.s32.totalorder %v381, %v383
  %vm386 = vcmp.ne.s32.totalorder %v382, %v384
  %vm387 = vmpackc.low %vm386, %vm385
  %v388 = vunpack.c.l.b16 %v300
  %v389 = vunpack.c.h.b16 %v300
  %v390 = vunpack.c.l.b16 0
  %v391 = vunpack.c.h.b16 0
  %vm392 = vcmp.ne.s32.totalorder %v388, %v390
  %vm393 = vcmp.ne.s32.totalorder %v389, %v391
  %vm394 = vmpackc.low %vm393, %vm392
  %v395 = vunpack.c.l.b16 %v301
  %v396 = vunpack.c.h.b16 %v301
  %v397 = vunpack.c.l.b16 0
  %v398 = vunpack.c.h.b16 0
  %vm399 = vcmp.ne.s32.totalorder %v395, %v397
  %vm400 = vcmp.ne.s32.totalorder %v396, %v398
  %vm401 = vmpackc.low %vm400, %vm399
  %v402 = vunpack.c.l.b16 %v302
  %v403 = vunpack.c.h.b16 %v302
  %v404 = vunpack.c.l.b16 0
  %v405 = vunpack.c.h.b16 0
  %vm406 = vcmp.ne.s32.totalorder %v402, %v404
  %vm407 = vcmp.ne.s32.totalorder %v403, %v405
  %vm408 = vmpackc.low %vm407, %vm406
  %v409 = vunpack.c.l.b16 %v303
  %v410 = vunpack.c.h.b16 %v303
  %v411 = vunpack.c.l.b16 0
  %v412 = vunpack.c.h.b16 0
  %vm413 = vcmp.ne.s32.totalorder %v409, %v411
  %vm414 = vcmp.ne.s32.totalorder %v410, %v412
  %vm415 = vmpackc.low %vm414, %vm413
  %v416 = vsel %vm310, 0, %v254
  %v417 = vsel %vm317, 0, %v221
  %v418 = vsel %vm324, 0, %v222
  %v419 = vsel %vm331, 0, %v223
  %v420 = vsel %vm338, 0, %v224
  %v421 = vsel %vm345, 0, %v225
  %v422 = vsel %vm352, 0, %v226
  %v423 = vsel %vm359, 0, %v227
  %v424 = vsel %vm366, 0, %v228
  %v425 = vsel %vm373, 0, %v229
  %v426 = vsel %vm380, 0, %v230
  %v427 = vsel %vm387, 0, %v231
  %v428 = vsel %vm394, 0, %v232
  %v429 = vsel %vm401, 0, %v233
  %v430 = vsel %vm408, 0, %v234
  %v431 = vsel %vm415, 0, %v235
  %432 = vst [vmem:[#allocation1] ss:$4 sm:$0xff] %v14
  %s433 = scalar_lea.vmem [#allocation1], 32
  %434 = vst [vmem:[%s433] ss:$4 sm:$0xff] %v15
  %v435 = vld.sshfl [vmem:[#allocation1] sm:$0xff pattern:$0x73625140]
  %v437 = vld.sshfl [vmem:[#allocation1 + $0x8] sm:$0xff pattern:$0x73625140]
  %v439 = vld.sshfl [vmem:[#allocation1 + $0x10] sm:$0xff pattern:$0x73625140]
  %v441 = vld.sshfl [vmem:[#allocation1 + $0x18] sm:$0xff pattern:$0x73625140]
  %v443 = vld.sshfl [vmem:[#allocation1 + $0x20] sm:$0xff pattern:$0x73625140]
  %v445 = vld.sshfl [vmem:[#allocation1 + $0x28] sm:$0xff pattern:$0x73625140]
  %v447 = vld.sshfl [vmem:[#allocation1 + $0x30] sm:$0xff pattern:$0x73625140]
  %v449 = vld.sshfl [vmem:[#allocation1 + $0x38] sm:$0xff pattern:$0x73625140]
  %451 = vst [vmem:[#allocation1] ss:$4 sm:$0xff] %v16
  %452 = vst [vmem:[%s433] ss:$4 sm:$0xff] %v17
  %v453 = vld.sshfl [vmem:[#allocation1] sm:$0xff pattern:$0x73625140]
  %v455 = vld.sshfl [vmem:[#allocation1 + $0x8] sm:$0xff pattern:$0x73625140]
  %v457 = vld.sshfl [vmem:[#allocation1 + $0x10] sm:$0xff pattern:$0x73625140]
  %v459 = vld.sshfl [vmem:[#allocation1 + $0x18] sm:$0xff pattern:$0x73625140]
  %v461 = vld.sshfl [vmem:[#allocation1 + $0x20] sm:$0xff pattern:$0x73625140]
  %v463 = vld.sshfl [vmem:[#allocation1 + $0x28] sm:$0xff pattern:$0x73625140]
  %v465 = vld.sshfl [vmem:[#allocation1 + $0x30] sm:$0xff pattern:$0x73625140]
  %v467 = vld.sshfl [vmem:[#allocation1 + $0x38] sm:$0xff pattern:$0x73625140]
  %469 = vrot.lane.b32.xlu0 %v435, 32
  %v470 = vpop.permute.xlu0 %469
  %471 = vrot.lane.b32.xlu0 %v437, 32
  %v472 = vpop.permute.xlu0 %471
  %473 = vrot.lane.b32.xlu0 %v439, 32
  %v474 = vpop.permute.xlu0 %473
  %475 = vrot.lane.b32.xlu0 %v441, 32
  %v476 = vpop.permute.xlu0 %475
  %477 = vrot.lane.b32.xlu0 %v443, 32
  %v478 = vpop.permute.xlu0 %477
  %479 = vrot.lane.b32.xlu0 %v445, 32
  %v480 = vpop.permute.xlu0 %479
  %481 = vrot.lane.b32.xlu0 %v447, 32
  %v482 = vpop.permute.xlu0 %481
  %483 = vrot.lane.b32.xlu0 %v449, 32
  %v484 = vpop.permute.xlu0 %483
  %485 = vrot.lane.b32.xlu0 %v453, 32
  %v486 = vpop.permute.xlu0 %485
  %487 = vrot.lane.b32.xlu0 %v455, 32
  %v488 = vpop.permute.xlu0 %487
  %489 = vrot.lane.b32.xlu0 %v457, 32
  %v490 = vpop.permute.xlu0 %489
  %491 = vrot.lane.b32.xlu0 %v459, 32
  %v492 = vpop.permute.xlu0 %491
  %493 = vrot.lane.b32.xlu0 %v461, 32
  %v494 = vpop.permute.xlu0 %493
  %495 = vrot.lane.b32.xlu0 %v463, 32
  %v496 = vpop.permute.xlu0 %495
  %497 = vrot.lane.b32.xlu0 %v465, 32
  %v498 = vpop.permute.xlu0 %497
  %499 = vrot.lane.b32.xlu0 %v467, 32
  %v500 = vpop.permute.xlu0 %499
  %vm501 = vcmask 261120
  %v502 = vsel %vm501, %v470, %v472
  %v503 = vsel %vm501, %v472, %v474
  %v504 = vsel %vm501, %v474, %v476
  %v505 = vsel %vm501, %v476, %v478
  %v506 = vsel %vm501, %v478, %v480
  %v507 = vsel %vm501, %v480, %v482
  %v508 = vsel %vm501, %v482, %v484
  %v509 = vsel %vm501, %v484, %v486
  %v510 = vsel %vm501, %v486, %v488
  %v511 = vsel %vm501, %v488, %v490
  %v512 = vsel %vm501, %v490, %v492
  %v513 = vsel %vm501, %v492, %v494
  %v514 = vsel %vm501, %v494, %v496
  %v515 = vsel %vm501, %v496, %v498
  %v516 = vsel %vm501, %v498, %v500
  %vm532 = vcmask 261120
  %v534 = vsel %vm532, 0, %v470
  %vm536 = vmpackc.low %vm84, %vm83
  %vm537 = vmpackc.low %vm86, %vm85
  %vm538 = vmpackc.low %vm88, %vm87
  %vm539 = vmpackc.low %vm90, %vm89
  %vm540 = vmpackc.low %vm92, %vm91
  %vm541 = vmpackc.low %vm94, %vm93
  %vm542 = vmpackc.low %vm96, %vm95
  %vm543 = vmpackc.low %vm98, %vm97
  %v544 = vsel %vm536, 65537, 0
  %v545 = vsel %vm537, 65537, 0
  %v546 = vsel %vm538, 65537, 0
  %v547 = vsel %vm539, 65537, 0
  %v548 = vsel %vm540, 65537, 0
  %v549 = vsel %vm541, 65537, 0
  %v550 = vsel %vm542, 65537, 0
  %v551 = vsel %vm543, 65537, 0
  %v552 = vperm.slane %v544, 0
  %v553 = vperm.slane %v544, 4
  %v554 = vperm.slane %v545, 0
  %v555 = vperm.slane %v545, 4
  %v556 = vperm.slane %v546, 0
  %v557 = vperm.slane %v546, 4
  %v558 = vperm.slane %v547, 0
  %v559 = vperm.slane %v547, 4
  %v560 = vperm.slane %v548, 0
  %v561 = vperm.slane %v548, 4
  %v562 = vperm.slane %v549, 0
  %v563 = vperm.slane %v549, 4
  %v564 = vperm.slane %v550, 0
  %v565 = vperm.slane %v550, 4
  %v566 = vperm.slane %v551, 0
  %v567 = vperm.slane %v551, 4
  %v568 = vunpack.c.l.b16 %v552
  %v569 = vunpack.c.h.b16 %v552
  %v570 = vunpack.c.l.b16 0
  %v571 = vunpack.c.h.b16 0
  %vm572 = vcmp.ne.s32.totalorder %v568, %v570
  %vm573 = vcmp.ne.s32.totalorder %v569, %v571
  %vm574 = vmpackc.low %vm573, %vm572
  %v575 = vunpack.c.l.b16 %v553
  %v576 = vunpack.c.h.b16 %v553
  %v577 = vunpack.c.l.b16 0
  %v578 = vunpack.c.h.b16 0
  %vm579 = vcmp.ne.s32.totalorder %v575, %v577
  %vm580 = vcmp.ne.s32.totalorder %v576, %v578
  %vm581 = vmpackc.low %vm580, %vm579
  %v582 = vunpack.c.l.b16 %v554
  %v583 = vunpack.c.h.b16 %v554
  %v584 = vunpack.c.l.b16 0
  %v585 = vunpack.c.h.b16 0
  %vm586 = vcmp.ne.s32.totalorder %v582, %v584
  %vm587 = vcmp.ne.s32.totalorder %v583, %v585
  %vm588 = vmpackc.low %vm587, %vm586
  %v589 = vunpack.c.l.b16 %v555
  %v590 = vunpack.c.h.b16 %v555
  %v591 = vunpack.c.l.b16 0
  %v592 = vunpack.c.h.b16 0
  %vm593 = vcmp.ne.s32.totalorder %v589, %v591
  %vm594 = vcmp.ne.s32.totalorder %v590, %v592
  %vm595 = vmpackc.low %vm594, %vm593
  %v596 = vunpack.c.l.b16 %v556
  %v597 = vunpack.c.h.b16 %v556
  %v598 = vunpack.c.l.b16 0
  %v599 = vunpack.c.h.b16 0
  %vm600 = vcmp.ne.s32.totalorder %v596, %v598
  %vm601 = vcmp.ne.s32.totalorder %v597, %v599
  %vm602 = vmpackc.low %vm601, %vm600
  %v603 = vunpack.c.l.b16 %v557
  %v604 = vunpack.c.h.b16 %v557
  %v605 = vunpack.c.l.b16 0
  %v606 = vunpack.c.h.b16 0
  %vm607 = vcmp.ne.s32.totalorder %v603, %v605
  %vm608 = vcmp.ne.s32.totalorder %v604, %v606
  %vm609 = vmpackc.low %vm608, %vm607
  %v610 = vunpack.c.l.b16 %v558
  %v611 = vunpack.c.h.b16 %v558
  %v612 = vunpack.c.l.b16 0
  %v613 = vunpack.c.h.b16 0
  %vm614 = vcmp.ne.s32.totalorder %v610, %v612
  %vm615 = vcmp.ne.s32.totalorder %v611, %v613
  %vm616 = vmpackc.low %vm615, %vm614
  %v617 = vunpack.c.l.b16 %v559
  %v618 = vunpack.c.h.b16 %v559
  %v619 = vunpack.c.l.b16 0
  %v620 = vunpack.c.h.b16 0
  %vm621 = vcmp.ne.s32.totalorder %v617, %v619
  %vm622 = vcmp.ne.s32.totalorder %v618, %v620
  %vm623 = vmpackc.low %vm622, %vm621
  %v624 = vunpack.c.l.b16 %v560
  %v625 = vunpack.c.h.b16 %v560
  %v626 = vunpack.c.l.b16 0
  %v627 = vunpack.c.h.b16 0
  %vm628 = vcmp.ne.s32.totalorder %v624, %v626
  %vm629 = vcmp.ne.s32.totalorder %v625, %v627
  %vm630 = vmpackc.low %vm629, %vm628
  %v631 = vunpack.c.l.b16 %v561
  %v632 = vunpack.c.h.b16 %v561
  %v633 = vunpack.c.l.b16 0
  %v634 = vunpack.c.h.b16 0
  %vm635 = vcmp.ne.s32.totalorder %v631, %v633
  %vm636 = vcmp.ne.s32.totalorder %v632, %v634
  %vm637 = vmpackc.low %vm636, %vm635
  %v638 = vunpack.c.l.b16 %v562
  %v639 = vunpack.c.h.b16 %v562
  %v640 = vunpack.c.l.b16 0
  %v641 = vunpack.c.h.b16 0
  %vm642 = vcmp.ne.s32.totalorder %v638, %v640
  %vm643 = vcmp.ne.s32.totalorder %v639, %v641
  %vm644 = vmpackc.low %vm643, %vm642
  %v645 = vunpack.c.l.b16 %v563
  %v646 = vunpack.c.h.b16 %v563
  %v647 = vunpack.c.l.b16 0
  %v648 = vunpack.c.h.b16 0
  %vm649 = vcmp.ne.s32.totalorder %v645, %v647
  %vm650 = vcmp.ne.s32.totalorder %v646, %v648
  %vm651 = vmpackc.low %vm650, %vm649
  %v652 = vunpack.c.l.b16 %v564
  %v653 = vunpack.c.h.b16 %v564
  %v654 = vunpack.c.l.b16 0
  %v655 = vunpack.c.h.b16 0
  %vm656 = vcmp.ne.s32.totalorder %v652, %v654
  %vm657 = vcmp.ne.s32.totalorder %v653, %v655
  %vm658 = vmpackc.low %vm657, %vm656
  %v659 = vunpack.c.l.b16 %v565
  %v660 = vunpack.c.h.b16 %v565
  %v661 = vunpack.c.l.b16 0
  %v662 = vunpack.c.h.b16 0
  %vm663 = vcmp.ne.s32.totalorder %v659, %v661
  %vm664 = vcmp.ne.s32.totalorder %v660, %v662
  %vm665 = vmpackc.low %vm664, %vm663
  %v666 = vunpack.c.l.b16 %v566
  %v667 = vunpack.c.h.b16 %v566
  %v668 = vunpack.c.l.b16 0
  %v669 = vunpack.c.h.b16 0
  %vm670 = vcmp.ne.s32.totalorder %v666, %v668
  %vm671 = vcmp.ne.s32.totalorder %v667, %v669
  %vm672 = vmpackc.low %vm671, %vm670
  %v673 = vunpack.c.l.b16 %v567
  %v674 = vunpack.c.h.b16 %v567
  %v675 = vunpack.c.l.b16 0
  %v676 = vunpack.c.h.b16 0
  %vm677 = vcmp.ne.s32.totalorder %v673, %v675
  %vm678 = vcmp.ne.s32.totalorder %v674, %v676
  %vm679 = vmpackc.low %vm678, %vm677
  %v680 = vsel %vm574, 0, %v534
  %v681 = vsel %vm581, 0, %v502
  %v682 = vsel %vm588, 0, %v503
  %v683 = vsel %vm595, 0, %v504
  %v684 = vsel %vm602, 0, %v505
  %v685 = vsel %vm609, 0, %v506
  %v686 = vsel %vm616, 0, %v507
  %v687 = vsel %vm623, 0, %v508
  %v688 = vsel %vm630, 0, %v509
  %v689 = vsel %vm637, 0, %v510
  %v690 = vsel %vm644, 0, %v511
  %v691 = vsel %vm651, 0, %v512
  %v692 = vsel %vm658, 0, %v513
  %v693 = vsel %vm665, 0, %v514
  %v694 = vsel %vm672, 0, %v515
  %v695 = vsel %vm679, 0, %v516
  %696 = vst [vmem:[#allocation1] ss:$4 sm:$0xff] %v14
  %s697 = scalar_lea.vmem [#allocation1], 32
  %698 = vst [vmem:[%s697] ss:$4 sm:$0xff] %v15
  %v699 = vld.sshfl [vmem:[#allocation1] sm:$0xff pattern:$0x73625140]
  %v701 = vld.sshfl [vmem:[#allocation1 + $0x8] sm:$0xff pattern:$0x73625140]
  %v703 = vld.sshfl [vmem:[#allocation1 + $0x10] sm:$0xff pattern:$0x73625140]
  %v705 = vld.sshfl [vmem:[#allocation1 + $0x18] sm:$0xff pattern:$0x73625140]
  %v707 = vld.sshfl [vmem:[#allocation1 + $0x20] sm:$0xff pattern:$0x73625140]
  %v709 = vld.sshfl [vmem:[#allocation1 + $0x28] sm:$0xff pattern:$0x73625140]
  %v711 = vld.sshfl [vmem:[#allocation1 + $0x30] sm:$0xff pattern:$0x73625140]
  %v713 = vld.sshfl [vmem:[#allocation1 + $0x38] sm:$0xff pattern:$0x73625140]
  %715 = vst [vmem:[#allocation1] ss:$4 sm:$0xff] %v16
  %716 = vst [vmem:[%s697] ss:$4 sm:$0xff] %v17
  %v717 = vld.sshfl [vmem:[#allocation1] sm:$0xff pattern:$0x73625140]
  %v719 = vld.sshfl [vmem:[#allocation1 + $0x8] sm:$0xff pattern:$0x73625140]
  %v721 = vld.sshfl [vmem:[#allocation1 + $0x10] sm:$0xff pattern:$0x73625140]
  %v723 = vld.sshfl [vmem:[#allocation1 + $0x18] sm:$0xff pattern:$0x73625140]
  %v725 = vld.sshfl [vmem:[#allocation1 + $0x20] sm:$0xff pattern:$0x73625140]
  %v727 = vld.sshfl [vmem:[#allocation1 + $0x28] sm:$0xff pattern:$0x73625140]
  %v729 = vld.sshfl [vmem:[#allocation1 + $0x30] sm:$0xff pattern:$0x73625140]
  %v731 = vld.sshfl [vmem:[#allocation1 + $0x38] sm:$0xff pattern:$0x73625140]
  %733 = vrot.lane.b32.xlu0 %v699, 31
  %v734 = vpop.permute.xlu0 %733
  %735 = vrot.lane.b32.xlu0 %v701, 31
  %v736 = vpop.permute.xlu0 %735
  %737 = vrot.lane.b32.xlu0 %v703, 31
  %v738 = vpop.permute.xlu0 %737
  %739 = vrot.lane.b32.xlu0 %v705, 31
  %v740 = vpop.permute.xlu0 %739
  %741 = vrot.lane.b32.xlu0 %v707, 31
  %v742 = vpop.permute.xlu0 %741
  %743 = vrot.lane.b32.xlu0 %v709, 31
  %v744 = vpop.permute.xlu0 %743
  %745 = vrot.lane.b32.xlu0 %v711, 31
  %v746 = vpop.permute.xlu0 %745
  %747 = vrot.lane.b32.xlu0 %v713, 31
  %v748 = vpop.permute.xlu0 %747
  %749 = vrot.lane.b32.xlu0 %v717, 31
  %v750 = vpop.permute.xlu0 %749
  %751 = vrot.lane.b32.xlu0 %v719, 31
  %v752 = vpop.permute.xlu0 %751
  %753 = vrot.lane.b32.xlu0 %v721, 31
  %v754 = vpop.permute.xlu0 %753
  %755 = vrot.lane.b32.xlu0 %v723, 31
  %v756 = vpop.permute.xlu0 %755
  %757 = vrot.lane.b32.xlu0 %v725, 31
  %v758 = vpop.permute.xlu0 %757
  %759 = vrot.lane.b32.xlu0 %v727, 31
  %v760 = vpop.permute.xlu0 %759
  %761 = vrot.lane.b32.xlu0 %v729, 31
  %v762 = vpop.permute.xlu0 %761
  %763 = vrot.lane.b32.xlu0 %v731, 31
  %v764 = vpop.permute.xlu0 %763
  %vm765 = vcmask 252928
  %v766 = vsel %vm765, %v734, %v736
  %v767 = vsel %vm765, %v736, %v738
  %v768 = vsel %vm765, %v738, %v740
  %v769 = vsel %vm765, %v740, %v742
  %v770 = vsel %vm765, %v742, %v744
  %v771 = vsel %vm765, %v744, %v746
  %v772 = vsel %vm765, %v746, %v748
  %v773 = vsel %vm765, %v748, %v750
  %v774 = vsel %vm765, %v750, %v752
  %v775 = vsel %vm765, %v752, %v754
  %v776 = vsel %vm765, %v754, %v756
  %v777 = vsel %vm765, %v756, %v758
  %v778 = vsel %vm765, %v758, %v760
  %v779 = vsel %vm765, %v760, %v762
  %v780 = vsel %vm765, %v762, %v764
  %vm796 = vcmask 252928
  %v798 = vsel %vm796, 0, %v734
  %vm800 = vmor %vm83, %vm131
  %vm801 = vmor %vm84, %vm132
  %vm802 = vmor %vm85, %vm133
  %vm803 = vmor %vm86, %vm134
  %vm804 = vmor %vm87, %vm135
  %vm805 = vmor %vm88, %vm136
  %vm806 = vmor %vm89, %vm137
  %vm807 = vmor %vm90, %vm138
  %vm808 = vmor %vm91, %vm139
  %vm809 = vmor %vm92, %vm140
  %vm810 = vmor %vm93, %vm141
  %vm811 = vmor %vm94, %vm142
  %vm812 = vmor %vm95, %vm143
  %vm813 = vmor %vm96, %vm144
  %vm814 = vmor %vm97, %vm145
  %vm815 = vmor %vm98, %vm146
  %vm816 = vmpackc.low %vm801, %vm800
  %vm817 = vmpackc.low %vm803, %vm802
  %vm818 = vmpackc.low %vm805, %vm804
  %vm819 = vmpackc.low %vm807, %vm806
  %vm820 = vmpackc.low %vm809, %vm808
  %vm821 = vmpackc.low %vm811, %vm810
  %vm822 = vmpackc.low %vm813, %vm812
  %vm823 = vmpackc.low %vm815, %vm814
  %v824 = vsel %vm816, 65537, 0
  %v825 = vsel %vm817, 65537, 0
  %v826 = vsel %vm818, 65537, 0
  %v827 = vsel %vm819, 65537, 0
  %v828 = vsel %vm820, 65537, 0
  %v829 = vsel %vm821, 65537, 0
  %v830 = vsel %vm822, 65537, 0
  %v831 = vsel %vm823, 65537, 0
  %v832 = vperm.slane %v824, 0
  %v833 = vperm.slane %v824, 4
  %v834 = vperm.slane %v825, 0
  %v835 = vperm.slane %v825, 4
  %v836 = vperm.slane %v826, 0
  %v837 = vperm.slane %v826, 4
  %v838 = vperm.slane %v827, 0
  %v839 = vperm.slane %v827, 4
  %v840 = vperm.slane %v828, 0
  %v841 = vperm.slane %v828, 4
  %v842 = vperm.slane %v829, 0
  %v843 = vperm.slane %v829, 4
  %v844 = vperm.slane %v830, 0
  %v845 = vperm.slane %v830, 4
  %v846 = vperm.slane %v831, 0
  %v847 = vperm.slane %v831, 4
  %v848 = vunpack.c.l.b16 %v832
  %v849 = vunpack.c.h.b16 %v832
  %v850 = vunpack.c.l.b16 0
  %v851 = vunpack.c.h.b16 0
  %vm852 = vcmp.ne.s32.totalorder %v848, %v850
  %vm853 = vcmp.ne.s32.totalorder %v849, %v851
  %vm854 = vmpackc.low %vm853, %vm852
  %v855 = vunpack.c.l.b16 %v833
  %v856 = vunpack.c.h.b16 %v833
  %v857 = vunpack.c.l.b16 0
  %v858 = vunpack.c.h.b16 0
  %vm859 = vcmp.ne.s32.totalorder %v855, %v857
  %vm860 = vcmp.ne.s32.totalorder %v856, %v858
  %vm861 = vmpackc.low %vm860, %vm859
  %v862 = vunpack.c.l.b16 %v834
  %v863 = vunpack.c.h.b16 %v834
  %v864 = vunpack.c.l.b16 0
  %v865 = vunpack.c.h.b16 0
  %vm866 = vcmp.ne.s32.totalorder %v862, %v864
  %vm867 = vcmp.ne.s32.totalorder %v863, %v865
  %vm868 = vmpackc.low %vm867, %vm866
  %v869 = vunpack.c.l.b16 %v835
  %v870 = vunpack.c.h.b16 %v835
  %v871 = vunpack.c.l.b16 0
  %v872 = vunpack.c.h.b16 0
  %vm873 = vcmp.ne.s32.totalorder %v869, %v871
  %vm874 = vcmp.ne.s32.totalorder %v870, %v872
  %vm875 = vmpackc.low %vm874, %vm873
  %v876 = vunpack.c.l.b16 %v836
  %v877 = vunpack.c.h.b16 %v836
  %v878 = vunpack.c.l.b16 0
  %v879 = vunpack.c.h.b16 0
  %vm880 = vcmp.ne.s32.totalorder %v876, %v878
  %vm881 = vcmp.ne.s32.totalorder %v877, %v879
  %vm882 = vmpackc.low %vm881, %vm880
  %v883 = vunpack.c.l.b16 %v837
  %v884 = vunpack.c.h.b16 %v837
  %v885 = vunpack.c.l.b16 0
  %v886 = vunpack.c.h.b16 0
  %vm887 = vcmp.ne.s32.totalorder %v883, %v885
  %vm888 = vcmp.ne.s32.totalorder %v884, %v886
  %vm889 = vmpackc.low %vm888, %vm887
  %v890 = vunpack.c.l.b16 %v838
  %v891 = vunpack.c.h.b16 %v838
  %v892 = vunpack.c.l.b16 0
  %v893 = vunpack.c.h.b16 0
  %vm894 = vcmp.ne.s32.totalorder %v890, %v892
  %vm895 = vcmp.ne.s32.totalorder %v891, %v893
  %vm896 = vmpackc.low %vm895, %vm894
  %v897 = vunpack.c.l.b16 %v839
  %v898 = vunpack.c.h.b16 %v839
  %v899 = vunpack.c.l.b16 0
  %v900 = vunpack.c.h.b16 0
  %vm901 = vcmp.ne.s32.totalorder %v897, %v899
  %vm902 = vcmp.ne.s32.totalorder %v898, %v900
  %vm903 = vmpackc.low %vm902, %vm901
  %v904 = vunpack.c.l.b16 %v840
  %v905 = vunpack.c.h.b16 %v840
  %v906 = vunpack.c.l.b16 0
  %v907 = vunpack.c.h.b16 0
  %vm908 = vcmp.ne.s32.totalorder %v904, %v906
  %vm909 = vcmp.ne.s32.totalorder %v905, %v907
  %vm910 = vmpackc.low %vm909, %vm908
  %v911 = vunpack.c.l.b16 %v841
  %v912 = vunpack.c.h.b16 %v841
  %v913 = vunpack.c.l.b16 0
  %v914 = vunpack.c.h.b16 0
  %vm915 = vcmp.ne.s32.totalorder %v911, %v913
  %vm916 = vcmp.ne.s32.totalorder %v912, %v914
  %vm917 = vmpackc.low %vm916, %vm915
  %v918 = vunpack.c.l.b16 %v842
  %v919 = vunpack.c.h.b16 %v842
  %v920 = vunpack.c.l.b16 0
  %v921 = vunpack.c.h.b16 0
  %vm922 = vcmp.ne.s32.totalorder %v918, %v920
  %vm923 = vcmp.ne.s32.totalorder %v919, %v921
  %vm924 = vmpackc.low %vm923, %vm922
  %v925 = vunpack.c.l.b16 %v843
  %v926 = vunpack.c.h.b16 %v843
  %v927 = vunpack.c.l.b16 0
  %v928 = vunpack.c.h.b16 0
  %vm929 = vcmp.ne.s32.totalorder %v925, %v927
  %vm930 = vcmp.ne.s32.totalorder %v926, %v928
  %vm931 = vmpackc.low %vm930, %vm929
  %v932 = vunpack.c.l.b16 %v844
  %v933 = vunpack.c.h.b16 %v844
  %v934 = vunpack.c.l.b16 0
  %v935 = vunpack.c.h.b16 0
  %vm936 = vcmp.ne.s32.totalorder %v932, %v934
  %vm937 = vcmp.ne.s32.totalorder %v933, %v935
  %vm938 = vmpackc.low %vm937, %vm936
  %v939 = vunpack.c.l.b16 %v845
  %v940 = vunpack.c.h.b16 %v845
  %v941 = vunpack.c.l.b16 0
  %v942 = vunpack.c.h.b16 0
  %vm943 = vcmp.ne.s32.totalorder %v939, %v941
  %vm944 = vcmp.ne.s32.totalorder %v940, %v942
  %vm945 = vmpackc.low %vm944, %vm943
  %v946 = vunpack.c.l.b16 %v846
  %v947 = vunpack.c.h.b16 %v846
  %v948 = vunpack.c.l.b16 0
  %v949 = vunpack.c.h.b16 0
  %vm950 = vcmp.ne.s32.totalorder %v946, %v948
  %vm951 = vcmp.ne.s32.totalorder %v947, %v949
  %vm952 = vmpackc.low %vm951, %vm950
  %v953 = vunpack.c.l.b16 %v847
  %v954 = vunpack.c.h.b16 %v847
  %v955 = vunpack.c.l.b16 0
  %v956 = vunpack.c.h.b16 0
  %vm957 = vcmp.ne.s32.totalorder %v953, %v955
  %vm958 = vcmp.ne.s32.totalorder %v954, %v956
  %vm959 = vmpackc.low %vm958, %vm957
  %v960 = vsel %vm854, 0, %v798
  %v961 = vsel %vm861, 0, %v766
  %v962 = vsel %vm868, 0, %v767
  %v963 = vsel %vm875, 0, %v768
  %v964 = vsel %vm882, 0, %v769
  %v965 = vsel %vm889, 0, %v770
  %v966 = vsel %vm896, 0, %v771
  %v967 = vsel %vm903, 0, %v772
  %v968 = vsel %vm910, 0, %v773
  %v969 = vsel %vm917, 0, %v774
  %v970 = vsel %vm924, 0, %v775
  %v971 = vsel %vm931, 0, %v776
  %v972 = vsel %vm938, 0, %v777
  %v973 = vsel %vm945, 0, %v778
  %v974 = vsel %vm952, 0, %v779
  %v975 = vsel %vm959, 0, %v780
  %976 = vst [vmem:[#allocation1] ss:$4 sm:$0xff] %v14
  %s977 = scalar_lea.vmem [#allocation1], 32
  %978 = vst [vmem:[%s977] ss:$4 sm:$0xff] %v15
  %v979 = vld.sshfl [vmem:[#allocation1] sm:$0xff pattern:$0x73625140]
  %v981 = vld.sshfl [vmem:[#allocation1 + $0x8] sm:$0xff pattern:$0x73625140]
  %v983 = vld.sshfl [vmem:[#allocation1 + $0x10] sm:$0xff pattern:$0x73625140]
  %v985 = vld.sshfl [vmem:[#allocation1 + $0x18] sm:$0xff pattern:$0x73625140]
  %v987 = vld.sshfl [vmem:[#allocation1 + $0x20] sm:$0xff pattern:$0x73625140]
  %v989 = vld.sshfl [vmem:[#allocation1 + $0x28] sm:$0xff pattern:$0x73625140]
  %v991 = vld.sshfl [vmem:[#allocation1 + $0x30] sm:$0xff pattern:$0x73625140]
  %v993 = vld.sshfl [vmem:[#allocation1 + $0x38] sm:$0xff pattern:$0x73625140]
  %995 = vst [vmem:[#allocation1] ss:$4 sm:$0xff] %v16
  %996 = vst [vmem:[%s977] ss:$4 sm:$0xff] %v17
  %v997 = vld.sshfl [vmem:[#allocation1] sm:$0xff pattern:$0x73625140]
  %v999 = vld.sshfl [vmem:[#allocation1 + $0x8] sm:$0xff pattern:$0x73625140]
  %v1001 = vld.sshfl [vmem:[#allocation1 + $0x10] sm:$0xff pattern:$0x73625140]
  %v1003 = vld.sshfl [vmem:[#allocation1 + $0x18] sm:$0xff pattern:$0x73625140]
  %v1005 = vld.sshfl [vmem:[#allocation1 + $0x20] sm:$0xff pattern:$0x73625140]
  %v1007 = vld.sshfl [vmem:[#allocation1 + $0x28] sm:$0xff pattern:$0x73625140]
  %v1009 = vld.sshfl [vmem:[#allocation1 + $0x30] sm:$0xff pattern:$0x73625140]
  %v1011 = vld.sshfl [vmem:[#allocation1 + $0x38] sm:$0xff pattern:$0x73625140]
  %1013 = vrot.lane.b32.xlu0 %v979, 1
  %v1014 = vpop.permute.xlu0 %1013
  %1015 = vrot.lane.b32.xlu0 %v981, 1
  %v1016 = vpop.permute.xlu0 %1015
  %1017 = vrot.lane.b32.xlu0 %v983, 1
  %v1018 = vpop.permute.xlu0 %1017
  %1019 = vrot.lane.b32.xlu0 %v985, 1
  %v1020 = vpop.permute.xlu0 %1019
  %1021 = vrot.lane.b32.xlu0 %v987, 1
  %v1022 = vpop.permute.xlu0 %1021
  %1023 = vrot.lane.b32.xlu0 %v989, 1
  %v1024 = vpop.permute.xlu0 %1023
  %1025 = vrot.lane.b32.xlu0 %v991, 1
  %v1026 = vpop.permute.xlu0 %1025
  %1027 = vrot.lane.b32.xlu0 %v993, 1
  %v1028 = vpop.permute.xlu0 %1027
  %1029 = vrot.lane.b32.xlu0 %v997, 1
  %v1030 = vpop.permute.xlu0 %1029
  %1031 = vrot.lane.b32.xlu0 %v999, 1
  %v1032 = vpop.permute.xlu0 %1031
  %1033 = vrot.lane.b32.xlu0 %v1001, 1
  %v1034 = vpop.permute.xlu0 %1033
  %1035 = vrot.lane.b32.xlu0 %v1003, 1
  %v1036 = vpop.permute.xlu0 %1035
  %1037 = vrot.lane.b32.xlu0 %v1005, 1
  %v1038 = vpop.permute.xlu0 %1037
  %1039 = vrot.lane.b32.xlu0 %v1007, 1
  %v1040 = vpop.permute.xlu0 %1039
  %1041 = vrot.lane.b32.xlu0 %v1009, 1
  %v1042 = vpop.permute.xlu0 %1041
  %1043 = vrot.lane.b32.xlu0 %v1011, 1
  %v1044 = vpop.permute.xlu0 %1043
  %vm1045 = vcmask 7168
  %v1046 = vsel %vm1045, %v1014, %v1016
  %v1047 = vsel %vm1045, %v1016, %v1018
  %v1048 = vsel %vm1045, %v1018, %v1020
  %v1049 = vsel %vm1045, %v1020, %v1022
  %v1050 = vsel %vm1045, %v1022, %v1024
  %v1051 = vsel %vm1045, %v1024, %v1026
  %v1052 = vsel %vm1045, %v1026, %v1028
  %v1053 = vsel %vm1045, %v1028, %v1030
  %v1054 = vsel %vm1045, %v1030, %v1032
  %v1055 = vsel %vm1045, %v1032, %v1034
  %v1056 = vsel %vm1045, %v1034, %v1036
  %v1057 = vsel %vm1045, %v1036, %v1038
  %v1058 = vsel %vm1045, %v1038, %v1040
  %v1059 = vsel %vm1045, %v1040, %v1042
  %v1060 = vsel %vm1045, %v1042, %v1044
  %vm1076 = vcmask 7168
  %v1078 = vsel %vm1076, 0, %v1014
  %vm1080 = vmpackc.low %vm116, %vm115
  %vm1081 = vmpackc.low %vm118, %vm117
  %vm1082 = vmpackc.low %vm120, %vm119
  %vm1083 = vmpackc.low %vm122, %vm121
  %vm1084 = vmpackc.low %vm124, %vm123
  %vm1085 = vmpackc.low %vm126, %vm125
  %vm1086 = vmpackc.low %vm128, %vm127
  %vm1087 = vmpackc.low %vm130, %vm129
  %v1088 = vsel %vm1080, 65537, 0
  %v1089 = vsel %vm1081, 65537, 0
  %v1090 = vsel %vm1082, 65537, 0
  %v1091 = vsel %vm1083, 65537, 0
  %v1092 = vsel %vm1084, 65537, 0
  %v1093 = vsel %vm1085, 65537, 0
  %v1094 = vsel %vm1086, 65537, 0
  %v1095 = vsel %vm1087, 65537, 0
  %v1096 = vperm.slane %v1088, 0
  %v1097 = vperm.slane %v1088, 4
  %v1098 = vperm.slane %v1089, 0
  %v1099 = vperm.slane %v1089, 4
  %v1100 = vperm.slane %v1090, 0
  %v1101 = vperm.slane %v1090, 4
  %v1102 = vperm.slane %v1091, 0
  %v1103 = vperm.slane %v1091, 4
  %v1104 = vperm.slane %v1092, 0
  %v1105 = vperm.slane %v1092, 4
  %v1106 = vperm.slane %v1093, 0
  %v1107 = vperm.slane %v1093, 4
  %v1108 = vperm.slane %v1094, 0
  %v1109 = vperm.slane %v1094, 4
  %v1110 = vperm.slane %v1095, 0
  %v1111 = vperm.slane %v1095, 4
  %v1112 = vunpack.c.l.b16 %v1096
  %v1113 = vunpack.c.h.b16 %v1096
  %v1114 = vunpack.c.l.b16 0
  %v1115 = vunpack.c.h.b16 0
  %vm1116 = vcmp.ne.s32.totalorder %v1112, %v1114
  %vm1117 = vcmp.ne.s32.totalorder %v1113, %v1115
  %vm1118 = vmpackc.low %vm1117, %vm1116
  %v1119 = vunpack.c.l.b16 %v1097
  %v1120 = vunpack.c.h.b16 %v1097
  %v1121 = vunpack.c.l.b16 0
  %v1122 = vunpack.c.h.b16 0
  %vm1123 = vcmp.ne.s32.totalorder %v1119, %v1121
  %vm1124 = vcmp.ne.s32.totalorder %v1120, %v1122
  %vm1125 = vmpackc.low %vm1124, %vm1123
  %v1126 = vunpack.c.l.b16 %v1098
  %v1127 = vunpack.c.h.b16 %v1098
  %v1128 = vunpack.c.l.b16 0
  %v1129 = vunpack.c.h.b16 0
  %vm1130 = vcmp.ne.s32.totalorder %v1126, %v1128
  %vm1131 = vcmp.ne.s32.totalorder %v1127, %v1129
  %vm1132 = vmpackc.low %vm1131, %vm1130
  %v1133 = vunpack.c.l.b16 %v1099
  %v1134 = vunpack.c.h.b16 %v1099
  %v1135 = vunpack.c.l.b16 0
  %v1136 = vunpack.c.h.b16 0
  %vm1137 = vcmp.ne.s32.totalorder %v1133, %v1135
  %vm1138 = vcmp.ne.s32.totalorder %v1134, %v1136
  %vm1139 = vmpackc.low %vm1138, %vm1137
  %v1140 = vunpack.c.l.b16 %v1100
  %v1141 = vunpack.c.h.b16 %v1100
  %v1142 = vunpack.c.l.b16 0
  %v1143 = vunpack.c.h.b16 0
  %vm1144 = vcmp.ne.s32.totalorder %v1140, %v1142
  %vm1145 = vcmp.ne.s32.totalorder %v1141, %v1143
  %vm1146 = vmpackc.low %vm1145, %vm1144
  %v1147 = vunpack.c.l.b16 %v1101
  %v1148 = vunpack.c.h.b16 %v1101
  %v1149 = vunpack.c.l.b16 0
  %v1150 = vunpack.c.h.b16 0
  %vm1151 = vcmp.ne.s32.totalorder %v1147, %v1149
  %vm1152 = vcmp.ne.s32.totalorder %v1148, %v1150
  %vm1153 = vmpackc.low %vm1152, %vm1151
  %v1154 = vunpack.c.l.b16 %v1102
  %v1155 = vunpack.c.h.b16 %v1102
  %v1156 = vunpack.c.l.b16 0
  %v1157 = vunpack.c.h.b16 0
  %vm1158 = vcmp.ne.s32.totalorder %v1154, %v1156
  %vm1159 = vcmp.ne.s32.totalorder %v1155, %v1157
  %vm1160 = vmpackc.low %vm1159, %vm1158
  %v1161 = vunpack.c.l.b16 %v1103
  %v1162 = vunpack.c.h.b16 %v1103
  %v1163 = vunpack.c.l.b16 0
  %v1164 = vunpack.c.h.b16 0
  %vm1165 = vcmp.ne.s32.totalorder %v1161, %v1163
  %vm1166 = vcmp.ne.s32.totalorder %v1162, %v1164
  %vm1167 = vmpackc.low %vm1166, %vm1165
  %v1168 = vunpack.c.l.b16 %v1104
  %v1169 = vunpack.c.h.b16 %v1104
  %v1170 = vunpack.c.l.b16 0
  %v1171 = vunpack.c.h.b16 0
  %vm1172 = vcmp.ne.s32.totalorder %v1168, %v1170
  %vm1173 = vcmp.ne.s32.totalorder %v1169, %v1171
  %vm1174 = vmpackc.low %vm1173, %vm1172
  %v1175 = vunpack.c.l.b16 %v1105
  %v1176 = vunpack.c.h.b16 %v1105
  %v1177 = vunpack.c.l.b16 0
  %v1178 = vunpack.c.h.b16 0
  %vm1179 = vcmp.ne.s32.totalorder %v1175, %v1177
  %vm1180 = vcmp.ne.s32.totalorder %v1176, %v1178
  %vm1181 = vmpackc.low %vm1180, %vm1179
  %v1182 = vunpack.c.l.b16 %v1106
  %v1183 = vunpack.c.h.b16 %v1106
  %v1184 = vunpack.c.l.b16 0
  %v1185 = vunpack.c.h.b16 0
  %vm1186 = vcmp.ne.s32.totalorder %v1182, %v1184
  %vm1187 = vcmp.ne.s32.totalorder %v1183, %v1185
  %vm1188 = vmpackc.low %vm1187, %vm1186
  %v1189 = vunpack.c.l.b16 %v1107
  %v1190 = vunpack.c.h.b16 %v1107
  %v1191 = vunpack.c.l.b16 0
  %v1192 = vunpack.c.h.b16 0
  %vm1193 = vcmp.ne.s32.totalorder %v1189, %v1191
  %vm1194 = vcmp.ne.s32.totalorder %v1190, %v1192
  %vm1195 = vmpackc.low %vm1194, %vm1193
  %v1196 = vunpack.c.l.b16 %v1108
  %v1197 = vunpack.c.h.b16 %v1108
  %v1198 = vunpack.c.l.b16 0
  %v1199 = vunpack.c.h.b16 0
  %vm1200 = vcmp.ne.s32.totalorder %v1196, %v1198
  %vm1201 = vcmp.ne.s32.totalorder %v1197, %v1199
  %vm1202 = vmpackc.low %vm1201, %vm1200
  %v1203 = vunpack.c.l.b16 %v1109
  %v1204 = vunpack.c.h.b16 %v1109
  %v1205 = vunpack.c.l.b16 0
  %v1206 = vunpack.c.h.b16 0
  %vm1207 = vcmp.ne.s32.totalorder %v1203, %v1205
  %vm1208 = vcmp.ne.s32.totalorder %v1204, %v1206
  %vm1209 = vmpackc.low %vm1208, %vm1207
  %v1210 = vunpack.c.l.b16 %v1110
  %v1211 = vunpack.c.h.b16 %v1110
  %v1212 = vunpack.c.l.b16 0
  %v1213 = vunpack.c.h.b16 0
  %vm1214 = vcmp.ne.s32.totalorder %v1210, %v1212
  %vm1215 = vcmp.ne.s32.totalorder %v1211, %v1213
  %vm1216 = vmpackc.low %vm1215, %vm1214
  %v1217 = vunpack.c.l.b16 %v1111
  %v1218 = vunpack.c.h.b16 %v1111
  %v1219 = vunpack.c.l.b16 0
  %v1220 = vunpack.c.h.b16 0
  %vm1221 = vcmp.ne.s32.totalorder %v1217, %v1219
  %vm1222 = vcmp.ne.s32.totalorder %v1218, %v1220
  %vm1223 = vmpackc.low %vm1222, %vm1221
  %v1224 = vsel %vm1118, 0, %v1078
  %v1225 = vsel %vm1125, 0, %v1046
  %v1226 = vsel %vm1132, 0, %v1047
  %v1227 = vsel %vm1139, 0, %v1048
  %v1228 = vsel %vm1146, 0, %v1049
  %v1229 = vsel %vm1153, 0, %v1050
  %v1230 = vsel %vm1160, 0, %v1051
  %v1231 = vsel %vm1167, 0, %v1052
  %v1232 = vsel %vm1174, 0, %v1053
  %v1233 = vsel %vm1181, 0, %v1054
  %v1234 = vsel %vm1188, 0, %v1055
  %v1235 = vsel %vm1195, 0, %v1056
  %v1236 = vsel %vm1202, 0, %v1057
  %v1237 = vsel %vm1209, 0, %v1058
  %v1238 = vsel %vm1216, 0, %v1059
  %v1239 = vsel %vm1223, 0, %v1060
  %1240 = vst [vmem:[#allocation1] ss:$4 sm:$0xff] %v14
  %s1241 = scalar_lea.vmem [#allocation1], 32
  %1242 = vst [vmem:[%s1241] ss:$4 sm:$0xff] %v15
  %v1243 = vld.sshfl [vmem:[#allocation1] sm:$0xff pattern:$0x73625140]
  %v1245 = vld.sshfl [vmem:[#allocation1 + $0x8] sm:$0xff pattern:$0x73625140]
  %v1247 = vld.sshfl [vmem:[#allocation1 + $0x10] sm:$0xff pattern:$0x73625140]
  %v1249 = vld.sshfl [vmem:[#allocation1 + $0x18] sm:$0xff pattern:$0x73625140]
  %v1251 = vld.sshfl [vmem:[#allocation1 + $0x20] sm:$0xff pattern:$0x73625140]
  %v1253 = vld.sshfl [vmem:[#allocation1 + $0x28] sm:$0xff pattern:$0x73625140]
  %v1255 = vld.sshfl [vmem:[#allocation1 + $0x30] sm:$0xff pattern:$0x73625140]
  %v1257 = vld.sshfl [vmem:[#allocation1 + $0x38] sm:$0xff pattern:$0x73625140]
  %1259 = vst [vmem:[#allocation1] ss:$4 sm:$0xff] %v16
  %1260 = vst [vmem:[%s1241] ss:$4 sm:$0xff] %v17
  %v1261 = vld.sshfl [vmem:[#allocation1] sm:$0xff pattern:$0x73625140]
  %v1263 = vld.sshfl [vmem:[#allocation1 + $0x8] sm:$0xff pattern:$0x73625140]
  %v1265 = vld.sshfl [vmem:[#allocation1 + $0x10] sm:$0xff pattern:$0x73625140]
  %v1267 = vld.sshfl [vmem:[#allocation1 + $0x18] sm:$0xff pattern:$0x73625140]
  %v1269 = vld.sshfl [vmem:[#allocation1 + $0x20] sm:$0xff pattern:$0x73625140]
  %v1271 = vld.sshfl [vmem:[#allocation1 + $0x28] sm:$0xff pattern:$0x73625140]
  %v1273 = vld.sshfl [vmem:[#allocation1 + $0x30] sm:$0xff pattern:$0x73625140]
  %v1275 = vld.sshfl [vmem:[#allocation1 + $0x38] sm:$0xff pattern:$0x73625140]
  %1277 = vrot.lane.b32.xlu0 %v1243, 127
  %v1278 = vpop.permute.xlu0 %1277
  %1279 = vrot.lane.b32.xlu0 %v1245, 127
  %v1280 = vpop.permute.xlu0 %1279
  %1281 = vrot.lane.b32.xlu0 %v1247, 127
  %v1282 = vpop.permute.xlu0 %1281
  %1283 = vrot.lane.b32.xlu0 %v1249, 127
  %v1284 = vpop.permute.xlu0 %1283
  %1285 = vrot.lane.b32.xlu0 %v1251, 127
  %v1286 = vpop.permute.xlu0 %1285
  %1287 = vrot.lane.b32.xlu0 %v1253, 127
  %v1288 = vpop.permute.xlu0 %1287
  %1289 = vrot.lane.b32.xlu0 %v1255, 127
  %v1290 = vpop.permute.xlu0 %1289
  %1291 = vrot.lane.b32.xlu0 %v1257, 127
  %v1292 = vpop.permute.xlu0 %1291
  %1293 = vrot.lane.b32.xlu0 %v1261, 127
  %v1294 = vpop.permute.xlu0 %1293
  %1295 = vrot.lane.b32.xlu0 %v1263, 127
  %v1296 = vpop.permute.xlu0 %1295
  %1297 = vrot.lane.b32.xlu0 %v1265, 127
  %v1298 = vpop.permute.xlu0 %1297
  %1299 = vrot.lane.b32.xlu0 %v1267, 127
  %v1300 = vpop.permute.xlu0 %1299
  %1301 = vrot.lane.b32.xlu0 %v1269, 127
  %v1302 = vpop.permute.xlu0 %1301
  %1303 = vrot.lane.b32.xlu0 %v1271, 127
  %v1304 = vpop.permute.xlu0 %1303
  %1305 = vrot.lane.b32.xlu0 %v1273, 127
  %v1306 = vpop.permute.xlu0 %1305
  %1307 = vrot.lane.b32.xlu0 %v1275, 127
  %v1308 = vpop.permute.xlu0 %1307
  %vm1309 = vcmask 1039360
  %v1310 = vsel %vm1309, %v1278, %v1280
  %v1311 = vsel %vm1309, %v1280, %v1282
  %v1312 = vsel %vm1309, %v1282, %v1284
  %v1313 = vsel %vm1309, %v1284, %v1286
  %v1314 = vsel %vm1309, %v1286, %v1288
  %v1315 = vsel %vm1309, %v1288, %v1290
  %v1316 = vsel %vm1309, %v1290, %v1292
  %v1317 = vsel %vm1309, %v1292, %v1294
  %v1318 = vsel %vm1309, %v1294, %v1296
  %v1319 = vsel %vm1309, %v1296, %v1298
  %v1320 = vsel %vm1309, %v1298, %v1300
  %v1321 = vsel %vm1309, %v1300, %v1302
  %v1322 = vsel %vm1309, %v1302, %v1304
  %v1323 = vsel %vm1309, %v1304, %v1306
  %v1324 = vsel %vm1309, %v1306, %v1308
  %vm1340 = vcmask 1039360
  %v1342 = vsel %vm1340, %v1308, 0
  %vm1344 = vmpackc.low %vm132, %vm131
  %vm1345 = vmpackc.low %vm134, %vm133
  %vm1346 = vmpackc.low %vm136, %vm135
  %vm1347 = vmpackc.low %vm138, %vm137
  %vm1348 = vmpackc.low %vm140, %vm139
  %vm1349 = vmpackc.low %vm142, %vm141
  %vm1350 = vmpackc.low %vm144, %vm143
  %vm1351 = vmpackc.low %vm146, %vm145
  %v1352 = vsel %vm1344, 65537, 0
  %v1353 = vsel %vm1345, 65537, 0
  %v1354 = vsel %vm1346, 65537, 0
  %v1355 = vsel %vm1347, 65537, 0
  %v1356 = vsel %vm1348, 65537, 0
  %v1357 = vsel %vm1349, 65537, 0
  %v1358 = vsel %vm1350, 65537, 0
  %v1359 = vsel %vm1351, 65537, 0
  %v1360 = vperm.slane %v1352, 0
  %v1361 = vperm.slane %v1352, 4
  %v1362 = vperm.slane %v1353, 0
  %v1363 = vperm.slane %v1353, 4
  %v1364 = vperm.slane %v1354, 0
  %v1365 = vperm.slane %v1354, 4
  %v1366 = vperm.slane %v1355, 0
  %v1367 = vperm.slane %v1355, 4
  %v1368 = vperm.slane %v1356, 0
  %v1369 = vperm.slane %v1356, 4
  %v1370 = vperm.slane %v1357, 0
  %v1371 = vperm.slane %v1357, 4
  %v1372 = vperm.slane %v1358, 0
  %v1373 = vperm.slane %v1358, 4
  %v1374 = vperm.slane %v1359, 0
  %v1375 = vperm.slane %v1359, 4
  %v1376 = vunpack.c.l.b16 %v1360
  %v1377 = vunpack.c.h.b16 %v1360
  %v1378 = vunpack.c.l.b16 0
  %v1379 = vunpack.c.h.b16 0
  %vm1380 = vcmp.ne.s32.totalorder %v1376, %v1378
  %vm1381 = vcmp.ne.s32.totalorder %v1377, %v1379
  %vm1382 = vmpackc.low %vm1381, %vm1380
  %v1383 = vunpack.c.l.b16 %v1361
  %v1384 = vunpack.c.h.b16 %v1361
  %v1385 = vunpack.c.l.b16 0
  %v1386 = vunpack.c.h.b16 0
  %vm1387 = vcmp.ne.s32.totalorder %v1383, %v1385
  %vm1388 = vcmp.ne.s32.totalorder %v1384, %v1386
  %vm1389 = vmpackc.low %vm1388, %vm1387
  %v1390 = vunpack.c.l.b16 %v1362
  %v1391 = vunpack.c.h.b16 %v1362
  %v1392 = vunpack.c.l.b16 0
  %v1393 = vunpack.c.h.b16 0
  %vm1394 = vcmp.ne.s32.totalorder %v1390, %v1392
  %vm1395 = vcmp.ne.s32.totalorder %v1391, %v1393
  %vm1396 = vmpackc.low %vm1395, %vm1394
  %v1397 = vunpack.c.l.b16 %v1363
  %v1398 = vunpack.c.h.b16 %v1363
  %v1399 = vunpack.c.l.b16 0
  %v1400 = vunpack.c.h.b16 0
  %vm1401 = vcmp.ne.s32.totalorder %v1397, %v1399
  %vm1402 = vcmp.ne.s32.totalorder %v1398, %v1400
  %vm1403 = vmpackc.low %vm1402, %vm1401
  %v1404 = vunpack.c.l.b16 %v1364
  %v1405 = vunpack.c.h.b16 %v1364
  %v1406 = vunpack.c.l.b16 0
  %v1407 = vunpack.c.h.b16 0
  %vm1408 = vcmp.ne.s32.totalorder %v1404, %v1406
  %vm1409 = vcmp.ne.s32.totalorder %v1405, %v1407
  %vm1410 = vmpackc.low %vm1409, %vm1408
  %v1411 = vunpack.c.l.b16 %v1365
  %v1412 = vunpack.c.h.b16 %v1365
  %v1413 = vunpack.c.l.b16 0
  %v1414 = vunpack.c.h.b16 0
  %vm1415 = vcmp.ne.s32.totalorder %v1411, %v1413
  %vm1416 = vcmp.ne.s32.totalorder %v1412, %v1414
  %vm1417 = vmpackc.low %vm1416, %vm1415
  %v1418 = vunpack.c.l.b16 %v1366
  %v1419 = vunpack.c.h.b16 %v1366
  %v1420 = vunpack.c.l.b16 0
  %v1421 = vunpack.c.h.b16 0
  %vm1422 = vcmp.ne.s32.totalorder %v1418, %v1420
  %vm1423 = vcmp.ne.s32.totalorder %v1419, %v1421
  %vm1424 = vmpackc.low %vm1423, %vm1422
  %v1425 = vunpack.c.l.b16 %v1367
  %v1426 = vunpack.c.h.b16 %v1367
  %v1427 = vunpack.c.l.b16 0
  %v1428 = vunpack.c.h.b16 0
  %vm1429 = vcmp.ne.s32.totalorder %v1425, %v1427
  %vm1430 = vcmp.ne.s32.totalorder %v1426, %v1428
  %vm1431 = vmpackc.low %vm1430, %vm1429
  %v1432 = vunpack.c.l.b16 %v1368
  %v1433 = vunpack.c.h.b16 %v1368
  %v1434 = vunpack.c.l.b16 0
  %v1435 = vunpack.c.h.b16 0
  %vm1436 = vcmp.ne.s32.totalorder %v1432, %v1434
  %vm1437 = vcmp.ne.s32.totalorder %v1433, %v1435
  %vm1438 = vmpackc.low %vm1437, %vm1436
  %v1439 = vunpack.c.l.b16 %v1369
  %v1440 = vunpack.c.h.b16 %v1369
  %v1441 = vunpack.c.l.b16 0
  %v1442 = vunpack.c.h.b16 0
  %vm1443 = vcmp.ne.s32.totalorder %v1439, %v1441
  %vm1444 = vcmp.ne.s32.totalorder %v1440, %v1442
  %vm1445 = vmpackc.low %vm1444, %vm1443
  %v1446 = vunpack.c.l.b16 %v1370
  %v1447 = vunpack.c.h.b16 %v1370
  %v1448 = vunpack.c.l.b16 0
  %v1449 = vunpack.c.h.b16 0
  %vm1450 = vcmp.ne.s32.totalorder %v1446, %v1448
  %vm1451 = vcmp.ne.s32.totalorder %v1447, %v1449
  %vm1452 = vmpackc.low %vm1451, %vm1450
  %v1453 = vunpack.c.l.b16 %v1371
  %v1454 = vunpack.c.h.b16 %v1371
  %v1455 = vunpack.c.l.b16 0
  %v1456 = vunpack.c.h.b16 0
  %vm1457 = vcmp.ne.s32.totalorder %v1453, %v1455
  %vm1458 = vcmp.ne.s32.totalorder %v1454, %v1456
  %vm1459 = vmpackc.low %vm1458, %vm1457
  %v1460 = vunpack.c.l.b16 %v1372
  %v1461 = vunpack.c.h.b16 %v1372
  %v1462 = vunpack.c.l.b16 0
  %v1463 = vunpack.c.h.b16 0
  %vm1464 = vcmp.ne.s32.totalorder %v1460, %v1462
  %vm1465 = vcmp.ne.s32.totalorder %v1461, %v1463
  %vm1466 = vmpackc.low %vm1465, %vm1464
  %v1467 = vunpack.c.l.b16 %v1373
  %v1468 = vunpack.c.h.b16 %v1373
  %v1469 = vunpack.c.l.b16 0
  %v1470 = vunpack.c.h.b16 0
  %vm1471 = vcmp.ne.s32.totalorder %v1467, %v1469
  %vm1472 = vcmp.ne.s32.totalorder %v1468, %v1470
  %vm1473 = vmpackc.low %vm1472, %vm1471
  %v1474 = vunpack.c.l.b16 %v1374
  %v1475 = vunpack.c.h.b16 %v1374
  %v1476 = vunpack.c.l.b16 0
  %v1477 = vunpack.c.h.b16 0
  %vm1478 = vcmp.ne.s32.totalorder %v1474, %v1476
  %vm1479 = vcmp.ne.s32.totalorder %v1475, %v1477
  %vm1480 = vmpackc.low %vm1479, %vm1478
  %v1481 = vunpack.c.l.b16 %v1375
  %v1482 = vunpack.c.h.b16 %v1375
  %v1483 = vunpack.c.l.b16 0
  %v1484 = vunpack.c.h.b16 0
  %vm1485 = vcmp.ne.s32.totalorder %v1481, %v1483
  %vm1486 = vcmp.ne.s32.totalorder %v1482, %v1484
  %vm1487 = vmpackc.low %vm1486, %vm1485
  %v1488 = vsel %vm1382, 0, %v1310
  %v1489 = vsel %vm1389, 0, %v1311
  %v1490 = vsel %vm1396, 0, %v1312
  %v1491 = vsel %vm1403, 0, %v1313
  %v1492 = vsel %vm1410, 0, %v1314
  %v1493 = vsel %vm1417, 0, %v1315
  %v1494 = vsel %vm1424, 0, %v1316
  %v1495 = vsel %vm1431, 0, %v1317
  %v1496 = vsel %vm1438, 0, %v1318
  %v1497 = vsel %vm1445, 0, %v1319
  %v1498 = vsel %vm1452, 0, %v1320
  %v1499 = vsel %vm1459, 0, %v1321
  %v1500 = vsel %vm1466, 0, %v1322
  %v1501 = vsel %vm1473, 0, %v1323
  %v1502 = vsel %vm1480, 0, %v1324
  %v1503 = vsel %vm1487, 0, %v1342
  %1504 = vst [vmem:[#allocation1] ss:$4 sm:$0xff] %v14
  %s1505 = scalar_lea.vmem [#allocation1], 32
  %1506 = vst [vmem:[%s1505] ss:$4 sm:$0xff] %v15
  %v1507 = vld.sshfl [vmem:[#allocation1] sm:$0xff pattern:$0x73625140]
  %v1509 = vld.sshfl [vmem:[#allocation1 + $0x8] sm:$0xff pattern:$0x73625140]
  %v1511 = vld.sshfl [vmem:[#allocation1 + $0x10] sm:$0xff pattern:$0x73625140]
  %v1513 = vld.sshfl [vmem:[#allocation1 + $0x18] sm:$0xff pattern:$0x73625140]
  %v1515 = vld.sshfl [vmem:[#allocation1 + $0x20] sm:$0xff pattern:$0x73625140]
  %v1517 = vld.sshfl [vmem:[#allocation1 + $0x28] sm:$0xff pattern:$0x73625140]
  %v1519 = vld.sshfl [vmem:[#allocation1 + $0x30] sm:$0xff pattern:$0x73625140]
  %v1521 = vld.sshfl [vmem:[#allocation1 + $0x38] sm:$0xff pattern:$0x73625140]
  %1523 = vst [vmem:[#allocation1] ss:$4 sm:$0xff] %v16
  %1524 = vst [vmem:[%s1505] ss:$4 sm:$0xff] %v17
  %v1525 = vld.sshfl [vmem:[#allocation1] sm:$0xff pattern:$0x73625140]
  %v1527 = vld.sshfl [vmem:[#allocation1 + $0x8] sm:$0xff pattern:$0x73625140]
  %v1529 = vld.sshfl [vmem:[#allocation1 + $0x10] sm:$0xff pattern:$0x73625140]
  %v1531 = vld.sshfl [vmem:[#allocation1 + $0x18] sm:$0xff pattern:$0x73625140]
  %v1533 = vld.sshfl [vmem:[#allocation1 + $0x20] sm:$0xff pattern:$0x73625140]
  %v1535 = vld.sshfl [vmem:[#allocation1 + $0x28] sm:$0xff pattern:$0x73625140]
  %v1537 = vld.sshfl [vmem:[#allocation1 + $0x30] sm:$0xff pattern:$0x73625140]
  %v1539 = vld.sshfl [vmem:[#allocation1 + $0x38] sm:$0xff pattern:$0x73625140]
  %1541 = vrot.lane.b32.xlu0 %v1507, 97
  %v1542 = vpop.permute.xlu0 %1541
  %1543 = vrot.lane.b32.xlu0 %v1509, 97
  %v1544 = vpop.permute.xlu0 %1543
  %1545 = vrot.lane.b32.xlu0 %v1511, 97
  %v1546 = vpop.permute.xlu0 %1545
  %1547 = vrot.lane.b32.xlu0 %v1513, 97
  %v1548 = vpop.permute.xlu0 %1547
  %1549 = vrot.lane.b32.xlu0 %v1515, 97
  %v1550 = vpop.permute.xlu0 %1549
  %1551 = vrot.lane.b32.xlu0 %v1517, 97
  %v1552 = vpop.permute.xlu0 %1551
  %1553 = vrot.lane.b32.xlu0 %v1519, 97
  %v1554 = vpop.permute.xlu0 %1553
  %1555 = vrot.lane.b32.xlu0 %v1521, 97
  %v1556 = vpop.permute.xlu0 %1555
  %1557 = vrot.lane.b32.xlu0 %v1525, 97
  %v1558 = vpop.permute.xlu0 %1557
  %1559 = vrot.lane.b32.xlu0 %v1527, 97
  %v1560 = vpop.permute.xlu0 %1559
  %1561 = vrot.lane.b32.xlu0 %v1529, 97
  %v1562 = vpop.permute.xlu0 %1561
  %1563 = vrot.lane.b32.xlu0 %v1531, 97
  %v1564 = vpop.permute.xlu0 %1563
  %1565 = vrot.lane.b32.xlu0 %v1533, 97
  %v1566 = vpop.permute.xlu0 %1565
  %1567 = vrot.lane.b32.xlu0 %v1535, 97
  %v1568 = vpop.permute.xlu0 %1567
  %1569 = vrot.lane.b32.xlu0 %v1537, 97
  %v1570 = vpop.permute.xlu0 %1569
  %1571 = vrot.lane.b32.xlu0 %v1539, 97
  %v1572 = vpop.permute.xlu0 %1571
  %vm1573 = vcmask 793600
  %v1574 = vsel %vm1573, %v1542, %v1544
  %v1575 = vsel %vm1573, %v1544, %v1546
  %v1576 = vsel %vm1573, %v1546, %v1548
  %v1577 = vsel %vm1573, %v1548, %v1550
  %v1578 = vsel %vm1573, %v1550, %v1552
  %v1579 = vsel %vm1573, %v1552, %v1554
  %v1580 = vsel %vm1573, %v1554, %v1556
  %v1581 = vsel %vm1573, %v1556, %v1558
  %v1582 = vsel %vm1573, %v1558, %v1560
  %v1583 = vsel %vm1573, %v1560, %v1562
  %v1584 = vsel %vm1573, %v1562, %v1564
  %v1585 = vsel %vm1573, %v1564, %v1566
  %v1586 = vsel %vm1573, %v1566, %v1568
  %v1587 = vsel %vm1573, %v1568, %v1570
  %v1588 = vsel %vm1573, %v1570, %v1572
  %vm1604 = vcmask 793600
  %v1606 = vsel %vm1604, %v1572, 0
  %vm1608 = vmor %vm99, %vm115
  %vm1609 = vmor %vm100, %vm116
  %vm1610 = vmor %vm101, %vm117
  %vm1611 = vmor %vm102, %vm118
  %vm1612 = vmor %vm103, %vm119
  %vm1613 = vmor %vm104, %vm120
  %vm1614 = vmor %vm105, %vm121
  %vm1615 = vmor %vm106, %vm122
  %vm1616 = vmor %vm107, %vm123
  %vm1617 = vmor %vm108, %vm124
  %vm1618 = vmor %vm109, %vm125
  %vm1619 = vmor %vm110, %vm126
  %vm1620 = vmor %vm111, %vm127
  %vm1621 = vmor %vm112, %vm128
  %vm1622 = vmor %vm113, %vm129
  %vm1623 = vmor %vm114, %vm130
  %vm1624 = vmpackc.low %vm1609, %vm1608
  %vm1625 = vmpackc.low %vm1611, %vm1610
  %vm1626 = vmpackc.low %vm1613, %vm1612
  %vm1627 = vmpackc.low %vm1615, %vm1614
  %vm1628 = vmpackc.low %vm1617, %vm1616
  %vm1629 = vmpackc.low %vm1619, %vm1618
  %vm1630 = vmpackc.low %vm1621, %vm1620
  %vm1631 = vmpackc.low %vm1623, %vm1622
  %v1632 = vsel %vm1624, 65537, 0
  %v1633 = vsel %vm1625, 65537, 0
  %v1634 = vsel %vm1626, 65537, 0
  %v1635 = vsel %vm1627, 65537, 0
  %v1636 = vsel %vm1628, 65537, 0
  %v1637 = vsel %vm1629, 65537, 0
  %v1638 = vsel %vm1630, 65537, 0
  %v1639 = vsel %vm1631, 65537, 0
  %v1640 = vperm.slane %v1632, 0
  %v1641 = vperm.slane %v1632, 4
  %v1642 = vperm.slane %v1633, 0
  %v1643 = vperm.slane %v1633, 4
  %v1644 = vperm.slane %v1634, 0
  %v1645 = vperm.slane %v1634, 4
  %v1646 = vperm.slane %v1635, 0
  %v1647 = vperm.slane %v1635, 4
  %v1648 = vperm.slane %v1636, 0
  %v1649 = vperm.slane %v1636, 4
  %v1650 = vperm.slane %v1637, 0
  %v1651 = vperm.slane %v1637, 4
  %v1652 = vperm.slane %v1638, 0
  %v1653 = vperm.slane %v1638, 4
  %v1654 = vperm.slane %v1639, 0
  %v1655 = vperm.slane %v1639, 4
  %v1656 = vunpack.c.l.b16 %v1640
  %v1657 = vunpack.c.h.b16 %v1640
  %v1658 = vunpack.c.l.b16 0
  %v1659 = vunpack.c.h.b16 0
  %vm1660 = vcmp.ne.s32.totalorder %v1656, %v1658
  %vm1661 = vcmp.ne.s32.totalorder %v1657, %v1659
  %vm1662 = vmpackc.low %vm1661, %vm1660
  %v1663 = vunpack.c.l.b16 %v1641
  %v1664 = vunpack.c.h.b16 %v1641
  %v1665 = vunpack.c.l.b16 0
  %v1666 = vunpack.c.h.b16 0
  %vm1667 = vcmp.ne.s32.totalorder %v1663, %v1665
  %vm1668 = vcmp.ne.s32.totalorder %v1664, %v1666
  %vm1669 = vmpackc.low %vm1668, %vm1667
  %v1670 = vunpack.c.l.b16 %v1642
  %v1671 = vunpack.c.h.b16 %v1642
  %v1672 = vunpack.c.l.b16 0
  %v1673 = vunpack.c.h.b16 0
  %vm1674 = vcmp.ne.s32.totalorder %v1670, %v1672
  %vm1675 = vcmp.ne.s32.totalorder %v1671, %v1673
  %vm1676 = vmpackc.low %vm1675, %vm1674
  %v1677 = vunpack.c.l.b16 %v1643
  %v1678 = vunpack.c.h.b16 %v1643
  %v1679 = vunpack.c.l.b16 0
  %v1680 = vunpack.c.h.b16 0
  %vm1681 = vcmp.ne.s32.totalorder %v1677, %v1679
  %vm1682 = vcmp.ne.s32.totalorder %v1678, %v1680
  %vm1683 = vmpackc.low %vm1682, %vm1681
  %v1684 = vunpack.c.l.b16 %v1644
  %v1685 = vunpack.c.h.b16 %v1644
  %v1686 = vunpack.c.l.b16 0
  %v1687 = vunpack.c.h.b16 0
  %vm1688 = vcmp.ne.s32.totalorder %v1684, %v1686
  %vm1689 = vcmp.ne.s32.totalorder %v1685, %v1687
  %vm1690 = vmpackc.low %vm1689, %vm1688
  %v1691 = vunpack.c.l.b16 %v1645
  %v1692 = vunpack.c.h.b16 %v1645
  %v1693 = vunpack.c.l.b16 0
  %v1694 = vunpack.c.h.b16 0
  %vm1695 = vcmp.ne.s32.totalorder %v1691, %v1693
  %vm1696 = vcmp.ne.s32.totalorder %v1692, %v1694
  %vm1697 = vmpackc.low %vm1696, %vm1695
  %v1698 = vunpack.c.l.b16 %v1646
  %v1699 = vunpack.c.h.b16 %v1646
  %v1700 = vunpack.c.l.b16 0
  %v1701 = vunpack.c.h.b16 0
  %vm1702 = vcmp.ne.s32.totalorder %v1698, %v1700
  %vm1703 = vcmp.ne.s32.totalorder %v1699, %v1701
  %vm1704 = vmpackc.low %vm1703, %vm1702
  %v1705 = vunpack.c.l.b16 %v1647
  %v1706 = vunpack.c.h.b16 %v1647
  %v1707 = vunpack.c.l.b16 0
  %v1708 = vunpack.c.h.b16 0
  %vm1709 = vcmp.ne.s32.totalorder %v1705, %v1707
  %vm1710 = vcmp.ne.s32.totalorder %v1706, %v1708
  %vm1711 = vmpackc.low %vm1710, %vm1709
  %v1712 = vunpack.c.l.b16 %v1648
  %v1713 = vunpack.c.h.b16 %v1648
  %v1714 = vunpack.c.l.b16 0
  %v1715 = vunpack.c.h.b16 0
  %vm1716 = vcmp.ne.s32.totalorder %v1712, %v1714
  %vm1717 = vcmp.ne.s32.totalorder %v1713, %v1715
  %vm1718 = vmpackc.low %vm1717, %vm1716
  %v1719 = vunpack.c.l.b16 %v1649
  %v1720 = vunpack.c.h.b16 %v1649
  %v1721 = vunpack.c.l.b16 0
  %v1722 = vunpack.c.h.b16 0
  %vm1723 = vcmp.ne.s32.totalorder %v1719, %v1721
  %vm1724 = vcmp.ne.s32.totalorder %v1720, %v1722
  %vm1725 = vmpackc.low %vm1724, %vm1723
  %v1726 = vunpack.c.l.b16 %v1650
  %v1727 = vunpack.c.h.b16 %v1650
  %v1728 = vunpack.c.l.b16 0
  %v1729 = vunpack.c.h.b16 0
  %vm1730 = vcmp.ne.s32.totalorder %v1726, %v1728
  %vm1731 = vcmp.ne.s32.totalorder %v1727, %v1729
  %vm1732 = vmpackc.low %vm1731, %vm1730
  %v1733 = vunpack.c.l.b16 %v1651
  %v1734 = vunpack.c.h.b16 %v1651
  %v1735 = vunpack.c.l.b16 0
  %v1736 = vunpack.c.h.b16 0
  %vm1737 = vcmp.ne.s32.totalorder %v1733, %v1735
  %vm1738 = vcmp.ne.s32.totalorder %v1734, %v1736
  %vm1739 = vmpackc.low %vm1738, %vm1737
  %v1740 = vunpack.c.l.b16 %v1652
  %v1741 = vunpack.c.h.b16 %v1652
  %v1742 = vunpack.c.l.b16 0
  %v1743 = vunpack.c.h.b16 0
  %vm1744 = vcmp.ne.s32.totalorder %v1740, %v1742
  %vm1745 = vcmp.ne.s32.totalorder %v1741, %v1743
  %vm1746 = vmpackc.low %vm1745, %vm1744
  %v1747 = vunpack.c.l.b16 %v1653
  %v1748 = vunpack.c.h.b16 %v1653
  %v1749 = vunpack.c.l.b16 0
  %v1750 = vunpack.c.h.b16 0
  %vm1751 = vcmp.ne.s32.totalorder %v1747, %v1749
  %vm1752 = vcmp.ne.s32.totalorder %v1748, %v1750
  %vm1753 = vmpackc.low %vm1752, %vm1751
  %v1754 = vunpack.c.l.b16 %v1654
  %v1755 = vunpack.c.h.b16 %v1654
  %v1756 = vunpack.c.l.b16 0
  %v1757 = vunpack.c.h.b16 0
  %vm1758 = vcmp.ne.s32.totalorder %v1754, %v1756
  %vm1759 = vcmp.ne.s32.totalorder %v1755, %v1757
  %vm1760 = vmpackc.low %vm1759, %vm1758
  %v1761 = vunpack.c.l.b16 %v1655
  %v1762 = vunpack.c.h.b16 %v1655
  %v1763 = vunpack.c.l.b16 0
  %v1764 = vunpack.c.h.b16 0
  %vm1765 = vcmp.ne.s32.totalorder %v1761, %v1763
  %vm1766 = vcmp.ne.s32.totalorder %v1762, %v1764
  %vm1767 = vmpackc.low %vm1766, %vm1765
  %v1768 = vsel %vm1662, 0, %v1574
  %v1769 = vsel %vm1669, 0, %v1575
  %v1770 = vsel %vm1676, 0, %v1576
  %v1771 = vsel %vm1683, 0, %v1577
  %v1772 = vsel %vm1690, 0, %v1578
  %v1773 = vsel %vm1697, 0, %v1579
  %v1774 = vsel %vm1704, 0, %v1580
  %v1775 = vsel %vm1711, 0, %v1581
  %v1776 = vsel %vm1718, 0, %v1582
  %v1777 = vsel %vm1725, 0, %v1583
  %v1778 = vsel %vm1732, 0, %v1584
  %v1779 = vsel %vm1739, 0, %v1585
  %v1780 = vsel %vm1746, 0, %v1586
  %v1781 = vsel %vm1753, 0, %v1587
  %v1782 = vsel %vm1760, 0, %v1588
  %v1783 = vsel %vm1767, 0, %v1606
  %1784 = vst [vmem:[#allocation1] ss:$4 sm:$0xff] %v14
  %s1785 = scalar_lea.vmem [#allocation1], 32
  %1786 = vst [vmem:[%s1785] ss:$4 sm:$0xff] %v15
  %v1787 = vld.sshfl [vmem:[#allocation1] sm:$0xff pattern:$0x73625140]
  %v1789 = vld.sshfl [vmem:[#allocation1 + $0x8] sm:$0xff pattern:$0x73625140]
  %v1791 = vld.sshfl [vmem:[#allocation1 + $0x10] sm:$0xff pattern:$0x73625140]
  %v1793 = vld.sshfl [vmem:[#allocation1 + $0x18] sm:$0xff pattern:$0x73625140]
  %v1795 = vld.sshfl [vmem:[#allocation1 + $0x20] sm:$0xff pattern:$0x73625140]
  %v1797 = vld.sshfl [vmem:[#allocation1 + $0x28] sm:$0xff pattern:$0x73625140]
  %v1799 = vld.sshfl [vmem:[#allocation1 + $0x30] sm:$0xff pattern:$0x73625140]
  %v1801 = vld.sshfl [vmem:[#allocation1 + $0x38] sm:$0xff pattern:$0x73625140]
  %1803 = vst [vmem:[#allocation1] ss:$4 sm:$0xff] %v16
  %1804 = vst [vmem:[%s1785] ss:$4 sm:$0xff] %v17
  %v1805 = vld.sshfl [vmem:[#allocation1] sm:$0xff pattern:$0x73625140]
  %v1807 = vld.sshfl [vmem:[#allocation1 + $0x8] sm:$0xff pattern:$0x73625140]
  %v1809 = vld.sshfl [vmem:[#allocation1 + $0x10] sm:$0xff pattern:$0x73625140]
  %v1811 = vld.sshfl [vmem:[#allocation1 + $0x18] sm:$0xff pattern:$0x73625140]
  %v1813 = vld.sshfl [vmem:[#allocation1 + $0x20] sm:$0xff pattern:$0x73625140]
  %v1815 = vld.sshfl [vmem:[#allocation1 + $0x28] sm:$0xff pattern:$0x73625140]
  %v1817 = vld.sshfl [vmem:[#allocation1 + $0x30] sm:$0xff pattern:$0x73625140]
  %v1819 = vld.sshfl [vmem:[#allocation1 + $0x38] sm:$0xff pattern:$0x73625140]
  %1821 = vrot.lane.b32.xlu0 %v1787, 96
  %v1822 = vpop.permute.xlu0 %1821
  %1823 = vrot.lane.b32.xlu0 %v1789, 96
  %v1824 = vpop.permute.xlu0 %1823
  %1825 = vrot.lane.b32.xlu0 %v1791, 96
  %v1826 = vpop.permute.xlu0 %1825
  %1827 = vrot.lane.b32.xlu0 %v1793, 96
  %v1828 = vpop.permute.xlu0 %1827
  %1829 = vrot.lane.b32.xlu0 %v1795, 96
  %v1830 = vpop.permute.xlu0 %1829
  %1831 = vrot.lane.b32.xlu0 %v1797, 96
  %v1832 = vpop.permute.xlu0 %1831
  %1833 = vrot.lane.b32.xlu0 %v1799, 96
  %v1834 = vpop.permute.xlu0 %1833
  %1835 = vrot.lane.b32.xlu0 %v1801, 96
  %v1836 = vpop.permute.xlu0 %1835
  %1837 = vrot.lane.b32.xlu0 %v1805, 96
  %v1838 = vpop.permute.xlu0 %1837
  %1839 = vrot.lane.b32.xlu0 %v1807, 96
  %v1840 = vpop.permute.xlu0 %1839
  %1841 = vrot.lane.b32.xlu0 %v1809, 96
  %v1842 = vpop.permute.xlu0 %1841
  %1843 = vrot.lane.b32.xlu0 %v1811, 96
  %v1844 = vpop.permute.xlu0 %1843
  %1845 = vrot.lane.b32.xlu0 %v1813, 96
  %v1846 = vpop.permute.xlu0 %1845
  %1847 = vrot.lane.b32.xlu0 %v1815, 96
  %v1848 = vpop.permute.xlu0 %1847
  %1849 = vrot.lane.b32.xlu0 %v1817, 96
  %v1850 = vpop.permute.xlu0 %1849
  %1851 = vrot.lane.b32.xlu0 %v1819, 96
  %v1852 = vpop.permute.xlu0 %1851
  %vm1853 = vcmask 785408
  %v1854 = vsel %vm1853, %v1822, %v1824
  %v1855 = vsel %vm1853, %v1824, %v1826
  %v1856 = vsel %vm1853, %v1826, %v1828
  %v1857 = vsel %vm1853, %v1828, %v1830
  %v1858 = vsel %vm1853, %v1830, %v1832
  %v1859 = vsel %vm1853, %v1832, %v1834
  %v1860 = vsel %vm1853, %v1834, %v1836
  %v1861 = vsel %vm1853, %v1836, %v1838
  %v1862 = vsel %vm1853, %v1838, %v1840
  %v1863 = vsel %vm1853, %v1840, %v1842
  %v1864 = vsel %vm1853, %v1842, %v1844
  %v1865 = vsel %vm1853, %v1844, %v1846
  %v1866 = vsel %vm1853, %v1846, %v1848
  %v1867 = vsel %vm1853, %v1848, %v1850
  %v1868 = vsel %vm1853, %v1850, %v1852
  %vm1884 = vcmask 785408
  %v1886 = vsel %vm1884, %v1852, 0
  %vm1888 = vmpackc.low %vm100, %vm99
  %vm1889 = vmpackc.low %vm102, %vm101
  %vm1890 = vmpackc.low %vm104, %vm103
  %vm1891 = vmpackc.low %vm106, %vm105
  %vm1892 = vmpackc.low %vm108, %vm107
  %vm1893 = vmpackc.low %vm110, %vm109
  %vm1894 = vmpackc.low %vm112, %vm111
  %vm1895 = vmpackc.low %vm114, %vm113
  %v1896 = vsel %vm1888, 65537, 0
  %v1897 = vsel %vm1889, 65537, 0
  %v1898 = vsel %vm1890, 65537, 0
  %v1899 = vsel %vm1891, 65537, 0
  %v1900 = vsel %vm1892, 65537, 0
  %v1901 = vsel %vm1893, 65537, 0
  %v1902 = vsel %vm1894, 65537, 0
  %v1903 = vsel %vm1895, 65537, 0
  %v1904 = vperm.slane %v1896, 0
  %v1905 = vperm.slane %v1896, 4
  %v1906 = vperm.slane %v1897, 0
  %v1907 = vperm.slane %v1897, 4
  %v1908 = vperm.slane %v1898, 0
  %v1909 = vperm.slane %v1898, 4
  %v1910 = vperm.slane %v1899, 0
  %v1911 = vperm.slane %v1899, 4
  %v1912 = vperm.slane %v1900, 0
  %v1913 = vperm.slane %v1900, 4
  %v1914 = vperm.slane %v1901, 0
  %v1915 = vperm.slane %v1901, 4
  %v1916 = vperm.slane %v1902, 0
  %v1917 = vperm.slane %v1902, 4
  %v1918 = vperm.slane %v1903, 0
  %v1919 = vperm.slane %v1903, 4
  %v1920 = vunpack.c.l.b16 %v1904
  %v1921 = vunpack.c.h.b16 %v1904
  %v1922 = vunpack.c.l.b16 0
  %v1923 = vunpack.c.h.b16 0
  %vm1924 = vcmp.ne.s32.totalorder %v1920, %v1922
  %vm1925 = vcmp.ne.s32.totalorder %v1921, %v1923
  %vm1926 = vmpackc.low %vm1925, %vm1924
  %v1927 = vunpack.c.l.b16 %v1905
  %v1928 = vunpack.c.h.b16 %v1905
  %v1929 = vunpack.c.l.b16 0
  %v1930 = vunpack.c.h.b16 0
  %vm1931 = vcmp.ne.s32.totalorder %v1927, %v1929
  %vm1932 = vcmp.ne.s32.totalorder %v1928, %v1930
  %vm1933 = vmpackc.low %vm1932, %vm1931
  %v1934 = vunpack.c.l.b16 %v1906
  %v1935 = vunpack.c.h.b16 %v1906
  %v1936 = vunpack.c.l.b16 0
  %v1937 = vunpack.c.h.b16 0
  %vm1938 = vcmp.ne.s32.totalorder %v1934, %v1936
  %vm1939 = vcmp.ne.s32.totalorder %v1935, %v1937
  %vm1940 = vmpackc.low %vm1939, %vm1938
  %v1941 = vunpack.c.l.b16 %v1907
  %v1942 = vunpack.c.h.b16 %v1907
  %v1943 = vunpack.c.l.b16 0
  %v1944 = vunpack.c.h.b16 0
  %vm1945 = vcmp.ne.s32.totalorder %v1941, %v1943
  %vm1946 = vcmp.ne.s32.totalorder %v1942, %v1944
  %vm1947 = vmpackc.low %vm1946, %vm1945
  %v1948 = vunpack.c.l.b16 %v1908
  %v1949 = vunpack.c.h.b16 %v1908
  %v1950 = vunpack.c.l.b16 0
  %v1951 = vunpack.c.h.b16 0
  %vm1952 = vcmp.ne.s32.totalorder %v1948, %v1950
  %vm1953 = vcmp.ne.s32.totalorder %v1949, %v1951
  %vm1954 = vmpackc.low %vm1953, %vm1952
  %v1955 = vunpack.c.l.b16 %v1909
  %v1956 = vunpack.c.h.b16 %v1909
  %v1957 = vunpack.c.l.b16 0
  %v1958 = vunpack.c.h.b16 0
  %vm1959 = vcmp.ne.s32.totalorder %v1955, %v1957
  %vm1960 = vcmp.ne.s32.totalorder %v1956, %v1958
  %vm1961 = vmpackc.low %vm1960, %vm1959
  %v1962 = vunpack.c.l.b16 %v1910
  %v1963 = vunpack.c.h.b16 %v1910
  %v1964 = vunpack.c.l.b16 0
  %v1965 = vunpack.c.h.b16 0
  %vm1966 = vcmp.ne.s32.totalorder %v1962, %v1964
  %vm1967 = vcmp.ne.s32.totalorder %v1963, %v1965
  %vm1968 = vmpackc.low %vm1967, %vm1966
  %v1969 = vunpack.c.l.b16 %v1911
  %v1970 = vunpack.c.h.b16 %v1911
  %v1971 = vunpack.c.l.b16 0
  %v1972 = vunpack.c.h.b16 0
  %vm1973 = vcmp.ne.s32.totalorder %v1969, %v1971
  %vm1974 = vcmp.ne.s32.totalorder %v1970, %v1972
  %vm1975 = vmpackc.low %vm1974, %vm1973
  %v1976 = vunpack.c.l.b16 %v1912
  %v1977 = vunpack.c.h.b16 %v1912
  %v1978 = vunpack.c.l.b16 0
  %v1979 = vunpack.c.h.b16 0
  %vm1980 = vcmp.ne.s32.totalorder %v1976, %v1978
  %vm1981 = vcmp.ne.s32.totalorder %v1977, %v1979
  %vm1982 = vmpackc.low %vm1981, %vm1980
  %v1983 = vunpack.c.l.b16 %v1913
  %v1984 = vunpack.c.h.b16 %v1913
  %v1985 = vunpack.c.l.b16 0
  %v1986 = vunpack.c.h.b16 0
  %vm1987 = vcmp.ne.s32.totalorder %v1983, %v1985
  %vm1988 = vcmp.ne.s32.totalorder %v1984, %v1986
  %vm1989 = vmpackc.low %vm1988, %vm1987
  %v1990 = vunpack.c.l.b16 %v1914
  %v1991 = vunpack.c.h.b16 %v1914
  %v1992 = vunpack.c.l.b16 0
  %v1993 = vunpack.c.h.b16 0
  %vm1994 = vcmp.ne.s32.totalorder %v1990, %v1992
  %vm1995 = vcmp.ne.s32.totalorder %v1991, %v1993
  %vm1996 = vmpackc.low %vm1995, %vm1994
  %v1997 = vunpack.c.l.b16 %v1915
  %v1998 = vunpack.c.h.b16 %v1915
  %v1999 = vunpack.c.l.b16 0
  %v2000 = vunpack.c.h.b16 0
  %vm2001 = vcmp.ne.s32.totalorder %v1997, %v1999
  %vm2002 = vcmp.ne.s32.totalorder %v1998, %v2000
  %vm2003 = vmpackc.low %vm2002, %vm2001
  %v2004 = vunpack.c.l.b16 %v1916
  %v2005 = vunpack.c.h.b16 %v1916
  %v2006 = vunpack.c.l.b16 0
  %v2007 = vunpack.c.h.b16 0
  %vm2008 = vcmp.ne.s32.totalorder %v2004, %v2006
  %vm2009 = vcmp.ne.s32.totalorder %v2005, %v2007
  %vm2010 = vmpackc.low %vm2009, %vm2008
  %v2011 = vunpack.c.l.b16 %v1917
  %v2012 = vunpack.c.h.b16 %v1917
  %v2013 = vunpack.c.l.b16 0
  %v2014 = vunpack.c.h.b16 0
  %vm2015 = vcmp.ne.s32.totalorder %v2011, %v2013
  %vm2016 = vcmp.ne.s32.totalorder %v2012, %v2014
  %vm2017 = vmpackc.low %vm2016, %vm2015
  %v2018 = vunpack.c.l.b16 %v1918
  %v2019 = vunpack.c.h.b16 %v1918
  %v2020 = vunpack.c.l.b16 0
  %v2021 = vunpack.c.h.b16 0
  %vm2022 = vcmp.ne.s32.totalorder %v2018, %v2020
  %vm2023 = vcmp.ne.s32.totalorder %v2019, %v2021
  %vm2024 = vmpackc.low %vm2023, %vm2022
  %v2025 = vunpack.c.l.b16 %v1919
  %v2026 = vunpack.c.h.b16 %v1919
  %v2027 = vunpack.c.l.b16 0
  %v2028 = vunpack.c.h.b16 0
  %vm2029 = vcmp.ne.s32.totalorder %v2025, %v2027
  %vm2030 = vcmp.ne.s32.totalorder %v2026, %v2028
  %vm2031 = vmpackc.low %vm2030, %vm2029
  %v2032 = vsel %vm1926, 0, %v1854
  %v2033 = vsel %vm1933, 0, %v1855
  %v2034 = vsel %vm1940, 0, %v1856
  %v2035 = vsel %vm1947, 0, %v1857
  %v2036 = vsel %vm1954, 0, %v1858
  %v2037 = vsel %vm1961, 0, %v1859
  %v2038 = vsel %vm1968, 0, %v1860
  %v2039 = vsel %vm1975, 0, %v1861
  %v2040 = vsel %vm1982, 0, %v1862
  %v2041 = vsel %vm1989, 0, %v1863
  %v2042 = vsel %vm1996, 0, %v1864
  %v2043 = vsel %vm2003, 0, %v1865
  %v2044 = vsel %vm2010, 0, %v1866
  %v2045 = vsel %vm2017, 0, %v1867
  %v2046 = vsel %vm2024, 0, %v1868
  %v2047 = vsel %vm2031, 0, %v1886
  %2048 = vst [vmem:[#allocation1] ss:$4 sm:$0xff] %v14
  %s2049 = scalar_lea.vmem [#allocation1], 32
  %2050 = vst [vmem:[%s2049] ss:$4 sm:$0xff] %v15
  %v2051 = vld.sshfl [vmem:[#allocation1] sm:$0xff pattern:$0x73625140]
  %v2053 = vld.sshfl [vmem:[#allocation1 + $0x8] sm:$0xff pattern:$0x73625140]
  %v2055 = vld.sshfl [vmem:[#allocation1 + $0x10] sm:$0xff pattern:$0x73625140]
  %v2057 = vld.sshfl [vmem:[#allocation1 + $0x18] sm:$0xff pattern:$0x73625140]
  %v2059 = vld.sshfl [vmem:[#allocation1 + $0x20] sm:$0xff pattern:$0x73625140]
  %v2061 = vld.sshfl [vmem:[#allocation1 + $0x28] sm:$0xff pattern:$0x73625140]
  %v2063 = vld.sshfl [vmem:[#allocation1 + $0x30] sm:$0xff pattern:$0x73625140]
  %v2065 = vld.sshfl [vmem:[#allocation1 + $0x38] sm:$0xff pattern:$0x73625140]
  %2067 = vst [vmem:[#allocation1] ss:$4 sm:$0xff] %v16
  %2068 = vst [vmem:[%s2049] ss:$4 sm:$0xff] %v17
  %v2069 = vld.sshfl [vmem:[#allocation1] sm:$0xff pattern:$0x73625140]
  %v2071 = vld.sshfl [vmem:[#allocation1 + $0x8] sm:$0xff pattern:$0x73625140]
  %v2073 = vld.sshfl [vmem:[#allocation1 + $0x10] sm:$0xff pattern:$0x73625140]
  %v2075 = vld.sshfl [vmem:[#allocation1 + $0x18] sm:$0xff pattern:$0x73625140]
  %v2077 = vld.sshfl [vmem:[#allocation1 + $0x20] sm:$0xff pattern:$0x73625140]
  %v2079 = vld.sshfl [vmem:[#allocation1 + $0x28] sm:$0xff pattern:$0x73625140]
  %v2081 = vld.sshfl [vmem:[#allocation1 + $0x30] sm:$0xff pattern:$0x73625140]
  %v2083 = vld.sshfl [vmem:[#allocation1 + $0x38] sm:$0xff pattern:$0x73625140]
  %2085 = vrot.lane.b32.xlu0 %v2051, 95
  %v2086 = vpop.permute.xlu0 %2085
  %2087 = vrot.lane.b32.xlu0 %v2053, 95
  %v2088 = vpop.permute.xlu0 %2087
  %2089 = vrot.lane.b32.xlu0 %v2055, 95
  %v2090 = vpop.permute.xlu0 %2089
  %2091 = vrot.lane.b32.xlu0 %v2057, 95
  %v2092 = vpop.permute.xlu0 %2091
  %2093 = vrot.lane.b32.xlu0 %v2059, 95
  %v2094 = vpop.permute.xlu0 %2093
  %2095 = vrot.lane.b32.xlu0 %v2061, 95
  %v2096 = vpop.permute.xlu0 %2095
  %2097 = vrot.lane.b32.xlu0 %v2063, 95
  %v2098 = vpop.permute.xlu0 %2097
  %2099 = vrot.lane.b32.xlu0 %v2065, 95
  %v2100 = vpop.permute.xlu0 %2099
  %2101 = vrot.lane.b32.xlu0 %v2069, 95
  %v2102 = vpop.permute.xlu0 %2101
  %2103 = vrot.lane.b32.xlu0 %v2071, 95
  %v2104 = vpop.permute.xlu0 %2103
  %2105 = vrot.lane.b32.xlu0 %v2073, 95
  %v2106 = vpop.permute.xlu0 %2105
  %2107 = vrot.lane.b32.xlu0 %v2075, 95
  %v2108 = vpop.permute.xlu0 %2107
  %2109 = vrot.lane.b32.xlu0 %v2077, 95
  %v2110 = vpop.permute.xlu0 %2109
  %2111 = vrot.lane.b32.xlu0 %v2079, 95
  %v2112 = vpop.permute.xlu0 %2111
  %2113 = vrot.lane.b32.xlu0 %v2081, 95
  %v2114 = vpop.permute.xlu0 %2113
  %2115 = vrot.lane.b32.xlu0 %v2083, 95
  %v2116 = vpop.permute.xlu0 %2115
  %vm2117 = vcmask 777216
  %v2118 = vsel %vm2117, %v2086, %v2088
  %v2119 = vsel %vm2117, %v2088, %v2090
  %v2120 = vsel %vm2117, %v2090, %v2092
  %v2121 = vsel %vm2117, %v2092, %v2094
  %v2122 = vsel %vm2117, %v2094, %v2096
  %v2123 = vsel %vm2117, %v2096, %v2098
  %v2124 = vsel %vm2117, %v2098, %v2100
  %v2125 = vsel %vm2117, %v2100, %v2102
  %v2126 = vsel %vm2117, %v2102, %v2104
  %v2127 = vsel %vm2117, %v2104, %v2106
  %v2128 = vsel %vm2117, %v2106, %v2108
  %v2129 = vsel %vm2117, %v2108, %v2110
  %v2130 = vsel %vm2117, %v2110, %v2112
  %v2131 = vsel %vm2117, %v2112, %v2114
  %v2132 = vsel %vm2117, %v2114, %v2116
  %vm2148 = vcmask 777216
  %v2150 = vsel %vm2148, %v2116, 0
  %vm2152 = vmor %vm99, %vm131
  %vm2153 = vmor %vm100, %vm132
  %vm2154 = vmor %vm101, %vm133
  %vm2155 = vmor %vm102, %vm134
  %vm2156 = vmor %vm103, %vm135
  %vm2157 = vmor %vm104, %vm136
  %vm2158 = vmor %vm105, %vm137
  %vm2159 = vmor %vm106, %vm138
  %vm2160 = vmor %vm107, %vm139
  %vm2161 = vmor %vm108, %vm140
  %vm2162 = vmor %vm109, %vm141
  %vm2163 = vmor %vm110, %vm142
  %vm2164 = vmor %vm111, %vm143
  %vm2165 = vmor %vm112, %vm144
  %vm2166 = vmor %vm113, %vm145
  %vm2167 = vmor %vm114, %vm146
  %vm2168 = vmpackc.low %vm2153, %vm2152
  %vm2169 = vmpackc.low %vm2155, %vm2154
  %vm2170 = vmpackc.low %vm2157, %vm2156
  %vm2171 = vmpackc.low %vm2159, %vm2158
  %vm2172 = vmpackc.low %vm2161, %vm2160
  %vm2173 = vmpackc.low %vm2163, %vm2162
  %vm2174 = vmpackc.low %vm2165, %vm2164
  %vm2175 = vmpackc.low %vm2167, %vm2166
  %v2176 = vsel %vm2168, 65537, 0
  %v2177 = vsel %vm2169, 65537, 0
  %v2178 = vsel %vm2170, 65537, 0
  %v2179 = vsel %vm2171, 65537, 0
  %v2180 = vsel %vm2172, 65537, 0
  %v2181 = vsel %vm2173, 65537, 0
  %v2182 = vsel %vm2174, 65537, 0
  %v2183 = vsel %vm2175, 65537, 0
  %v2184 = vperm.slane %v2176, 0
  %v2185 = vperm.slane %v2176, 4
  %v2186 = vperm.slane %v2177, 0
  %v2187 = vperm.slane %v2177, 4
  %v2188 = vperm.slane %v2178, 0
  %v2189 = vperm.slane %v2178, 4
  %v2190 = vperm.slane %v2179, 0
  %v2191 = vperm.slane %v2179, 4
  %v2192 = vperm.slane %v2180, 0
  %v2193 = vperm.slane %v2180, 4
  %v2194 = vperm.slane %v2181, 0
  %v2195 = vperm.slane %v2181, 4
  %v2196 = vperm.slane %v2182, 0
  %v2197 = vperm.slane %v2182, 4
  %v2198 = vperm.slane %v2183, 0
  %v2199 = vperm.slane %v2183, 4
  %v2200 = vunpack.c.l.b16 %v2184
  %v2201 = vunpack.c.h.b16 %v2184
  %v2202 = vunpack.c.l.b16 0
  %v2203 = vunpack.c.h.b16 0
  %vm2204 = vcmp.ne.s32.totalorder %v2200, %v2202
  %vm2205 = vcmp.ne.s32.totalorder %v2201, %v2203
  %vm2206 = vmpackc.low %vm2205, %vm2204
  %v2207 = vunpack.c.l.b16 %v2185
  %v2208 = vunpack.c.h.b16 %v2185
  %v2209 = vunpack.c.l.b16 0
  %v2210 = vunpack.c.h.b16 0
  %vm2211 = vcmp.ne.s32.totalorder %v2207, %v2209
  %vm2212 = vcmp.ne.s32.totalorder %v2208, %v2210
  %vm2213 = vmpackc.low %vm2212, %vm2211
  %v2214 = vunpack.c.l.b16 %v2186
  %v2215 = vunpack.c.h.b16 %v2186
  %v2216 = vunpack.c.l.b16 0
  %v2217 = vunpack.c.h.b16 0
  %vm2218 = vcmp.ne.s32.totalorder %v2214, %v2216
  %vm2219 = vcmp.ne.s32.totalorder %v2215, %v2217
  %vm2220 = vmpackc.low %vm2219, %vm2218
  %v2221 = vunpack.c.l.b16 %v2187
  %v2222 = vunpack.c.h.b16 %v2187
  %v2223 = vunpack.c.l.b16 0
  %v2224 = vunpack.c.h.b16 0
  %vm2225 = vcmp.ne.s32.totalorder %v2221, %v2223
  %vm2226 = vcmp.ne.s32.totalorder %v2222, %v2224
  %vm2227 = vmpackc.low %vm2226, %vm2225
  %v2228 = vunpack.c.l.b16 %v2188
  %v2229 = vunpack.c.h.b16 %v2188
  %v2230 = vunpack.c.l.b16 0
  %v2231 = vunpack.c.h.b16 0
  %vm2232 = vcmp.ne.s32.totalorder %v2228, %v2230
  %vm2233 = vcmp.ne.s32.totalorder %v2229, %v2231
  %vm2234 = vmpackc.low %vm2233, %vm2232
  %v2235 = vunpack.c.l.b16 %v2189
  %v2236 = vunpack.c.h.b16 %v2189
  %v2237 = vunpack.c.l.b16 0
  %v2238 = vunpack.c.h.b16 0
  %vm2239 = vcmp.ne.s32.totalorder %v2235, %v2237
  %vm2240 = vcmp.ne.s32.totalorder %v2236, %v2238
  %vm2241 = vmpackc.low %vm2240, %vm2239
  %v2242 = vunpack.c.l.b16 %v2190
  %v2243 = vunpack.c.h.b16 %v2190
  %v2244 = vunpack.c.l.b16 0
  %v2245 = vunpack.c.h.b16 0
  %vm2246 = vcmp.ne.s32.totalorder %v2242, %v2244
  %vm2247 = vcmp.ne.s32.totalorder %v2243, %v2245
  %vm2248 = vmpackc.low %vm2247, %vm2246
  %v2249 = vunpack.c.l.b16 %v2191
  %v2250 = vunpack.c.h.b16 %v2191
  %v2251 = vunpack.c.l.b16 0
  %v2252 = vunpack.c.h.b16 0
  %vm2253 = vcmp.ne.s32.totalorder %v2249, %v2251
  %vm2254 = vcmp.ne.s32.totalorder %v2250, %v2252
  %vm2255 = vmpackc.low %vm2254, %vm2253
  %v2256 = vunpack.c.l.b16 %v2192
  %v2257 = vunpack.c.h.b16 %v2192
  %v2258 = vunpack.c.l.b16 0
  %v2259 = vunpack.c.h.b16 0
  %vm2260 = vcmp.ne.s32.totalorder %v2256, %v2258
  %vm2261 = vcmp.ne.s32.totalorder %v2257, %v2259
  %vm2262 = vmpackc.low %vm2261, %vm2260
  %v2263 = vunpack.c.l.b16 %v2193
  %v2264 = vunpack.c.h.b16 %v2193
  %v2265 = vunpack.c.l.b16 0
  %v2266 = vunpack.c.h.b16 0
  %vm2267 = vcmp.ne.s32.totalorder %v2263, %v2265
  %vm2268 = vcmp.ne.s32.totalorder %v2264, %v2266
  %vm2269 = vmpackc.low %vm2268, %vm2267
  %v2270 = vunpack.c.l.b16 %v2194
  %v2271 = vunpack.c.h.b16 %v2194
  %v2272 = vunpack.c.l.b16 0
  %v2273 = vunpack.c.h.b16 0
  %vm2274 = vcmp.ne.s32.totalorder %v2270, %v2272
  %vm2275 = vcmp.ne.s32.totalorder %v2271, %v2273
  %vm2276 = vmpackc.low %vm2275, %vm2274
  %v2277 = vunpack.c.l.b16 %v2195
  %v2278 = vunpack.c.h.b16 %v2195
  %v2279 = vunpack.c.l.b16 0
  %v2280 = vunpack.c.h.b16 0
  %vm2281 = vcmp.ne.s32.totalorder %v2277, %v2279
  %vm2282 = vcmp.ne.s32.totalorder %v2278, %v2280
  %vm2283 = vmpackc.low %vm2282, %vm2281
  %v2284 = vunpack.c.l.b16 %v2196
  %v2285 = vunpack.c.h.b16 %v2196
  %v2286 = vunpack.c.l.b16 0
  %v2287 = vunpack.c.h.b16 0
  %vm2288 = vcmp.ne.s32.totalorder %v2284, %v2286
  %vm2289 = vcmp.ne.s32.totalorder %v2285, %v2287
  %vm2290 = vmpackc.low %vm2289, %vm2288
  %v2291 = vunpack.c.l.b16 %v2197
  %v2292 = vunpack.c.h.b16 %v2197
  %v2293 = vunpack.c.l.b16 0
  %v2294 = vunpack.c.h.b16 0
  %vm2295 = vcmp.ne.s32.totalorder %v2291, %v2293
  %vm2296 = vcmp.ne.s32.totalorder %v2292, %v2294
  %vm2297 = vmpackc.low %vm2296, %vm2295
  %v2298 = vunpack.c.l.b16 %v2198
  %v2299 = vunpack.c.h.b16 %v2198
  %v2300 = vunpack.c.l.b16 0
  %v2301 = vunpack.c.h.b16 0
  %vm2302 = vcmp.ne.s32.totalorder %v2298, %v2300
  %vm2303 = vcmp.ne.s32.totalorder %v2299, %v2301
  %vm2304 = vmpackc.low %vm2303, %vm2302
  %v2305 = vunpack.c.l.b16 %v2199
  %v2306 = vunpack.c.h.b16 %v2199
  %v2307 = vunpack.c.l.b16 0
  %v2308 = vunpack.c.h.b16 0
  %vm2309 = vcmp.ne.s32.totalorder %v2305, %v2307
  %vm2310 = vcmp.ne.s32.totalorder %v2306, %v2308
  %vm2311 = vmpackc.low %vm2310, %vm2309
  %v2312 = vsel %vm2206, 0, %v2118
  %v2313 = vsel %vm2213, 0, %v2119
  %v2314 = vsel %vm2220, 0, %v2120
  %v2315 = vsel %vm2227, 0, %v2121
  %v2316 = vsel %vm2234, 0, %v2122
  %v2317 = vsel %vm2241, 0, %v2123
  %v2318 = vsel %vm2248, 0, %v2124
  %v2319 = vsel %vm2255, 0, %v2125
  %v2320 = vsel %vm2262, 0, %v2126
  %v2321 = vsel %vm2269, 0, %v2127
  %v2322 = vsel %vm2276, 0, %v2128
  %v2323 = vsel %vm2283, 0, %v2129
  %v2324 = vsel %vm2290, 0, %v2130
  %v2325 = vsel %vm2297, 0, %v2131
  %v2326 = vsel %vm2304, 0, %v2132
  %v2327 = vsel %vm2311, 0, %v2150
  %v2344 = vrot.slane %v680, 6
  %v2345 = vrot.slane %v681, 6
  %v2346 = vrot.slane %v682, 6
  %v2347 = vrot.slane %v683, 6
  %v2348 = vrot.slane %v684, 6
  %v2349 = vrot.slane %v685, 6
  %v2350 = vrot.slane %v686, 6
  %v2351 = vrot.slane %v687, 6
  %v2352 = vrot.slane %v688, 6
  %v2353 = vrot.slane %v689, 6
  %v2354 = vrot.slane %v690, 6
  %v2355 = vrot.slane %v691, 6
  %v2356 = vrot.slane %v692, 6
  %v2357 = vrot.slane %v693, 6
  %v2358 = vrot.slane %v694, 6
  %v2359 = vrot.slane %v695, 6
  %v2376 = vrot.slane %v960, 4
  %v2377 = vrot.slane %v961, 4
  %v2378 = vrot.slane %v962, 4
  %v2379 = vrot.slane %v963, 4
  %v2380 = vrot.slane %v964, 4
  %v2381 = vrot.slane %v965, 4
  %v2382 = vrot.slane %v966, 4
  %v2383 = vrot.slane %v967, 4
  %v2384 = vrot.slane %v968, 4
  %v2385 = vrot.slane %v969, 4
  %v2386 = vrot.slane %v970, 4
  %v2387 = vrot.slane %v971, 4
  %v2388 = vrot.slane %v972, 4
  %v2389 = vrot.slane %v973, 4
  %v2390 = vrot.slane %v974, 4
  %v2391 = vrot.slane %v975, 4
  %v2408 = vrot.slane %v1224, 2
  %v2409 = vrot.slane %v1225, 2
  %v2410 = vrot.slane %v1226, 2
  %v2411 = vrot.slane %v1227, 2
  %v2412 = vrot.slane %v1228, 2
  %v2413 = vrot.slane %v1229, 2
  %v2414 = vrot.slane %v1230, 2
  %v2415 = vrot.slane %v1231, 2
  %v2416 = vrot.slane %v1232, 2
  %v2417 = vrot.slane %v1233, 2
  %v2418 = vrot.slane %v1234, 2
  %v2419 = vrot.slane %v1235, 2
  %v2420 = vrot.slane %v1236, 2
  %v2421 = vrot.slane %v1237, 2
  %v2422 = vrot.slane %v1238, 2
  %v2423 = vrot.slane %v1239, 2
  %2424 = vst [vmem:[#allocation1] ss:$4 sm:$0xff] %v14
  %s2425 = scalar_lea.vmem [#allocation1], 32
  %2426 = vst [vmem:[%s2425] ss:$4 sm:$0xff] %v15
  %v2427 = vld.sshfl [vmem:[#allocation1] sm:$0xff pattern:$0x73625140]
  %v2428 = vld.sshfl [vmem:[#allocation1 + $0x8] sm:$0xff pattern:$0x73625140]
  %v2429 = vld.sshfl [vmem:[#allocation1 + $0x10] sm:$0xff pattern:$0x73625140]
  %v2430 = vld.sshfl [vmem:[#allocation1 + $0x18] sm:$0xff pattern:$0x73625140]
  %v2431 = vld.sshfl [vmem:[#allocation1 + $0x20] sm:$0xff pattern:$0x73625140]
  %v2432 = vld.sshfl [vmem:[#allocation1 + $0x28] sm:$0xff pattern:$0x73625140]
  %v2433 = vld.sshfl [vmem:[#allocation1 + $0x30] sm:$0xff pattern:$0x73625140]
  %v2434 = vld.sshfl [vmem:[#allocation1 + $0x38] sm:$0xff pattern:$0x73625140]
  %2435 = vst [vmem:[#allocation1] ss:$4 sm:$0xff] %v16
  %2436 = vst [vmem:[%s2425] ss:$4 sm:$0xff] %v17
  %v2437 = vld.sshfl [vmem:[#allocation1] sm:$0xff pattern:$0x73625140]
  %v2438 = vld.sshfl [vmem:[#allocation1 + $0x8] sm:$0xff pattern:$0x73625140]
  %v2439 = vld.sshfl [vmem:[#allocation1 + $0x10] sm:$0xff pattern:$0x73625140]
  %v2440 = vld.sshfl [vmem:[#allocation1 + $0x18] sm:$0xff pattern:$0x73625140]
  %v2441 = vld.sshfl [vmem:[#allocation1 + $0x20] sm:$0xff pattern:$0x73625140]
  %v2442 = vld.sshfl [vmem:[#allocation1 + $0x28] sm:$0xff pattern:$0x73625140]
  %v2443 = vld.sshfl [vmem:[#allocation1 + $0x30] sm:$0xff pattern:$0x73625140]
  %v2444 = vld.sshfl [vmem:[#allocation1 + $0x38] sm:$0xff pattern:$0x73625140]
  %v2461 = vrot.slane %v1488, 6
  %v2462 = vrot.slane %v1489, 6
  %v2463 = vrot.slane %v1490, 6
  %v2464 = vrot.slane %v1491, 6
  %v2465 = vrot.slane %v1492, 6
  %v2466 = vrot.slane %v1493, 6
  %v2467 = vrot.slane %v1494, 6
  %v2468 = vrot.slane %v1495, 6
  %v2469 = vrot.slane %v1496, 6
  %v2470 = vrot.slane %v1497, 6
  %v2471 = vrot.slane %v1498, 6
  %v2472 = vrot.slane %v1499, 6
  %v2473 = vrot.slane %v1500, 6
  %v2474 = vrot.slane %v1501, 6
  %v2475 = vrot.slane %v1502, 6
  %v2476 = vrot.slane %v1503, 6
  %v2493 = vrot.slane %v1768, 4
  %v2494 = vrot.slane %v1769, 4
  %v2495 = vrot.slane %v1770, 4
  %v2496 = vrot.slane %v1771, 4
  %v2497 = vrot.slane %v1772, 4
  %v2498 = vrot.slane %v1773, 4
  %v2499 = vrot.slane %v1774, 4
  %v2500 = vrot.slane %v1775, 4
  %v2501 = vrot.slane %v1776, 4
  %v2502 = vrot.slane %v1777, 4
  %v2503 = vrot.slane %v1778, 4
  %v2504 = vrot.slane %v1779, 4
  %v2505 = vrot.slane %v1780, 4
  %v2506 = vrot.slane %v1781, 4
  %v2507 = vrot.slane %v1782, 4
  %v2508 = vrot.slane %v1783, 4
  %v2525 = vrot.slane %v2032, 2
  %v2526 = vrot.slane %v2033, 2
  %v2527 = vrot.slane %v2034, 2
  %v2528 = vrot.slane %v2035, 2
  %v2529 = vrot.slane %v2036, 2
  %v2530 = vrot.slane %v2037, 2
  %v2531 = vrot.slane %v2038, 2
  %v2532 = vrot.slane %v2039, 2
  %v2533 = vrot.slane %v2040, 2
  %v2534 = vrot.slane %v2041, 2
  %v2535 = vrot.slane %v2042, 2
  %v2536 = vrot.slane %v2043, 2
  %v2537 = vrot.slane %v2044, 2
  %v2538 = vrot.slane %v2045, 2
  %v2539 = vrot.slane %v2046, 2
  %v2540 = vrot.slane %v2047, 2
  %vm2541 = vcmask 1041408
  %v2544 = vsel %vm2541, %v416, %v2344
  %v2547 = vsel %vm2541, %v417, %v2345
  %v2550 = vsel %vm2541, %v418, %v2346
  %v2553 = vsel %vm2541, %v419, %v2347
  %v2556 = vsel %vm2541, %v420, %v2348
  %v2559 = vsel %vm2541, %v421, %v2349
  %v2562 = vsel %vm2541, %v422, %v2350
  %v2565 = vsel %vm2541, %v423, %v2351
  %v2568 = vsel %vm2541, %v424, %v2352
  %v2571 = vsel %vm2541, %v425, %v2353
  %v2574 = vsel %vm2541, %v426, %v2354
  %v2577 = vsel %vm2541, %v427, %v2355
  %v2580 = vsel %vm2541, %v428, %v2356
  %v2583 = vsel %vm2541, %v429, %v2357
  %v2586 = vsel %vm2541, %v430, %v2358
  %v2589 = vsel %vm2541, %v431, %v2359
  %vm2590 = vcmask 1043456
  %v2592 = vsel %vm2590, %v2544, %v2376
  %v2594 = vsel %vm2590, %v2547, %v2377
  %v2596 = vsel %vm2590, %v2550, %v2378
  %v2598 = vsel %vm2590, %v2553, %v2379
  %v2600 = vsel %vm2590, %v2556, %v2380
  %v2602 = vsel %vm2590, %v2559, %v2381
  %v2604 = vsel %vm2590, %v2562, %v2382
  %v2606 = vsel %vm2590, %v2565, %v2383
  %v2608 = vsel %vm2590, %v2568, %v2384
  %v2610 = vsel %vm2590, %v2571, %v2385
  %v2612 = vsel %vm2590, %v2574, %v2386
  %v2614 = vsel %vm2590, %v2577, %v2387
  %v2616 = vsel %vm2590, %v2580, %v2388
  %v2618 = vsel %vm2590, %v2583, %v2389
  %v2620 = vsel %vm2590, %v2586, %v2390
  %v2622 = vsel %vm2590, %v2589, %v2391
  %vm2623 = vcmask 1045504
  %v2625 = vsel %vm2623, %v2592, %v2408
  %v2628 = vsel %vm2623, %v2594, %v2409
  %v2631 = vsel %vm2623, %v2596, %v2410
  %v2634 = vsel %vm2623, %v2598, %v2411
  %v2637 = vsel %vm2623, %v2600, %v2412
  %v2640 = vsel %vm2623, %v2602, %v2413
  %v2643 = vsel %vm2623, %v2604, %v2414
  %v2646 = vsel %vm2623, %v2606, %v2415
  %v2649 = vsel %vm2623, %v2608, %v2416
  %v2652 = vsel %vm2623, %v2610, %v2417
  %v2655 = vsel %vm2623, %v2612, %v2418
  %v2658 = vsel %vm2623, %v2614, %v2419
  %v2661 = vsel %vm2623, %v2616, %v2420
  %v2664 = vsel %vm2623, %v2618, %v2421
  %v2667 = vsel %vm2623, %v2620, %v2422
  %v2670 = vsel %vm2623, %v2622, %v2423
  %v2673 = vsel %vm2541, %v2427, %v2461
  %v2675 = vsel %vm2541, %v2428, %v2462
  %v2677 = vsel %vm2541, %v2429, %v2463
  %v2679 = vsel %vm2541, %v2430, %v2464
  %v2681 = vsel %vm2541, %v2431, %v2465
  %v2683 = vsel %vm2541, %v2432, %v2466
  %v2685 = vsel %vm2541, %v2433, %v2467
  %v2687 = vsel %vm2541, %v2434, %v2468
  %v2689 = vsel %vm2541, %v2437, %v2469
  %v2691 = vsel %vm2541, %v2438, %v2470
  %v2693 = vsel %vm2541, %v2439, %v2471
  %v2695 = vsel %vm2541, %v2440, %v2472
  %v2697 = vsel %vm2541, %v2441, %v2473
  %v2699 = vsel %vm2541, %v2442, %v2474
  %v2701 = vsel %vm2541, %v2443, %v2475
  %v2703 = vsel %vm2541, %v2444, %v2476
  %v2705 = vsel %vm2590, %v2673, %v2493
  %v2707 = vsel %vm2590, %v2675, %v2494
  %v2709 = vsel %vm2590, %v2677, %v2495
  %v2711 = vsel %vm2590, %v2679, %v2496
  %v2713 = vsel %vm2590, %v2681, %v2497
  %v2715 = vsel %vm2590, %v2683, %v2498
  %v2717 = vsel %vm2590, %v2685, %v2499
  %v2719 = vsel %vm2590, %v2687, %v2500
  %v2721 = vsel %vm2590, %v2689, %v2501
  %v2723 = vsel %vm2590, %v2691, %v2502
  %v2725 = vsel %vm2590, %v2693, %v2503
  %v2727 = vsel %vm2590, %v2695, %v2504
  %v2729 = vsel %vm2590, %v2697, %v2505
  %v2731 = vsel %vm2590, %v2699, %v2506
  %v2733 = vsel %vm2590, %v2701, %v2507
  %v2735 = vsel %vm2590, %v2703, %v2508
  %v2737 = vsel %vm2623, %v2705, %v2525
  %v2740 = vsel %vm2623, %v2707, %v2526
  %v2743 = vsel %vm2623, %v2709, %v2527
  %v2746 = vsel %vm2623, %v2711, %v2528
  %v2749 = vsel %vm2623, %v2713, %v2529
  %v2752 = vsel %vm2623, %v2715, %v2530
  %v2755 = vsel %vm2623, %v2717, %v2531
  %v2758 = vsel %vm2623, %v2719, %v2532
  %v2761 = vsel %vm2623, %v2721, %v2533
  %v2764 = vsel %vm2623, %v2723, %v2534
  %v2767 = vsel %vm2623, %v2725, %v2535
  %v2770 = vsel %vm2623, %v2727, %v2536
  %v2773 = vsel %vm2623, %v2729, %v2537
  %v2776 = vsel %vm2623, %v2731, %v2538
  %v2779 = vsel %vm2623, %v2733, %v2539
  %v2782 = vsel %vm2623, %v2735, %v2540
  %v2784 = vld [vmem:[%s1] sm:$0xf]
  %v2785 = vld [vmem:[%s1 + $0x4] sm:$0x3]
  %v2788 = vunpack.c.l.b16 %v2784
  %v2789 = vunpack.c.l.b16 %v2785
  %v2790 = vpack.c.b16 %v2789, %v2788
  %vm2791 = vcmask 293888
  %v2793 = vsel %vm2791, %v2790, 0
  %v2796 = vsel %vm2541, %v2312, 0
  %v2799 = vsel %vm2541, %v2313, 0
  %v2802 = vsel %vm2541, %v2314, 0
  %v2805 = vsel %vm2541, %v2315, 0
  %v2808 = vsel %vm2541, %v2316, 0
  %v2811 = vsel %vm2541, %v2317, 0
  %v2814 = vsel %vm2541, %v2318, 0
  %v2817 = vsel %vm2541, %v2319, 0
  %v2820 = vsel %vm2541, %v2320, 0
  %v2823 = vsel %vm2541, %v2321, 0
  %v2826 = vsel %vm2541, %v2322, 0
  %v2829 = vsel %vm2541, %v2323, 0
  %v2832 = vsel %vm2541, %v2324, 0
  %v2835 = vsel %vm2541, %v2325, 0
  %v2838 = vsel %vm2541, %v2326, 0
  %v2841 = vsel %vm2541, %v2327, 0
  %2843 = vmatpush.bf16.msra.mxu0 0
  %2844 = vmatpush.bf16.msra.mxu0 0
  %2845 = vmatpush.bf16.msra.mxu0 0
  %2846 = vmatpush.bf16.msra.mxu0 0
  %2847 = vmatpush.bf16.msra.mxu0 0
  %2848 = vmatpush.bf16.msra.mxu0 %v2796
  %2849 = vmatpush.bf16.msra.mxu0 %v2737
  %2850 = vmatpush.bf16.msra.mxu0 %v2625
  %2851 = vmatmul.bf16.gmra.mxu0 %v2793
  %v2852 = vpop.f32.mrf.mxu0
  %v2853 = vadd.f32 0.0, %v2852
  %v2854 = vpop.f32.mrf.mxu0
  %v2855 = vadd.f32 0.0, %v2854
  %2856 = vdwg.mxu0
  %2857 = vmatpush.bf16.msra.mxu0 0
  %2858 = vmatpush.bf16.msra.mxu0 0
  %2859 = vmatpush.bf16.msra.mxu0 0
  %2860 = vmatpush.bf16.msra.mxu0 0
  %2861 = vmatpush.bf16.msra.mxu0 0
  %2862 = vmatpush.bf16.msra.mxu0 %v2799
  %2863 = vmatpush.bf16.msra.mxu0 %v2740
  %2864 = vmatpush.bf16.msra.mxu0 %v2628
  %2865 = vmatmul.bf16.gmra.mxu0 %v2793
  %v2866 = vpop.f32.mrf.mxu0
  %v2867 = vadd.f32 0.0, %v2866
  %v2868 = vpop.f32.mrf.mxu0
  %v2869 = vadd.f32 0.0, %v2868
  %2870 = vdwg.mxu0
  %2871 = vmatpush.bf16.msra.mxu0 0
  %2872 = vmatpush.bf16.msra.mxu0 0
  %2873 = vmatpush.bf16.msra.mxu0 0
  %2874 = vmatpush.bf16.msra.mxu0 0
  %2875 = vmatpush.bf16.msra.mxu0 0
  %2876 = vmatpush.bf16.msra.mxu0 %v2802
  %2877 = vmatpush.bf16.msra.mxu0 %v2743
  %2878 = vmatpush.bf16.msra.mxu0 %v2631
  %2879 = vmatmul.bf16.gmra.mxu0 %v2793
  %v2880 = vpop.f32.mrf.mxu0
  %v2881 = vadd.f32 0.0, %v2880
  %v2882 = vpop.f32.mrf.mxu0
  %v2883 = vadd.f32 0.0, %v2882
  %2884 = vdwg.mxu0
  %2885 = vmatpush.bf16.msra.mxu0 0
  %2886 = vmatpush.bf16.msra.mxu0 0
  %2887 = vmatpush.bf16.msra.mxu0 0
  %2888 = vmatpush.bf16.msra.mxu0 0
  %2889 = vmatpush.bf16.msra.mxu0 0
  %2890 = vmatpush.bf16.msra.mxu0 %v2805
  %2891 = vmatpush.bf16.msra.mxu0 %v2746
  %2892 = vmatpush.bf16.msra.mxu0 %v2634
  %2893 = vmatmul.bf16.gmra.mxu0 %v2793
  %v2894 = vpop.f32.mrf.mxu0
  %v2895 = vadd.f32 0.0, %v2894
  %v2896 = vpop.f32.mrf.mxu0
  %v2897 = vadd.f32 0.0, %v2896
  %2898 = vdwg.mxu0
  %2899 = vmatpush.bf16.msra.mxu0 0
  %2900 = vmatpush.bf16.msra.mxu0 0
  %2901 = vmatpush.bf16.msra.mxu0 0
  %2902 = vmatpush.bf16.msra.mxu0 0
  %2903 = vmatpush.bf16.msra.mxu0 0
  %2904 = vmatpush.bf16.msra.mxu0 %v2808
  %2905 = vmatpush.bf16.msra.mxu0 %v2749
  %2906 = vmatpush.bf16.msra.mxu0 %v2637
  %2907 = vmatmul.bf16.gmra.mxu0 %v2793
  %v2908 = vpop.f32.mrf.mxu0
  %v2909 = vadd.f32 0.0, %v2908
  %v2910 = vpop.f32.mrf.mxu0
  %v2911 = vadd.f32 0.0, %v2910
  %2912 = vdwg.mxu0
  %2913 = vmatpush.bf16.msra.mxu0 0
  %2914 = vmatpush.bf16.msra.mxu0 0
  %2915 = vmatpush.bf16.msra.mxu0 0
  %2916 = vmatpush.bf16.msra.mxu0 0
  %2917 = vmatpush.bf16.msra.mxu0 0
  %2918 = vmatpush.bf16.msra.mxu0 %v2811
  %2919 = vmatpush.bf16.msra.mxu0 %v2752
  %2920 = vmatpush.bf16.msra.mxu0 %v2640
  %2921 = vmatmul.bf16.gmra.mxu0 %v2793
  %v2922 = vpop.f32.mrf.mxu0
  %v2923 = vadd.f32 0.0, %v2922
  %v2924 = vpop.f32.mrf.mxu0
  %v2925 = vadd.f32 0.0, %v2924
  %2926 = vdwg.mxu0
  %2927 = vmatpush.bf16.msra.mxu0 0
  %2928 = vmatpush.bf16.msra.mxu0 0
  %2929 = vmatpush.bf16.msra.mxu0 0
  %2930 = vmatpush.bf16.msra.mxu0 0
  %2931 = vmatpush.bf16.msra.mxu0 0
  %2932 = vmatpush.bf16.msra.mxu0 %v2814
  %2933 = vmatpush.bf16.msra.mxu0 %v2755
  %2934 = vmatpush.bf16.msra.mxu0 %v2643
  %2935 = vmatmul.bf16.gmra.mxu0 %v2793
  %v2936 = vpop.f32.mrf.mxu0
  %v2937 = vadd.f32 0.0, %v2936
  %v2938 = vpop.f32.mrf.mxu0
  %v2939 = vadd.f32 0.0, %v2938
  %2940 = vdwg.mxu0
  %2941 = vmatpush.bf16.msra.mxu0 0
  %2942 = vmatpush.bf16.msra.mxu0 0
  %2943 = vmatpush.bf16.msra.mxu0 0
  %2944 = vmatpush.bf16.msra.mxu0 0
  %2945 = vmatpush.bf16.msra.mxu0 0
  %2946 = vmatpush.bf16.msra.mxu0 %v2817
  %2947 = vmatpush.bf16.msra.mxu0 %v2758
  %2948 = vmatpush.bf16.msra.mxu0 %v2646
  %2949 = vmatmul.bf16.gmra.mxu0 %v2793
  %v2950 = vpop.f32.mrf.mxu0
  %v2951 = vadd.f32 0.0, %v2950
  %v2952 = vpop.f32.mrf.mxu0
  %v2953 = vadd.f32 0.0, %v2952
  %2954 = vdwg.mxu0
  %2955 = vmatpush.bf16.msra.mxu0 0
  %2956 = vmatpush.bf16.msra.mxu0 0
  %2957 = vmatpush.bf16.msra.mxu0 0
  %2958 = vmatpush.bf16.msra.mxu0 0
  %2959 = vmatpush.bf16.msra.mxu0 0
  %2960 = vmatpush.bf16.msra.mxu0 %v2820
  %2961 = vmatpush.bf16.msra.mxu0 %v2761
  %2962 = vmatpush.bf16.msra.mxu0 %v2649
  %2963 = vmatmul.bf16.gmra.mxu0 %v2793
  %v2964 = vpop.f32.mrf.mxu0
  %v2965 = vadd.f32 0.0, %v2964
  %v2966 = vpop.f32.mrf.mxu0
  %v2967 = vadd.f32 0.0, %v2966
  %2968 = vdwg.mxu0
  %2969 = vmatpush.bf16.msra.mxu0 0
  %2970 = vmatpush.bf16.msra.mxu0 0
  %2971 = vmatpush.bf16.msra.mxu0 0
  %2972 = vmatpush.bf16.msra.mxu0 0
  %2973 = vmatpush.bf16.msra.mxu0 0
  %2974 = vmatpush.bf16.msra.mxu0 %v2823
  %2975 = vmatpush.bf16.msra.mxu0 %v2764
  %2976 = vmatpush.bf16.msra.mxu0 %v2652
  %2977 = vmatmul.bf16.gmra.mxu0 %v2793
  %v2978 = vpop.f32.mrf.mxu0
  %v2979 = vadd.f32 0.0, %v2978
  %v2980 = vpop.f32.mrf.mxu0
  %v2981 = vadd.f32 0.0, %v2980
  %2982 = vdwg.mxu0
  %2983 = vmatpush.bf16.msra.mxu0 0
  %2984 = vmatpush.bf16.msra.mxu0 0
  %2985 = vmatpush.bf16.msra.mxu0 0
  %2986 = vmatpush.bf16.msra.mxu0 0
  %2987 = vmatpush.bf16.msra.mxu0 0
  %2988 = vmatpush.bf16.msra.mxu0 %v2826
  %2989 = vmatpush.bf16.msra.mxu0 %v2767
  %2990 = vmatpush.bf16.msra.mxu0 %v2655
  %2991 = vmatmul.bf16.gmra.mxu0 %v2793
  %v2992 = vpop.f32.mrf.mxu0
  %v2993 = vadd.f32 0.0, %v2992
  %v2994 = vpop.f32.mrf.mxu0
  %v2995 = vadd.f32 0.0, %v2994
  %2996 = vdwg.mxu0
  %2997 = vmatpush.bf16.msra.mxu0 0
  %2998 = vmatpush.bf16.msra.mxu0 0
  %2999 = vmatpush.bf16.msra.mxu0 0
  %3000 = vmatpush.bf16.msra.mxu0 0
  %3001 = vmatpush.bf16.msra.mxu0 0
  %3002 = vmatpush.bf16.msra.mxu0 %v2829
  %3003 = vmatpush.bf16.msra.mxu0 %v2770
  %3004 = vmatpush.bf16.msra.mxu0 %v2658
  %3005 = vmatmul.bf16.gmra.mxu0 %v2793
  %v3006 = vpop.f32.mrf.mxu0
  %v3007 = vadd.f32 0.0, %v3006
  %v3008 = vpop.f32.mrf.mxu0
  %v3009 = vadd.f32 0.0, %v3008
  %3010 = vdwg.mxu0
  %3011 = vmatpush.bf16.msra.mxu0 0
  %3012 = vmatpush.bf16.msra.mxu0 0
  %3013 = vmatpush.bf16.msra.mxu0 0
  %3014 = vmatpush.bf16.msra.mxu0 0
  %3015 = vmatpush.bf16.msra.mxu0 0
  %3016 = vmatpush.bf16.msra.mxu0 %v2832
  %3017 = vmatpush.bf16.msra.mxu0 %v2773
  %3018 = vmatpush.bf16.msra.mxu0 %v2661
  %3019 = vmatmul.bf16.gmra.mxu0 %v2793
  %v3020 = vpop.f32.mrf.mxu0
  %v3021 = vadd.f32 0.0, %v3020
  %v3022 = vpop.f32.mrf.mxu0
  %v3023 = vadd.f32 0.0, %v3022
  %3024 = vdwg.mxu0
  %3025 = vmatpush.bf16.msra.mxu0 0
  %3026 = vmatpush.bf16.msra.mxu0 0
  %3027 = vmatpush.bf16.msra.mxu0 0
  %3028 = vmatpush.bf16.msra.mxu0 0
  %3029 = vmatpush.bf16.msra.mxu0 0
  %3030 = vmatpush.bf16.msra.mxu0 %v2835
  %3031 = vmatpush.bf16.msra.mxu0 %v2776
  %3032 = vmatpush.bf16.msra.mxu0 %v2664
  %3033 = vmatmul.bf16.gmra.mxu0 %v2793
  %v3034 = vpop.f32.mrf.mxu0
  %v3035 = vadd.f32 0.0, %v3034
  %v3036 = vpop.f32.mrf.mxu0
  %v3037 = vadd.f32 0.0, %v3036
  %3038 = vdwg.mxu0
  %3039 = vmatpush.bf16.msra.mxu0 0
  %3040 = vmatpush.bf16.msra.mxu0 0
  %3041 = vmatpush.bf16.msra.mxu0 0
  %3042 = vmatpush.bf16.msra.mxu0 0
  %3043 = vmatpush.bf16.msra.mxu0 0
  %3044 = vmatpush.bf16.msra.mxu0 %v2838
  %3045 = vmatpush.bf16.msra.mxu0 %v2779
  %3046 = vmatpush.bf16.msra.mxu0 %v2667
  %3047 = vmatmul.bf16.gmra.mxu0 %v2793
  %v3048 = vpop.f32.mrf.mxu0
  %v3049 = vadd.f32 0.0, %v3048
  %v3050 = vpop.f32.mrf.mxu0
  %v3051 = vadd.f32 0.0, %v3050
  %3052 = vdwg.mxu0
  %3053 = vmatpush.bf16.msra.mxu0 0
  %3054 = vmatpush.bf16.msra.mxu0 0
  %3055 = vmatpush.bf16.msra.mxu0 0
  %3056 = vmatpush.bf16.msra.mxu0 0
  %3057 = vmatpush.bf16.msra.mxu0 0
  %3058 = vmatpush.bf16.msra.mxu0 %v2841
  %3059 = vmatpush.bf16.msra.mxu0 %v2782
  %3060 = vmatpush.bf16.msra.mxu0 %v2670
  %3061 = vmatmul.bf16.gmra.mxu0 %v2793
  %v3062 = vpop.f32.mrf.mxu0
  %v3063 = vadd.f32 0.0, %v3062
  %v3064 = vpop.f32.mrf.mxu0
  %v3065 = vadd.f32 0.0, %v3064
  %3066 = vdwg.mxu0
  %v3067 = vtanh.pop %v2853
  %v3068 = vtanh.pop %v2867
  %v3069 = vtanh.pop %v2881
  %v3070 = vtanh.pop %v2895
  %v3071 = vtanh.pop %v2909
  %v3072 = vtanh.pop %v2923
  %v3073 = vtanh.pop %v2937
  %v3074 = vtanh.pop %v2951
  %v3075 = vtanh.pop %v2965
  %v3076 = vtanh.pop %v2979
  %v3077 = vtanh.pop %v2993
  %v3078 = vtanh.pop %v3007
  %v3079 = vtanh.pop %v3021
  %v3080 = vtanh.pop %v3035
  %v3081 = vtanh.pop %v3049
  %v3082 = vtanh.pop %v3063
  %v3083 = vtanh.pop %v2855
  %v3084 = vtanh.pop %v2869
  %v3085 = vtanh.pop %v2883
  %v3086 = vtanh.pop %v2897
  %v3087 = vtanh.pop %v2911
  %v3088 = vtanh.pop %v2925
  %v3089 = vtanh.pop %v2939
  %v3090 = vtanh.pop %v2953
  %v3091 = vtanh.pop %v2967
  %v3092 = vtanh.pop %v2981
  %v3093 = vtanh.pop %v2995
  %v3094 = vtanh.pop %v3009
  %v3095 = vtanh.pop %v3023
  %v3096 = vtanh.pop %v3037
  %v3097 = vtanh.pop %v3051
  %v3098 = vtanh.pop %v3065
  %3099 = vst [vmem:[%s2] sm:$0xff] %v3067
  %3100 = vst [vmem:[%s2 + $0x8] sm:$0xff] %v3068
  %3101 = vst [vmem:[%s2 + $0x10] sm:$0xff] %v3069
  %3102 = vst [vmem:[%s2 + $0x18] sm:$0xff] %v3070
  %3103 = vst [vmem:[%s2 + $0x20] sm:$0xff] %v3071
  %3104 = vst [vmem:[%s2 + $0x28] sm:$0xff] %v3072
  %3105 = vst [vmem:[%s2 + $0x30] sm:$0xff] %v3073
  %3106 = vst [vmem:[%s2 + $0x38] sm:$0xff] %v3074
  %3107 = vst [vmem:[%s2 + $0x40] sm:$0xff] %v3075
  %3108 = vst [vmem:[%s2 + $0x48] sm:$0xff] %v3076
  %3109 = vst [vmem:[%s2 + $0x50] sm:$0xff] %v3077
  %3110 = vst [vmem:[%s2 + $0x58] sm:$0xff] %v3078
  %3111 = vst [vmem:[%s2 + $0x60] sm:$0xff] %v3079
  %3112 = vst [vmem:[%s2 + $0x68] sm:$0xff] %v3080
  %3113 = vst [vmem:[%s2 + $0x70] sm:$0xff] %v3081
  %3114 = vst [vmem:[%s2 + $0x78] sm:$0xff] %v3082
  %3115 = vst [vmem:[%s2 + $0x80] sm:$0xf] %v3083
  %3116 = vst [vmem:[%s2 + $0x88] sm:$0xf] %v3084
  %3117 = vst [vmem:[%s2 + $0x90] sm:$0xf] %v3085
  %3118 = vst [vmem:[%s2 + $0x98] sm:$0xf] %v3086
  %3119 = vst [vmem:[%s2 + $0xa0] sm:$0xf] %v3087
  %3120 = vst [vmem:[%s2 + $0xa8] sm:$0xf] %v3088
  %3121 = vst [vmem:[%s2 + $0xb0] sm:$0xf] %v3089
  %3122 = vst [vmem:[%s2 + $0xb8] sm:$0xf] %v3090
  %3123 = vst [vmem:[%s2 + $0xc0] sm:$0xf] %v3091
  %3124 = vst [vmem:[%s2 + $0xc8] sm:$0xf] %v3092
  %3125 = vst [vmem:[%s2 + $0xd0] sm:$0xf] %v3093
  %3126 = vst [vmem:[%s2 + $0xd8] sm:$0xf] %v3094
  %3127 = vst [vmem:[%s2 + $0xe0] sm:$0xf] %v3095
  %3128 = vst [vmem:[%s2 + $0xe8] sm:$0xf] %v3096
  %3129 = vst [vmem:[%s2 + $0xf0] sm:$0xf] %v3097
  %3130 = vst [vmem:[%s2 + $0xf8] sm:$0xf] %v3098
  // Predicated region
  $region10: #{generator_forward.9} parent=0 // pred_check
    _
  $region11: #{generator_forward.9} parent=0 // pred_check_branch
    %3132 = sbr.rel (0) target = $region13
  $region12: #{generator_forward.9} parent=0 // pred_region
    _
  $region13: #{generator_forward.9} parent=0 // pred_fallthru
    _
  // Predicated region
  $region14: #{generator_forward.9} parent=0 // pred_check
    _
  $region15: #{generator_forward.9} parent=0 // pred_check_branch
    %3134 = sbr.rel (0) target = $region17
  $region16: #{generator_forward.9} parent=0 // pred_region
    _
  $region17: #{generator_forward.9} parent=0 // pred_fallthru
    _

</llo_original>
